<compile_context>
chip_gen: v7x
topology: tpu7x:2x2x1
jax: 0.10.0
libtpu: 0.0.40
codegen_flags: <defaults>
</compile_context>

<pallas_src>
import math
import functools

import jax
import jax.numpy as jnp
from jax.experimental import pallas as pl
from jax.experimental.pallas import tpu as pltpu

LN_EPS = 1e-3  # matches nn.LayerNorm(d_model, eps=0.001)


# ----------------------------------------------------------------------------
# Fused encoder-stack kernel
# ----------------------------------------------------------------------------

def _encoder_stack_kernel(src_ref, mask_ref, wqkv_ref, wo_ref, bo_ref,
                          ln1g_ref, ln1b_ref, w1_ref, b1_ref, w2_ref, b2_ref,
                          ln2g_ref, ln2b_ref, o_ref, *, n_heads, compute_dtype):
    """One (batch_block, layer) grid step.

    grid = (B // bb, n_layers); the output block index depends only on the
    batch block, so the (bb, S, D) residual stream stays VMEM-resident across
    the layer axis and is only written back to HBM when the batch block ends.
    """
    layer = pl.program_id(1)

    # Layer 0: seed the VMEM-resident residual stream with the embeddings.
    @pl.when(layer == 0)
    def _():
        o_ref[...] = src_ref[...]

    x3 = o_ref[...].astype(jnp.float32)               # (bb, S, D)
    bb, S, D = x3.shape
    depth = D // n_heads
    x = x3.reshape(bb * S, D)                         # all rows for projections

    # ---- Multi-head self-attention ------------------------------------------
    # Fused QKV projection over bb*S rows; 1/sqrt(d_model) folded into the Q
    # columns; weight pre-transposed to (D, 3D) so the MXU sees a dense operand.
    qkv = jnp.dot(x.astype(compute_dtype), wqkv_ref[0],
                  preferred_element_type=jnp.float32)            # (bb*S, 3D) f32
    wo = wo_ref[0]                                               # (D, D)

    out_rows = []
    for bi in range(bb):                              # static unroll (bb small)
        qkv_b = qkv[bi * S:(bi + 1) * S, :]           # (S, 3D) major-axis slice
        m_add = mask_ref[bi]                          # (1, S) additive key mask
        acc = jnp.zeros((S, D), jnp.float32)
        for h in range(n_heads):                      # static unroll over heads
            # TODO(synk): depth < 128 lanes, so per-head Q/K/V extraction is a
            # sub-tile lane slice; unavoidable without padding heads to 128.
            q_h = qkv_b[:, h * depth:(h + 1) * depth].astype(compute_dtype)
            k_h = qkv_b[:, D + h * depth:D + (h + 1) * depth].astype(compute_dtype)
            v_h = qkv_b[:, 2 * D + h * depth:2 * D + (h + 1) * depth].astype(compute_dtype)

            # q @ k^T (contract last dims; no materialized transpose).
            s = jax.lax.dot_general(q_h, k_h, (((1,), (1,)), ((), ())),
                                    preferred_element_type=jnp.float32)
            s = s + m_add                             # broadcast over query rows
            # Numerically-stable softmax in f32; approx reciprocal on the EUP.
            s = s - jnp.max(s, axis=-1, keepdims=True)
            e = jnp.exp(s)
            p = e * pl.reciprocal(jnp.sum(e, axis=-1, keepdims=True), approx=True)
            # TODO(synk): training-mode attention dropout not implemented.

            ctx = jnp.dot(p.astype(compute_dtype), v_h,
                          preferred_element_type=jnp.float32)     # (S, depth)
            # Per-head accumulation of the output projection (no lane concat;
            # head-major sublane-aligned row slab of w_o).
            acc = acc + jnp.dot(ctx.astype(compute_dtype),
                                wo[h * depth:(h + 1) * depth, :],
                                preferred_element_type=jnp.float32)
        out_rows.append(acc)
    attn_out = out_rows[0] if bb == 1 else jnp.concatenate(out_rows, axis=0)
    attn_out = attn_out + bo_ref[0]                   # (bb*S, D)

    # Residual + LayerNorm1 (dropout = identity in eval mode).
    y = x + attn_out
    mu = jnp.mean(y, axis=-1, keepdims=True)
    var = jnp.mean(jnp.square(y - mu), axis=-1, keepdims=True)
    y = (y - mu) * jax.lax.rsqrt(var + LN_EPS)
    y = y * ln1g_ref[0] + ln1b_ref[0]

    # ---- Position-wise FFN ---------------------------------------------------
    h1 = jnp.dot(y.astype(compute_dtype), w1_ref[0],
                 preferred_element_type=jnp.float32) + b1_ref[0]
    h1 = jnp.maximum(h1, 0.0)                          # ReLU
    f = jnp.dot(h1.astype(compute_dtype), w2_ref[0],
                preferred_element_type=jnp.float32) + b2_ref[0]

    # Residual + LayerNorm2 (dropout = identity in eval mode).
    r = y + f
    mu = jnp.mean(r, axis=-1, keepdims=True)
    var = jnp.mean(jnp.square(r - mu), axis=-1, keepdims=True)
    r = (r - mu) * jax.lax.rsqrt(var + LN_EPS)
    r = r * ln2g_ref[0] + ln2b_ref[0]

    o_ref[...] = r.reshape(bb, S, D).astype(o_ref.dtype)


# ----------------------------------------------------------------------------
# Wrappers
# ----------------------------------------------------------------------------

def _choose_batch_block(B, S, target_rows=256):
    """bb*S >= ~256 MXU rows, while keeping >=2 parallel grid steps if B >= 2."""
    bb = max(1, min(B, max(1, target_rows // max(S, 1))))
    while bb > 1 and B // bb < 2:      # v7x: 2 TensorCores want >= 2 parallel steps
        bb -= 1
    while B % bb != 0:
        bb -= 1
    return bb


def encoder_pallas(x_emb, mask_add, kp, *, n_heads, batch_block=None):
    """x_emb: (B, S, D) f32 embeddings; mask_add: (B, 1, S) f32 additive mask."""
    B, S, D = x_emb.shape
    L = kp["w_qkv"].shape[0]
    d_ff = kp["w_ff1"].shape[2]
    compute_dtype = kp["w_qkv"].dtype
    bb = batch_block if batch_block is not None else _choose_batch_block(B, S)
    assert B % bb == 0

    kernel = functools.partial(_encoder_stack_kernel, n_heads=n_heads,
                               compute_dtype=compute_dtype)

    # Explicit VMEM budget: double-buffered weight/activation blocks + f32
    # intermediates + headroom; stays well under v7x's 64 MiB physical VMEM.
    comp = jnp.dtype(compute_dtype).itemsize
    w_bytes = (D * 3 * D + D * D + D * d_ff + d_ff * D) * comp + (6 * D + d_ff) * 4
    act_bytes = bb * S * D * 4
    inter_bytes = bb * S * (3 * D + d_ff + 4 * D) * 4 + 4 * S * S * 4
    vmem_limit = min(int(2 * (w_bytes + 2 * act_bytes + bb * S * 4) + inter_bytes)
                     + (16 << 20), 96 << 20)

    return pl.pallas_call(
        kernel,
        grid=(B // bb, L),
        in_specs=[
            pl.BlockSpec((bb, S, D), lambda b, l: (b, 0, 0)),      # embeddings (layer-0 input)
            pl.BlockSpec((bb, 1, S), lambda b, l: (b, 0, 0)),      # additive key-padding mask
            pl.BlockSpec((1, D, 3 * D), lambda b, l: (l, 0, 0)),   # fused QKV weight
            pl.BlockSpec((1, D, D), lambda b, l: (l, 0, 0)),       # out-proj weight
            pl.BlockSpec((1, 1, D), lambda b, l: (l, 0, 0)),       # out-proj bias
            pl.BlockSpec((1, 1, D), lambda b, l: (l, 0, 0)),       # LN1 gamma
            pl.BlockSpec((1, 1, D), lambda b, l: (l, 0, 0)),       # LN1 beta
            pl.BlockSpec((1, D, d_ff), lambda b, l: (l, 0, 0)),    # fc_1 weight
            pl.BlockSpec((1, 1, d_ff), lambda b, l: (l, 0, 0)),    # fc_1 bias
            pl.BlockSpec((1, d_ff, D), lambda b, l: (l, 0, 0)),    # fc_2 weight
            pl.BlockSpec((1, 1, D), lambda b, l: (l, 0, 0)),       # fc_2 bias
            pl.BlockSpec((1, 1, D), lambda b, l: (l, 0, 0)),       # LN2 gamma
            pl.BlockSpec((1, 1, D), lambda b, l: (l, 0, 0)),       # LN2 beta
        ],
        out_specs=pl.BlockSpec((bb, S, D), lambda b, l: (b, 0, 0)),
        out_shape=jax.ShapeDtypeStruct((B, S, D), jnp.float32),
        compiler_params=pltpu.CompilerParams(
            dimension_semantics=("parallel", "arbitrary"),
            vmem_limit_bytes=vmem_limit),
    )(x_emb, mask_add, kp["w_qkv"], kp["w_o"], kp["b_o"],
      kp["ln1_g"], kp["ln1_b"], kp["w_ff1"], kp["b_ff1"],
      kp["w_ff2"], kp["b_ff2"], kp["ln2_g"], kp["ln2_b"])


def encoder_forward(src_tokens, key_padding_mask, kernel_params, *, n_heads,
                    batch_block=None):
    """Eval-mode forward of the PyTorch Encoder (all dropouts = identity)."""
    B, S = src_tokens.shape
    emb = kernel_params["embedding"]
    d_model = emb.shape[1]

    # TODO(synk): nn.Embedding row-gather left to XLA (data-dependent gather);
    # a Pallas version would need scalar-prefetch + manual DMA gather.
    x = jnp.take(emb, src_tokens, axis=0) * math.sqrt(d_model)
    x = (x + kernel_params["pos_encoding"][None, :S, :]).astype(jnp.float32)
    # Encoder-level dropout: identity in eval mode.

    if key_padding_mask is None:
        mask_add = jnp.zeros((B, 1, S), jnp.float32)
    else:
        # Additive key-padding row (0 keep / -1e9 masked), broadcast in-kernel.
        # TODO(synk): general (B, S, S) masks would need the full-mask DMA path.
        mask_add = jnp.where(key_padding_mask.reshape(B, 1, S) == 0,
                             jnp.float32(-1e9), jnp.float32(0.0))

    return encoder_pallas(x, mask_add, kernel_params, n_heads=n_heads,
                          batch_block=batch_block)


# ----------------------------------------------------------------------------
# Parameter construction (PyTorch layout -> kernel layout)
# ----------------------------------------------------------------------------

def positional_encoding(max_len, d_model):
    position = jnp.arange(max_len, dtype=jnp.float32)[:, None]
    div_term = jnp.exp(jnp.arange(0, d_model, 2, dtype=jnp.float32)
                       * (-math.log(10000.0) / d_model))
    pe = jnp.zeros((max_len, d_model), jnp.float32)
    pe = pe.at[:, 0::2].set(jnp.sin(position * div_term))
    pe = pe.at[:, 1::2].set(jnp.cos(position * div_term))
    return pe


def _init_linear(key, d_out, d_in, with_bias):
    kw, kb = jax.random.split(key)
    bound = 1.0 / math.sqrt(d_in)
    w = jax.random.uniform(kw, (d_out, d_in), jnp.float32, -bound, bound)  # (out, in)
    if with_bias:
        b = jax.random.uniform(kb, (d_out,), jnp.float32, -bound, bound)
        return w, b
    return w, None


def build_torch_params(key, vocab, d_model, d_ff, n_layers, max_len):
    keys = jax.random.split(key, 1 + n_layers)
    params = {
        "embedding": jax.random.normal(keys[0], (vocab, d_model), jnp.float32),
        "pos_encoding": positional_encoding(max_len, d_model),
        "layers": [],
    }
    for li in range(n_layers):
        ks = jax.random.split(keys[1 + li], 10)
        wq, _ = _init_linear(ks[0], d_model, d_model, False)
        wk, _ = _init_linear(ks[1], d_model, d_model, False)
        wv, _ = _init_linear(ks[2], d_model, d_model, False)
        wo, bo = _init_linear(ks[3], d_model, d_model, True)
        w1, b1 = _init_linear(ks[4], d_ff, d_model, True)
        w2, b2 = _init_linear(ks[5], d_model, d_ff, True)
        g1 = 1.0 + 0.1 * jax.random.normal(ks[6], (d_model,), jnp.float32)
        be1 = 0.05 * jax.random.normal(ks[7], (d_model,), jnp.float32)
        g2 = 1.0 + 0.1 * jax.random.normal(ks[8], (d_model,), jnp.float32)
        be2 = 0.05 * jax.random.normal(ks[9], (d_model,), jnp.float32)
        params["layers"].append(dict(wq=wq, wk=wk, wv=wv, wo=wo, bo=bo,
                                     w1=w1, b1=b1, w2=w2, b2=b2,
                                     g1=g1, be1=be1, g2=g2, be2=be2))
    return params


def to_kernel_params(torch_params, d_model, compute_dtype=jnp.bfloat16):
    """Pre-transpose PyTorch (out, in) weights to (in, out) ONCE, fold
    1/sqrt(d_model) into the Q projection, fuse Q/K/V, stack weights per layer
    and store the MXU operands in the compute dtype (no per-call casts)."""
    scale = math.sqrt(d_model)
    layers = torch_params["layers"]

    def stack(fn):
        return jnp.stack([fn(lp) for lp in layers])

    return {
        "embedding": torch_params["embedding"],
        "pos_encoding": torch_params["pos_encoding"],
        "w_qkv": stack(lambda lp: jnp.concatenate(
            [lp["wq"].T / scale, lp["wk"].T, lp["wv"].T], axis=1)
            ).astype(compute_dtype),                                # (L, D, 3D)
        "w_o": stack(lambda lp: lp["wo"].T).astype(compute_dtype),  # (L, D, D)
        "b_o": stack(lambda lp: lp["bo"].reshape(1, -1)),           # (L, 1, D) f32
        "ln1_g": stack(lambda lp: lp["g1"].reshape(1, -1)),
        "ln1_b": stack(lambda lp: lp["be1"].reshape(1, -1)),
        "w_ff1": stack(lambda lp: lp["w1"].T).astype(compute_dtype),  # (L, D, d_ff)
        "b_ff1": stack(lambda lp: lp["b1"].reshape(1, -1)),
        "w_ff2": stack(lambda lp: lp["w2"].T).astype(compute_dtype),  # (L, d_ff, D)
        "b_ff2": stack(lambda lp: lp["b2"].reshape(1, -1)),
        "ln2_g": stack(lambda lp: lp["g2"].reshape(1, -1)),
        "ln2_b": stack(lambda lp: lp["be2"].reshape(1, -1)),
    }


# ----------------------------------------------------------------------------
# Pure-JAX reference (eval-mode PyTorch semantics, f32)
# ----------------------------------------------------------------------------

def _layer_norm_ref(x, g, b, eps=LN_EPS):
    mu = jnp.mean(x, axis=-1, keepdims=True)
    var = jnp.mean(jnp.square(x - mu), axis=-1, keepdims=True)
    return (x - mu) / jnp.sqrt(var + eps) * g + b


def reference_encoder(src_tokens, mask, torch_params, n_heads):
    emb = torch_params["embedding"]
    B, S = src_tokens.shape
    d_model = emb.shape[1]
    depth = d_model // n_heads
    scale = math.sqrt(d_model)

    x = emb[src_tokens] * scale + torch_params["pos_encoding"][None, :S, :]
    for lp in torch_params["layers"]:
        def heads(y):
            return y.reshape(B, S, n_heads, depth).transpose(0, 2, 1, 3)
        q, k, v = heads(x @ lp["wq"].T), heads(x @ lp["wk"].T), heads(x @ lp["wv"].T)
        scores = jnp.einsum("bhqd,bhkd->bhqk", q, k) / scale
        if mask is not None:
            scores = jnp.where(mask[:, None, ...] == 0, -1e9, scores)
        attn = jax.nn.softmax(scores, axis=-1)
        ctx = jnp.einsum("bhqk,bhkd->bhqd", attn, v)
        ctx = ctx.transpose(0, 2, 1, 3).reshape(B, S, d_model)
        x = _layer_norm_ref(x + ctx @ lp["wo"].T + lp["bo"], lp["g1"], lp["be1"])
        h = jnp.maximum(x @ lp["w1"].T + lp["b1"], 0.0)
        x = _layer_norm_ref(x + h @ lp["w2"].T + lp["b2"], lp["g2"], lp["be2"])
    return x


# ----------------------------------------------------------------------------
# Main
# ----------------------------------------------------------------------------

if __name__ == "__main__":
    B, S, d_model, n_heads, d_ff, n_layers, vocab = 2, 32, 128, 4, 256, 2, 100

    key = jax.random.PRNGKey(0)
    k_tok, k_par = jax.random.split(key)

    src_tokens = jax.random.randint(k_tok, (B, S), 0, vocab, dtype=jnp.int32)

    # Key-padding mask (1 = keep, 0 = masked); batch 0 keeps all keys, batch 1 keeps 20.
    lens = jnp.array([S, 20], dtype=jnp.int32)
    key_padding = (jnp.arange(S, dtype=jnp.int32)[None, :] < lens[:, None]).astype(jnp.int32)

    torch_params = build_torch_params(k_par, vocab, d_model, d_ff, n_layers, max_len=128)

    # Reference uses the full PyTorch-style (B, S, S) mask (broadcast key padding).
    mask_full = jnp.broadcast_to(key_padding[:, None, :], (B, S, S)).astype(jnp.int32)
    x_ref = reference_encoder(src_tokens, mask_full, torch_params, n_heads)

    # f32 MXU operands: parity check against the pure-JAX reference.
    kp_f32 = to_kernel_params(torch_params, d_model, compute_dtype=jnp.float32)
    out_f32 = encoder_forward(src_tokens, key_padding, kp_f32, n_heads=n_heads)
    jax.block_until_ready(out_f32)
    err_f32 = float(jnp.max(jnp.abs(out_f32 - x_ref)))
    assert err_f32 < 5e-2, f"f32 output mismatch, max abs err = {err_f32}"

    # bf16 MXU operands / f32 accumulation (perf default): relaxed tolerance.
    kp_bf16 = to_kernel_params(torch_params, d_model, compute_dtype=jnp.bfloat16)
    out_bf16 = encoder_forward(src_tokens, key_padding, kp_bf16, n_heads=n_heads)
    jax.block_until_ready(out_bf16)
    err_bf16 = float(jnp.max(jnp.abs(out_bf16 - x_ref)))
    assert err_bf16 < 0.3, f"bf16 output mismatch, max abs err = {err_bf16}"

    print("KERNEL_OK")
</pallas_src>

<mosaic_0001>
module attributes {stable_mosaic.version = 11 : i64} {
  func.func @_encoder_stack_kernel(%arg0: i32, %arg1: i32, %arg2: memref<1x32x128xf32, #tpu.memory_space<vmem>>, %arg3: memref<1x1x32xf32, #tpu.memory_space<vmem>>, %arg4: memref<1x128x384xf32, #tpu.memory_space<vmem>>, %arg5: memref<1x128x128xf32, #tpu.memory_space<vmem>>, %arg6: memref<1x1x128xf32, #tpu.memory_space<vmem>>, %arg7: memref<1x1x128xf32, #tpu.memory_space<vmem>>, %arg8: memref<1x1x128xf32, #tpu.memory_space<vmem>>, %arg9: memref<1x128x256xf32, #tpu.memory_space<vmem>>, %arg10: memref<1x1x256xf32, #tpu.memory_space<vmem>>, %arg11: memref<1x256x128xf32, #tpu.memory_space<vmem>>, %arg12: memref<1x1x128xf32, #tpu.memory_space<vmem>>, %arg13: memref<1x1x128xf32, #tpu.memory_space<vmem>>, %arg14: memref<1x1x128xf32, #tpu.memory_space<vmem>>, %arg15: memref<1x32x128xf32, #tpu.memory_space<vmem>>) attributes {dimension_semantics = [#tpu.dimension_semantics<parallel>, #tpu.dimension_semantics<arbitrary>], iteration_bounds = array<i64: 2, 2>, scalar_prefetch = 0 : i64, scratch_operands = 0 : i64, tpu.core_type = #tpu.core_type<tc>, window_params = [{transform_indices = @transform_0, window_bounds = array<i64: 1, 32, 128>}, {transform_indices = @transform_1, window_bounds = array<i64: 1, 1, 32>}, {transform_indices = @transform_2, window_bounds = array<i64: 1, 128, 384>}, {transform_indices = @transform_3, window_bounds = array<i64: 1, 128, 128>}, {transform_indices = @transform_4, window_bounds = array<i64: 1, 1, 128>}, {transform_indices = @transform_5, window_bounds = array<i64: 1, 1, 128>}, {transform_indices = @transform_6, window_bounds = array<i64: 1, 1, 128>}, {transform_indices = @transform_7, window_bounds = array<i64: 1, 128, 256>}, {transform_indices = @transform_8, window_bounds = array<i64: 1, 1, 256>}, {transform_indices = @transform_9, window_bounds = array<i64: 1, 256, 128>}, {transform_indices = @transform_10, window_bounds = array<i64: 1, 1, 128>}, {transform_indices = @transform_11, window_bounds = array<i64: 1, 1, 128>}, {transform_indices = @transform_12, window_bounds = array<i64: 1, 1, 128>}, {transform_indices = @transform_13, window_bounds = array<i64: 1, 32, 128>}]} {
    %c0_i32 = arith.constant 0 : i32
    %0 = arith.cmpi eq, %arg1, %c0_i32 : i32
    %1 = arith.extui %0 : i1 to i32
    %c0_i32_0 = arith.constant 0 : i32
    %2 = arith.cmpi ne, %1, %c0_i32_0 : i32
    scf.if %2 {
      %c0_76 = arith.constant 0 : index
      %c0_77 = arith.constant 0 : index
      %c0_78 = arith.constant 0 : index
      %169 = vector.load %arg2[%c0_76, %c0_77, %c0_78] : memref<1x32x128xf32, #tpu.memory_space<vmem>>, vector<1x32x128xf32>
      %c0_79 = arith.constant 0 : index
      %c0_80 = arith.constant 0 : index
      %c0_81 = arith.constant 0 : index
      %170 = vector.load %arg15[%c0_79, %c0_80, %c0_81] : memref<1x32x128xf32, #tpu.memory_space<vmem>>, vector<1x32x128xf32>
      tpu.vector_store %arg15[%c0_79, %c0_80, %c0_81], %169 {strides = array<i32>} : memref<1x32x128xf32, #tpu.memory_space<vmem>>, vector<1x32x128xf32>,
    } else {
    }
    %c0 = arith.constant 0 : index
    %c0_1 = arith.constant 0 : index
    %c0_2 = arith.constant 0 : index
    %3 = vector.load %arg15[%c0, %c0_1, %c0_2] : memref<1x32x128xf32, #tpu.memory_space<vmem>>, vector<1x32x128xf32>
    %4 = vector.shape_cast %3 : vector<1x32x128xf32> to vector<32x128xf32>
    %c0_3 = arith.constant 0 : index
    %c0_4 = arith.constant 0 : index
    %c0_5 = arith.constant 0 : index
    %5 = vector.load %arg4[%c0_3, %c0_4, %c0_5] : memref<1x128x384xf32, #tpu.memory_space<vmem>>, vector<1x128x384xf32>
    %6 = vector.shape_cast %5 : vector<1x128x384xf32> to vector<128x384xf32>
    %cst = arith.constant dense<0.000000e+00> : vector<32x384xf32>
    %7 = tpu.matmul %4, %6, %cst {dimension_numbers = #tpu.dot_dimension_numbers<[1], [0], [0], [1], [0, 0, 1, 1], [], []>} : vector<32x128xf32>, vector<128x384xf32>, vector<32x384xf32> -> vector<32x384xf32>
    %c0_6 = arith.constant 0 : index
    %c0_7 = arith.constant 0 : index
    %c0_8 = arith.constant 0 : index
    %8 = vector.load %arg5[%c0_6, %c0_7, %c0_8] : memref<1x128x128xf32, #tpu.memory_space<vmem>>, vector<1x128x128xf32>
    %9 = vector.shape_cast %8 : vector<1x128x128xf32> to vector<128x128xf32>
    %c0_9 = arith.constant 0 : index
    %c0_10 = arith.constant 0 : index
    %c0_11 = arith.constant 0 : index
    %10 = vector.load %arg3[%c0_9, %c0_10, %c0_11] : memref<1x1x32xf32, #tpu.memory_space<vmem>>, vector<1x1x32xf32>
    %11 = vector.shape_cast %10 : vector<1x1x32xf32> to vector<1x32xf32>
    %cst_12 = arith.constant 0.000000e+00 : f32
    %12 = vector.broadcast %cst_12 : f32 to vector<32x128xf32>
    %13 = vector.extract_strided_slice %7 {offsets = [0, 0], sizes = [32, 32], strides = [1, 1]} : vector<32x384xf32> to vector<32x32xf32>
    %14 = vector.extract_strided_slice %7 {offsets = [0, 128], sizes = [32, 32], strides = [1, 1]} : vector<32x384xf32> to vector<32x32xf32>
    %15 = vector.extract_strided_slice %7 {offsets = [0, 256], sizes = [32, 32], strides = [1, 1]} : vector<32x384xf32> to vector<32x32xf32>
    %cst_13 = arith.constant dense<0.000000e+00> : vector<32x32xf32>
    %16 = tpu.matmul %13, %14, %cst_13 {dimension_numbers = #tpu.dot_dimension_numbers<[1], [1], [0], [0], [0, 0, 1, 0], [], []>} : vector<32x32xf32>, vector<32x32xf32>, vector<32x32xf32> -> vector<32x32xf32>
    %17 = vector.broadcast %11 : vector<1x32xf32> to vector<32x32xf32>
    %18 = arith.addf %16, %17 : vector<32x32xf32>
    %cst_14 = arith.constant dense<0xFF800000> : vector<32xf32>
    %19 = vector.multi_reduction <maximumf>, %18, %cst_14 [1] : vector<32x32xf32> to vector<32xf32>
    %20 = vector.shape_cast %19 : vector<32xf32> to vector<32x1xf32>
    %21 = vector.broadcast %20 : vector<32x1xf32> to vector<32x32xf32>
    %22 = arith.subf %18, %21 : vector<32x32xf32>
    %23 = math.exp %22 : vector<32x32xf32>
    %cst_15 = arith.constant dense<0.000000e+00> : vector<32xf32>
    %24 = vector.multi_reduction <add>, %23, %cst_15 [1] : vector<32x32xf32> to vector<32xf32>
    %25 = vector.shape_cast %24 : vector<32xf32> to vector<32x1xf32>
    %26 = tpu.reciprocal %25 {approx = true} : vector<32x1xf32> -> vector<32x1xf32>
    %27 = vector.broadcast %26 : vector<32x1xf32> to vector<32x32xf32>
    %28 = arith.mulf %23, %27 : vector<32x32xf32>
    %cst_16 = arith.constant dense<0.000000e+00> : vector<32x32xf32>
    %29 = tpu.matmul %28, %15, %cst_16 {dimension_numbers = #tpu.dot_dimension_numbers<[1], [0], [0], [1], [0, 0, 1, 1], [], []>} : vector<32x32xf32>, vector<32x32xf32>, vector<32x32xf32> -> vector<32x32xf32>
    %30 = vector.extract_strided_slice %9 {offsets = [0, 0], sizes = [32, 128], strides = [1, 1]} : vector<128x128xf32> to vector<32x128xf32>
    %cst_17 = arith.constant dense<0.000000e+00> : vector<32x128xf32>
    %31 = tpu.matmul %29, %30, %cst_17 {dimension_numbers = #tpu.dot_dimension_numbers<[1], [0], [0], [1], [0, 0, 1, 1], [], []>} : vector<32x32xf32>, vector<32x128xf32>, vector<32x128xf32> -> vector<32x128xf32>
    %32 = arith.addf %12, %31 : vector<32x128xf32>
    %33 = vector.extract_strided_slice %7 {offsets = [0, 32], sizes = [32, 32], strides = [1, 1]} : vector<32x384xf32> to vector<32x32xf32>
    %34 = vector.extract_strided_slice %7 {offsets = [0, 160], sizes = [32, 32], strides = [1, 1]} : vector<32x384xf32> to vector<32x32xf32>
    %35 = vector.extract_strided_slice %7 {offsets = [0, 288], sizes = [32, 32], strides = [1, 1]} : vector<32x384xf32> to vector<32x32xf32>
    %cst_18 = arith.constant dense<0.000000e+00> : vector<32x32xf32>
    %36 = tpu.matmul %33, %34, %cst_18 {dimension_numbers = #tpu.dot_dimension_numbers<[1], [1], [0], [0], [0, 0, 1, 0], [], []>} : vector<32x32xf32>, vector<32x32xf32>, vector<32x32xf32> -> vector<32x32xf32>
    %37 = vector.broadcast %11 : vector<1x32xf32> to vector<32x32xf32>
    %38 = arith.addf %36, %37 : vector<32x32xf32>
    %cst_19 = arith.constant dense<0xFF800000> : vector<32xf32>
    %39 = vector.multi_reduction <maximumf>, %38, %cst_19 [1] : vector<32x32xf32> to vector<32xf32>
    %40 = vector.shape_cast %39 : vector<32xf32> to vector<32x1xf32>
    %41 = vector.broadcast %40 : vector<32x1xf32> to vector<32x32xf32>
    %42 = arith.subf %38, %41 : vector<32x32xf32>
    %43 = math.exp %42 : vector<32x32xf32>
    %cst_20 = arith.constant dense<0.000000e+00> : vector<32xf32>
    %44 = vector.multi_reduction <add>, %43, %cst_20 [1] : vector<32x32xf32> to vector<32xf32>
    %45 = vector.shape_cast %44 : vector<32xf32> to vector<32x1xf32>
    %46 = tpu.reciprocal %45 {approx = true} : vector<32x1xf32> -> vector<32x1xf32>
    %47 = vector.broadcast %46 : vector<32x1xf32> to vector<32x32xf32>
    %48 = arith.mulf %43, %47 : vector<32x32xf32>
    %cst_21 = arith.constant dense<0.000000e+00> : vector<32x32xf32>
    %49 = tpu.matmul %48, %35, %cst_21 {dimension_numbers = #tpu.dot_dimension_numbers<[1], [0], [0], [1], [0, 0, 1, 1], [], []>} : vector<32x32xf32>, vector<32x32xf32>, vector<32x32xf32> -> vector<32x32xf32>
    %50 = vector.extract_strided_slice %9 {offsets = [32, 0], sizes = [32, 128], strides = [1, 1]} : vector<128x128xf32> to vector<32x128xf32>
    %cst_22 = arith.constant dense<0.000000e+00> : vector<32x128xf32>
    %51 = tpu.matmul %49, %50, %cst_22 {dimension_numbers = #tpu.dot_dimension_numbers<[1], [0], [0], [1], [0, 0, 1, 1], [], []>} : vector<32x32xf32>, vector<32x128xf32>, vector<32x128xf32> -> vector<32x128xf32>
    %52 = arith.addf %32, %51 : vector<32x128xf32>
    %53 = vector.extract_strided_slice %7 {offsets = [0, 64], sizes = [32, 32], strides = [1, 1]} : vector<32x384xf32> to vector<32x32xf32>
    %54 = vector.extract_strided_slice %7 {offsets = [0, 192], sizes = [32, 32], strides = [1, 1]} : vector<32x384xf32> to vector<32x32xf32>
    %55 = vector.extract_strided_slice %7 {offsets = [0, 320], sizes = [32, 32], strides = [1, 1]} : vector<32x384xf32> to vector<32x32xf32>
    %cst_23 = arith.constant dense<0.000000e+00> : vector<32x32xf32>
    %56 = tpu.matmul %53, %54, %cst_23 {dimension_numbers = #tpu.dot_dimension_numbers<[1], [1], [0], [0], [0, 0, 1, 0], [], []>} : vector<32x32xf32>, vector<32x32xf32>, vector<32x32xf32> -> vector<32x32xf32>
    %57 = vector.broadcast %11 : vector<1x32xf32> to vector<32x32xf32>
    %58 = arith.addf %56, %57 : vector<32x32xf32>
    %cst_24 = arith.constant dense<0xFF800000> : vector<32xf32>
    %59 = vector.multi_reduction <maximumf>, %58, %cst_24 [1] : vector<32x32xf32> to vector<32xf32>
    %60 = vector.shape_cast %59 : vector<32xf32> to vector<32x1xf32>
    %61 = vector.broadcast %60 : vector<32x1xf32> to vector<32x32xf32>
    %62 = arith.subf %58, %61 : vector<32x32xf32>
    %63 = math.exp %62 : vector<32x32xf32>
    %cst_25 = arith.constant dense<0.000000e+00> : vector<32xf32>
    %64 = vector.multi_reduction <add>, %63, %cst_25 [1] : vector<32x32xf32> to vector<32xf32>
    %65 = vector.shape_cast %64 : vector<32xf32> to vector<32x1xf32>
    %66 = tpu.reciprocal %65 {approx = true} : vector<32x1xf32> -> vector<32x1xf32>
    %67 = vector.broadcast %66 : vector<32x1xf32> to vector<32x32xf32>
    %68 = arith.mulf %63, %67 : vector<32x32xf32>
    %cst_26 = arith.constant dense<0.000000e+00> : vector<32x32xf32>
    %69 = tpu.matmul %68, %55, %cst_26 {dimension_numbers = #tpu.dot_dimension_numbers<[1], [0], [0], [1], [0, 0, 1, 1], [], []>} : vector<32x32xf32>, vector<32x32xf32>, vector<32x32xf32> -> vector<32x32xf32>
    %70 = vector.extract_strided_slice %9 {offsets = [64, 0], sizes = [32, 128], strides = [1, 1]} : vector<128x128xf32> to vector<32x128xf32>
    %cst_27 = arith.constant dense<0.000000e+00> : vector<32x128xf32>
    %71 = tpu.matmul %69, %70, %cst_27 {dimension_numbers = #tpu.dot_dimension_numbers<[1], [0], [0], [1], [0, 0, 1, 1], [], []>} : vector<32x32xf32>, vector<32x128xf32>, vector<32x128xf32> -> vector<32x128xf32>
    %72 = arith.addf %52, %71 : vector<32x128xf32>
    %73 = vector.extract_strided_slice %7 {offsets = [0, 96], sizes = [32, 32], strides = [1, 1]} : vector<32x384xf32> to vector<32x32xf32>
    %74 = vector.extract_strided_slice %7 {offsets = [0, 224], sizes = [32, 32], strides = [1, 1]} : vector<32x384xf32> to vector<32x32xf32>
    %75 = vector.extract_strided_slice %7 {offsets = [0, 352], sizes = [32, 32], strides = [1, 1]} : vector<32x384xf32> to vector<32x32xf32>
    %cst_28 = arith.constant dense<0.000000e+00> : vector<32x32xf32>
    %76 = tpu.matmul %73, %74, %cst_28 {dimension_numbers = #tpu.dot_dimension_numbers<[1], [1], [0], [0], [0, 0, 1, 0], [], []>} : vector<32x32xf32>, vector<32x32xf32>, vector<32x32xf32> -> vector<32x32xf32>
    %77 = vector.broadcast %11 : vector<1x32xf32> to vector<32x32xf32>
    %78 = arith.addf %76, %77 : vector<32x32xf32>
    %cst_29 = arith.constant dense<0xFF800000> : vector<32xf32>
    %79 = vector.multi_reduction <maximumf>, %78, %cst_29 [1] : vector<32x32xf32> to vector<32xf32>
    %80 = vector.shape_cast %79 : vector<32xf32> to vector<32x1xf32>
    %81 = vector.broadcast %80 : vector<32x1xf32> to vector<32x32xf32>
    %82 = arith.subf %78, %81 : vector<32x32xf32>
    %83 = math.exp %82 : vector<32x32xf32>
    %cst_30 = arith.constant dense<0.000000e+00> : vector<32xf32>
    %84 = vector.multi_reduction <add>, %83, %cst_30 [1] : vector<32x32xf32> to vector<32xf32>
    %85 = vector.shape_cast %84 : vector<32xf32> to vector<32x1xf32>
    %86 = tpu.reciprocal %85 {approx = true} : vector<32x1xf32> -> vector<32x1xf32>
    %87 = vector.broadcast %86 : vector<32x1xf32> to vector<32x32xf32>
    %88 = arith.mulf %83, %87 : vector<32x32xf32>
    %cst_31 = arith.constant dense<0.000000e+00> : vector<32x32xf32>
    %89 = tpu.matmul %88, %75, %cst_31 {dimension_numbers = #tpu.dot_dimension_numbers<[1], [0], [0], [1], [0, 0, 1, 1], [], []>} : vector<32x32xf32>, vector<32x32xf32>, vector<32x32xf32> -> vector<32x32xf32>
    %90 = vector.extract_strided_slice %9 {offsets = [96, 0], sizes = [32, 128], strides = [1, 1]} : vector<128x128xf32> to vector<32x128xf32>
    %cst_32 = arith.constant dense<0.000000e+00> : vector<32x128xf32>
    %91 = tpu.matmul %89, %90, %cst_32 {dimension_numbers = #tpu.dot_dimension_numbers<[1], [0], [0], [1], [0, 0, 1, 1], [], []>} : vector<32x32xf32>, vector<32x128xf32>, vector<32x128xf32> -> vector<32x128xf32>
    %92 = arith.addf %72, %91 : vector<32x128xf32>
    %c0_33 = arith.constant 0 : index
    %c0_34 = arith.constant 0 : index
    %c0_35 = arith.constant 0 : index
    %93 = vector.load %arg6[%c0_33, %c0_34, %c0_35] : memref<1x1x128xf32, #tpu.memory_space<vmem>>, vector<1x1x128xf32>
    %94 = vector.shape_cast %93 : vector<1x1x128xf32> to vector<1x128xf32>
    %95 = vector.broadcast %94 : vector<1x128xf32> to vector<32x128xf32>
    %96 = arith.addf %92, %95 : vector<32x128xf32>
    %97 = arith.addf %4, %96 : vector<32x128xf32>
    %cst_36 = arith.constant dense<0.000000e+00> : vector<32xf32>
    %98 = vector.multi_reduction <add>, %97, %cst_36 [1] : vector<32x128xf32> to vector<32xf32>
    %99 = vector.shape_cast %98 : vector<32xf32> to vector<32x1xf32>
    %cst_37 = arith.constant 1.280000e+02 : f32
    %100 = vector.broadcast %cst_37 : f32 to vector<32x1xf32>
    %101 = arith.divf %99, %100 : vector<32x1xf32>
    %102 = vector.broadcast %101 : vector<32x1xf32> to vector<32x128xf32>
    %103 = arith.subf %97, %102 : vector<32x128xf32>
    %104 = arith.mulf %103, %103 : vector<32x128xf32>
    %cst_38 = arith.constant dense<0.000000e+00> : vector<32xf32>
    %105 = vector.multi_reduction <add>, %104, %cst_38 [1] : vector<32x128xf32> to vector<32xf32>
    %106 = vector.shape_cast %105 : vector<32xf32> to vector<32x1xf32>
    %cst_39 = arith.constant 1.280000e+02 : f32
    %107 = vector.broadcast %cst_39 : f32 to vector<32x1xf32>
    %108 = arith.divf %106, %107 : vector<32x1xf32>
    %109 = vector.broadcast %101 : vector<32x1xf32> to vector<32x128xf32>
    %110 = arith.subf %97, %109 : vector<32x128xf32>
    %cst_40 = arith.constant 1.000000e-03 : f32
    %111 = vector.broadcast %cst_40 : f32 to vector<32x1xf32>
    %112 = arith.addf %108, %111 : vector<32x1xf32>
    %113 = math.rsqrt %112 : vector<32x1xf32>
    %114 = vector.broadcast %113 : vector<32x1xf32> to vector<32x128xf32>
    %115 = arith.mulf %110, %114 : vector<32x128xf32>
    %c0_41 = arith.constant 0 : index
    %c0_42 = arith.constant 0 : index
    %c0_43 = arith.constant 0 : index
    %116 = vector.load %arg7[%c0_41, %c0_42, %c0_43] : memref<1x1x128xf32, #tpu.memory_space<vmem>>, vector<1x1x128xf32>
    %117 = vector.shape_cast %116 : vector<1x1x128xf32> to vector<1x128xf32>
    %118 = vector.broadcast %117 : vector<1x128xf32> to vector<32x128xf32>
    %119 = arith.mulf %115, %118 : vector<32x128xf32>
    %c0_44 = arith.constant 0 : index
    %c0_45 = arith.constant 0 : index
    %c0_46 = arith.constant 0 : index
    %120 = vector.load %arg8[%c0_44, %c0_45, %c0_46] : memref<1x1x128xf32, #tpu.memory_space<vmem>>, vector<1x1x128xf32>
    %121 = vector.shape_cast %120 : vector<1x1x128xf32> to vector<1x128xf32>
    %122 = vector.broadcast %121 : vector<1x128xf32> to vector<32x128xf32>
    %123 = arith.addf %119, %122 : vector<32x128xf32>
    %c0_47 = arith.constant 0 : index
    %c0_48 = arith.constant 0 : index
    %c0_49 = arith.constant 0 : index
    %124 = vector.load %arg9[%c0_47, %c0_48, %c0_49] : memref<1x128x256xf32, #tpu.memory_space<vmem>>, vector<1x128x256xf32>
    %125 = vector.shape_cast %124 : vector<1x128x256xf32> to vector<128x256xf32>
    %cst_50 = arith.constant dense<0.000000e+00> : vector<32x256xf32>
    %126 = tpu.matmul %123, %125, %cst_50 {dimension_numbers = #tpu.dot_dimension_numbers<[1], [0], [0], [1], [0, 0, 1, 1], [], []>} : vector<32x128xf32>, vector<128x256xf32>, vector<32x256xf32> -> vector<32x256xf32>
    %c0_51 = arith.constant 0 : index
    %c0_52 = arith.constant 0 : index
    %c0_53 = arith.constant 0 : index
    %127 = vector.load %arg10[%c0_51, %c0_52, %c0_53] : memref<1x1x256xf32, #tpu.memory_space<vmem>>, vector<1x1x256xf32>
    %128 = vector.shape_cast %127 : vector<1x1x256xf32> to vector<1x256xf32>
    %129 = vector.broadcast %128 : vector<1x256xf32> to vector<32x256xf32>
    %130 = arith.addf %126, %129 : vector<32x256xf32>
    %cst_54 = arith.constant 0.000000e+00 : f32
    %131 = vector.broadcast %cst_54 : f32 to vector<32x256xf32>
    %132 = arith.maximumf %130, %131 : vector<32x256xf32>
    %c0_55 = arith.constant 0 : index
    %c0_56 = arith.constant 0 : index
    %c0_57 = arith.constant 0 : index
    %133 = vector.load %arg11[%c0_55, %c0_56, %c0_57] : memref<1x256x128xf32, #tpu.memory_space<vmem>>, vector<1x256x128xf32>
    %134 = vector.shape_cast %133 : vector<1x256x128xf32> to vector<256x128xf32>
    %cst_58 = arith.constant dense<0.000000e+00> : vector<32x128xf32>
    %135 = tpu.matmul %132, %134, %cst_58 {dimension_numbers = #tpu.dot_dimension_numbers<[1], [0], [0], [1], [0, 0, 1, 1], [], []>} : vector<32x256xf32>, vector<256x128xf32>, vector<32x128xf32> -> vector<32x128xf32>
    %c0_59 = arith.constant 0 : index
    %c0_60 = arith.constant 0 : index
    %c0_61 = arith.constant 0 : index
    %136 = vector.load %arg12[%c0_59, %c0_60, %c0_61] : memref<1x1x128xf32, #tpu.memory_space<vmem>>, vector<1x1x128xf32>
    %137 = vector.shape_cast %136 : vector<1x1x128xf32> to vector<1x128xf32>
    %138 = vector.broadcast %137 : vector<1x128xf32> to vector<32x128xf32>
    %139 = arith.addf %135, %138 : vector<32x128xf32>
    %140 = arith.addf %123, %139 : vector<32x128xf32>
    %cst_62 = arith.constant dense<0.000000e+00> : vector<32xf32>
    %141 = vector.multi_reduction <add>, %140, %cst_62 [1] : vector<32x128xf32> to vector<32xf32>
    %142 = vector.shape_cast %141 : vector<32xf32> to vector<32x1xf32>
    %cst_63 = arith.constant 1.280000e+02 : f32
    %143 = vector.broadcast %cst_63 : f32 to vector<32x1xf32>
    %144 = arith.divf %142, %143 : vector<32x1xf32>
    %145 = vector.broadcast %144 : vector<32x1xf32> to vector<32x128xf32>
    %146 = arith.subf %140, %145 : vector<32x128xf32>
    %147 = arith.mulf %146, %146 : vector<32x128xf32>
    %cst_64 = arith.constant dense<0.000000e+00> : vector<32xf32>
    %148 = vector.multi_reduction <add>, %147, %cst_64 [1] : vector<32x128xf32> to vector<32xf32>
    %149 = vector.shape_cast %148 : vector<32xf32> to vector<32x1xf32>
    %cst_65 = arith.constant 1.280000e+02 : f32
    %150 = vector.broadcast %cst_65 : f32 to vector<32x1xf32>
    %151 = arith.divf %149, %150 : vector<32x1xf32>
    %152 = vector.broadcast %144 : vector<32x1xf32> to vector<32x128xf32>
    %153 = arith.subf %140, %152 : vector<32x128xf32>
    %cst_66 = arith.constant 1.000000e-03 : f32
    %154 = vector.broadcast %cst_66 : f32 to vector<32x1xf32>
    %155 = arith.addf %151, %154 : vector<32x1xf32>
    %156 = math.rsqrt %155 : vector<32x1xf32>
    %157 = vector.broadcast %156 : vector<32x1xf32> to vector<32x128xf32>
    %158 = arith.mulf %153, %157 : vector<32x128xf32>
    %c0_67 = arith.constant 0 : index
    %c0_68 = arith.constant 0 : index
    %c0_69 = arith.constant 0 : index
    %159 = vector.load %arg13[%c0_67, %c0_68, %c0_69] : memref<1x1x128xf32, #tpu.memory_space<vmem>>, vector<1x1x128xf32>
    %160 = vector.shape_cast %159 : vector<1x1x128xf32> to vector<1x128xf32>
    %161 = vector.broadcast %160 : vector<1x128xf32> to vector<32x128xf32>
    %162 = arith.mulf %158, %161 : vector<32x128xf32>
    %c0_70 = arith.constant 0 : index
    %c0_71 = arith.constant 0 : index
    %c0_72 = arith.constant 0 : index
    %163 = vector.load %arg14[%c0_70, %c0_71, %c0_72] : memref<1x1x128xf32, #tpu.memory_space<vmem>>, vector<1x1x128xf32>
    %164 = vector.shape_cast %163 : vector<1x1x128xf32> to vector<1x128xf32>
    %165 = vector.broadcast %164 : vector<1x128xf32> to vector<32x128xf32>
    %166 = arith.addf %162, %165 : vector<32x128xf32>
    %167 = vector.shape_cast %166 : vector<32x128xf32> to vector<1x32x128xf32>
    %c0_73 = arith.constant 0 : index
    %c0_74 = arith.constant 0 : index
    %c0_75 = arith.constant 0 : index
    %168 = vector.load %arg15[%c0_73, %c0_74, %c0_75] : memref<1x32x128xf32, #tpu.memory_space<vmem>>, vector<1x32x128xf32>
    tpu.vector_store %arg15[%c0_73, %c0_74, %c0_75], %167 {strides = array<i32>} : memref<1x32x128xf32, #tpu.memory_space<vmem>>, vector<1x32x128xf32>,
    return
  }
  func.func @transform_0(%arg0: i32, %arg1: i32) -> (i32, i32, i32) {
    %c0_i32 = arith.constant 0 : i32
    %c0_i32_0 = arith.constant 0 : i32
    %c0_i32_1 = arith.constant 0 : i32
    return %arg0, %c0_i32, %c0_i32_0 : i32, i32, i32
  }
  func.func @transform_1(%arg0: i32, %arg1: i32) -> (i32, i32, i32) {
    %c0_i32 = arith.constant 0 : i32
    %c0_i32_0 = arith.constant 0 : i32
    %c0_i32_1 = arith.constant 0 : i32
    return %arg0, %c0_i32, %c0_i32_0 : i32, i32, i32
  }
  func.func @transform_2(%arg0: i32, %arg1: i32) -> (i32, i32, i32) {
    %c0_i32 = arith.constant 0 : i32
    %c0_i32_0 = arith.constant 0 : i32
    %c0_i32_1 = arith.constant 0 : i32
    return %arg1, %c0_i32, %c0_i32_0 : i32, i32, i32
  }
  func.func @transform_3(%arg0: i32, %arg1: i32) -> (i32, i32, i32) {
    %c0_i32 = arith.constant 0 : i32
    %c0_i32_0 = arith.constant 0 : i32
    %c0_i32_1 = arith.constant 0 : i32
    return %arg1, %c0_i32, %c0_i32_0 : i32, i32, i32
  }
  func.func @transform_4(%arg0: i32, %arg1: i32) -> (i32, i32, i32) {
    %c0_i32 = arith.constant 0 : i32
    %c0_i32_0 = arith.constant 0 : i32
    %c0_i32_1 = arith.constant 0 : i32
    return %arg1, %c0_i32, %c0_i32_0 : i32, i32, i32
  }
  func.func @transform_5(%arg0: i32, %arg1: i32) -> (i32, i32, i32) {
    %c0_i32 = arith.constant 0 : i32
    %c0_i32_0 = arith.constant 0 : i32
    %c0_i32_1 = arith.constant 0 : i32
    return %arg1, %c0_i32, %c0_i32_0 : i32, i32, i32
  }
  func.func @transform_6(%arg0: i32, %arg1: i32) -> (i32, i32, i32) {
    %c0_i32 = arith.constant 0 : i32
    %c0_i32_0 = arith.constant 0 : i32
    %c0_i32_1 = arith.constant 0 : i32
    return %arg1, %c0_i32, %c0_i32_0 : i32, i32, i32
  }
  func.func @transform_7(%arg0: i32, %arg1: i32) -> (i32, i32, i32) {
    %c0_i32 = arith.constant 0 : i32
    %c0_i32_0 = arith.constant 0 : i32
    %c0_i32_1 = arith.constant 0 : i32
    return %arg1, %c0_i32, %c0_i32_0 : i32, i32, i32
  }
  func.func @transform_8(%arg0: i32, %arg1: i32) -> (i32, i32, i32) {
    %c0_i32 = arith.constant 0 : i32
    %c0_i32_0 = arith.constant 0 : i32
    %c0_i32_1 = arith.constant 0 : i32
    return %arg1, %c0_i32, %c0_i32_0 : i32, i32, i32
  }
  func.func @transform_9(%arg0: i32, %arg1: i32) -> (i32, i32, i32) {
    %c0_i32 = arith.constant 0 : i32
    %c0_i32_0 = arith.constant 0 : i32
    %c0_i32_1 = arith.constant 0 : i32
    return %arg1, %c0_i32, %c0_i32_0 : i32, i32, i32
  }
  func.func @transform_10(%arg0: i32, %arg1: i32) -> (i32, i32, i32) {
    %c0_i32 = arith.constant 0 : i32
    %c0_i32_0 = arith.constant 0 : i32
    %c0_i32_1 = arith.constant 0 : i32
    return %arg1, %c0_i32, %c0_i32_0 : i32, i32, i32
  }
  func.func @transform_11(%arg0: i32, %arg1: i32) -> (i32, i32, i32) {
    %c0_i32 = arith.constant 0 : i32
    %c0_i32_0 = arith.constant 0 : i32
    %c0_i32_1 = arith.constant 0 : i32
    return %arg1, %c0_i32, %c0_i32_0 : i32, i32, i32
  }
  func.func @transform_12(%arg0: i32, %arg1: i32) -> (i32, i32, i32) {
    %c0_i32 = arith.constant 0 : i32
    %c0_i32_0 = arith.constant 0 : i32
    %c0_i32_1 = arith.constant 0 : i32
    return %arg1, %c0_i32, %c0_i32_0 : i32, i32, i32
  }
  func.func @transform_13(%arg0: i32, %arg1: i32) -> (i32, i32, i32) {
    %c0_i32 = arith.constant 0 : i32
    %c0_i32_0 = arith.constant 0 : i32
    %c0_i32_1 = arith.constant 0 : i32
    return %arg0, %c0_i32, %c0_i32_0 : i32, i32, i32
  }
}

</mosaic_0001>

<llo_original>
// kernel: tpu_custom_call.1
$region0: #{tpu_custom_call.1}
  #allocation0 [shape = 'u32[]', space=smem, size = 0x4, offset = 0x4, fixed_abs, tag = 'smem constant byte address 0x4 - core index']
  #allocation1 [shape = 'u32[144,128]{1,0:T(1,128)}', space=vmem, size = 0x12000, scoped, tag = 'internal scratch']
  %s0 = inlined_call_operand.hbm [shape: f32[2,32,128], index: 0, kind: input, shape index: {}]
  %s1 = inlined_call_operand.vmem [shape: f32[2,1,32], index: 1, kind: input, shape index: {}]
  %s2 = inlined_call_operand.hbm [shape: f32[2,128,384], index: 2, kind: input, shape index: {}]
  %s3 = inlined_call_operand.hbm [shape: f32[2,128,128], index: 3, kind: input, shape index: {}]
  %s4 = inlined_call_operand.vmem [shape: f32[2,1,128], index: 4, kind: input, shape index: {}]
  %s5 = inlined_call_operand.vmem [shape: f32[2,1,128], index: 5, kind: input, shape index: {}]
  %s6 = inlined_call_operand.vmem [shape: f32[2,1,128], index: 6, kind: input, shape index: {}]
  %s7 = inlined_call_operand.hbm [shape: f32[2,128,256], index: 7, kind: input, shape index: {}]
  %s8 = inlined_call_operand.vmem [shape: f32[2,1,256], index: 8, kind: input, shape index: {}]
  %s9 = inlined_call_operand.hbm [shape: f32[2,256,128], index: 9, kind: input, shape index: {}]
  %s10 = inlined_call_operand.vmem [shape: f32[2,1,128], index: 10, kind: input, shape index: {}]
  %s11 = inlined_call_operand.vmem [shape: f32[2,1,128], index: 11, kind: input, shape index: {}]
  %s12 = inlined_call_operand.vmem [shape: f32[2,1,128], index: 12, kind: input, shape index: {}]
  %s13 = inlined_call_operand.hbm [shape: f32[2,32,128], index: 13, kind: output, shape index: {}]
  %s14 = sld [smem:[#allocation0]]
  $region109: #{tpu_custom_call.1} parent=0
    _
  %s16 = ssub.s32 1, %s14
  %s17 = scalar_select 0, %s16, %s14
  $region1: #{tpu_custom_call.1} parent=0
    #allocation2 [shape = 'u8[32768]{0}', space=vmem, size = 0x8000, scoped, tag = 'input window, operand 0']
    #allocation3 [shape = 's32[2]{0}', space=sflag, size = 0x8, scoped, tag = 'scoped memory for tpu_custom_call.1']
    #allocation4 [shape = 's32[2]{0}', space=sflag, size = 0x8, scoped, tag = 'scoped memory for tpu_custom_call.1']
    #allocation5 [shape = 'u8[393216]{0}', space=vmem, size = 0x60000, scoped, tag = 'input window, operand 2']
    #allocation6 [shape = 's32[2]{0}', space=sflag, size = 0x8, scoped, tag = 'scoped memory for tpu_custom_call.1']
    #allocation7 [shape = 'u8[131072]{0}', space=vmem, size = 0x20000, scoped, tag = 'input window, operand 3']
    #allocation8 [shape = 'u8[262144]{0}', space=vmem, size = 0x40000, scoped, tag = 'input window, operand 7']
    #allocation9 [shape = 's32[2]{0}', space=sflag, size = 0x8, scoped, tag = 'scoped memory for tpu_custom_call.1']
    #allocation10 [shape = 'u8[262144]{0}', space=vmem, size = 0x40000, scoped, tag = 'input window, operand 9']
    #allocation11 [shape = 'u8[32768]{0}', space=vmem, size = 0x8000, scoped, tag = 'output window, operand 0']
    %18 = vsyncpa [#allocation3], 0
    %s19 = scalar_lea.sflag [#allocation3], 1
    %20 = vsyncpa %s19, 0
    %21 = vsyncpa [#allocation6], 0
    %s22 = scalar_lea.sflag [#allocation6], 1
    %23 = vsyncpa %s22, 0
    %24 = vsyncpa [#allocation9], 0
    %s25 = scalar_lea.sflag [#allocation9], 1
    %26 = vsyncpa %s25, 0
    %27 = vsyncpa [#allocation4], 0
    %s28 = scalar_lea.sflag [#allocation4], 1
    %29 = vsyncpa %s28, 0
    loop: start=0, step=1, limit=6
    $region2: #{tpu_custom_call.1} parent=1 // loop_pre_header
      _
    $region3: #{tpu_custom_call.1} parent=1 // loop_header
      %s31 = sphi 0, %s35
      %p32 = scmp.ge.s32.totalorder %s31, 6
      %s38 = sphi 0, %s50
      %s39 = sphi 0, %s46
      %s40 = sphi 0, %s38
      %s41 = sphi 0, %s39
      %s42 = sphi 0, %s40
      %s43 = sphi 0, %s41
      %s53 = sphi 0, %s55
      %s56 = sphi 0, %s53
      %s57 = sphi 0, %s56
      %s73 = sphi 0, %s57
      %s79 = sphi 0, %s81
      %s82 = sphi 0, %s79
      %s83 = sphi 0, %s82
      %s99 = sphi 0, %s83
      %s105 = sphi 0, %s107
      %s108 = sphi 0, %s105
      %s109 = sphi 0, %s108
      %s125 = sphi 0, %s109
      %s131 = sphi 0, %s133
      %s134 = sphi 0, %s131
      %s135 = sphi 0, %s134
      %s151 = sphi 0, %s135
      %s157 = sphi 0, %s159
      %s160 = sphi 0, %s157
      %s161 = sphi 0, %s160
      %s177 = sphi 0, %s161
      %s183 = sphi 0, %s185
      %s186 = sphi 0, %s183
      %s187 = sphi 0, %s186
      %s203 = sphi 0, %s187
      %s209 = sphi 0, %s211
      %s212 = sphi 0, %s209
      %s213 = sphi 0, %s212
      %s229 = sphi 0, %s213
      %s235 = sphi 0, %s237
      %s238 = sphi 0, %s235
      %s239 = sphi 0, %s238
      %s255 = sphi 0, %s239
      %s261 = sphi 0, %s263
      %s264 = sphi 0, %s261
      %s265 = sphi 0, %s264
      %s281 = sphi 0, %s265
      %s287 = sphi 0, %s289
      %s290 = sphi 0, %s287
      %s291 = sphi 0, %s290
      %s307 = sphi 0, %s291
      %s313 = sphi 0, %s315
      %s316 = sphi 0, %s313
      %s317 = sphi 0, %s316
      %s333 = sphi 0, %s317
      %s339 = sphi 0, %s341
      %s342 = sphi 0, %s339
      %s343 = sphi 0, %s342
      %s359 = sphi 0, %s343
      %s365 = sphi 0, %s367
      %s368 = sphi 0, %s365
      %s369 = sphi 0, %s368
      %s385 = sphi 0, %s369
      %s391 = sphi 0, %s393
      %s394 = sphi 0, %s391
      %s395 = sphi 0, %s394
      %s411 = sphi 0, %s395
    $region4: #{tpu_custom_call.1} parent=1 // loop_header_branch
      %34 = sbr.rel (%p32) target = $region8
    $region5: #{tpu_custom_call.1} parent=1 // loop_body
      %s36 = ssub.s32 %s31, 1
      %s37 = ssub.s32 %s31, 2
      %s44 = sadd.s32 1, %s39
      %p45 = scmp.ge.s32.totalorder %s44, 2
      %s46 = scalar_select %p45, 0, %s44
      %s47 = sadd.s32 1, %s38
      %s48 = scalar_select %p45, %s47, %s38
      %p49 = scmp.ge.s32.totalorder %s48, 2
      %s50 = scalar_select %p49, 0, %s48
      %s51 = ssub.s32 %s38, %s50
      %p52 = scmp.eq.s32.totalorder %s51, 0
      %s54 = sadd.s32 %s53, 1
      %s55 = scalar_select %p52, %s53, %s54
      %p58 = pneg %p52
      %p59 = scmp.eq.s32.totalorder %s31, 3
      %p60 = por %p58, %p59
      %p61 = scmp.ne.s32.totalorder %s53, %s56
      %p62 = scmp.eq.s32.totalorder %s31, 0
      %p63 = por %p61, %p62
      %p64 = scmp.ne.s32.totalorder %s53, %s56
      %p65 = scmp.eq.s32.totalorder %s36, 3
      %p66 = por %p64, %p65
      %p67 = scmp.ne.s32.totalorder %s56, %s57
      %p68 = scmp.eq.s32.totalorder %s36, 0
      %p69 = por %p67, %p68
      %p70 = scmp.ne.s32.totalorder %s56, %s57
      %p71 = scmp.eq.s32.totalorder %s37, 3
      %p72 = por %p70, %p71
      %p74 = scmp.ne.s32.totalorder %s57, %s73
      %p75 = scmp.eq.s32.totalorder %s37, 0
      %p76 = por %p74, %p75
      %s77 = ssub.s32 %s38, %s50
      %p78 = scmp.eq.s32.totalorder %s77, 0
      %s80 = sadd.s32 %s79, 1
      %s81 = scalar_select %p78, %s79, %s80
      %p84 = pneg %p78
      %p85 = scmp.eq.s32.totalorder %s31, 3
      %p86 = por %p84, %p85
      %p87 = scmp.ne.s32.totalorder %s79, %s82
      %p88 = scmp.eq.s32.totalorder %s31, 0
      %p89 = por %p87, %p88
      %p90 = scmp.ne.s32.totalorder %s79, %s82
      %p91 = scmp.eq.s32.totalorder %s36, 3
      %p92 = por %p90, %p91
      %p93 = scmp.ne.s32.totalorder %s82, %s83
      %p94 = scmp.eq.s32.totalorder %s36, 0
      %p95 = por %p93, %p94
      %p96 = scmp.ne.s32.totalorder %s82, %s83
      %p97 = scmp.eq.s32.totalorder %s37, 3
      %p98 = por %p96, %p97
      %p100 = scmp.ne.s32.totalorder %s83, %s99
      %p101 = scmp.eq.s32.totalorder %s37, 0
      %p102 = por %p100, %p101
      %s103 = ssub.s32 %s39, %s46
      %p104 = scmp.eq.s32.totalorder %s103, 0
      %s106 = sadd.s32 %s105, 1
      %s107 = scalar_select %p104, %s105, %s106
      %p110 = pneg %p104
      %p111 = scmp.eq.s32.totalorder %s31, 3
      %p112 = por %p110, %p111
      %p113 = scmp.ne.s32.totalorder %s105, %s108
      %p114 = scmp.eq.s32.totalorder %s31, 0
      %p115 = por %p113, %p114
      %p116 = scmp.ne.s32.totalorder %s105, %s108
      %p117 = scmp.eq.s32.totalorder %s36, 3
      %p118 = por %p116, %p117
      %p119 = scmp.ne.s32.totalorder %s108, %s109
      %p120 = scmp.eq.s32.totalorder %s36, 0
      %p121 = por %p119, %p120
      %p122 = scmp.ne.s32.totalorder %s108, %s109
      %p123 = scmp.eq.s32.totalorder %s37, 3
      %p124 = por %p122, %p123
      %p126 = scmp.ne.s32.totalorder %s109, %s125
      %p127 = scmp.eq.s32.totalorder %s37, 0
      %p128 = por %p126, %p127
      %s129 = ssub.s32 %s39, %s46
      %p130 = scmp.eq.s32.totalorder %s129, 0
      %s132 = sadd.s32 %s131, 1
      %s133 = scalar_select %p130, %s131, %s132
      %p136 = pneg %p130
      %p137 = scmp.eq.s32.totalorder %s31, 3
      %p138 = por %p136, %p137
      %p139 = scmp.ne.s32.totalorder %s131, %s134
      %p140 = scmp.eq.s32.totalorder %s31, 0
      %p141 = por %p139, %p140
      %p142 = scmp.ne.s32.totalorder %s131, %s134
      %p143 = scmp.eq.s32.totalorder %s36, 3
      %p144 = por %p142, %p143
      %p145 = scmp.ne.s32.totalorder %s134, %s135
      %p146 = scmp.eq.s32.totalorder %s36, 0
      %p147 = por %p145, %p146
      %p148 = scmp.ne.s32.totalorder %s134, %s135
      %p149 = scmp.eq.s32.totalorder %s37, 3
      %p150 = por %p148, %p149
      %p152 = scmp.ne.s32.totalorder %s135, %s151
      %p153 = scmp.eq.s32.totalorder %s37, 0
      %p154 = por %p152, %p153
      %s155 = ssub.s32 %s39, %s46
      %p156 = scmp.eq.s32.totalorder %s155, 0
      %s158 = sadd.s32 %s157, 1
      %s159 = scalar_select %p156, %s157, %s158
      %p162 = pneg %p156
      %p163 = scmp.eq.s32.totalorder %s31, 3
      %p164 = por %p162, %p163
      %p165 = scmp.ne.s32.totalorder %s157, %s160
      %p166 = scmp.eq.s32.totalorder %s31, 0
      %p167 = por %p165, %p166
      %p168 = scmp.ne.s32.totalorder %s157, %s160
      %p169 = scmp.eq.s32.totalorder %s36, 3
      %p170 = por %p168, %p169
      %p171 = scmp.ne.s32.totalorder %s160, %s161
      %p172 = scmp.eq.s32.totalorder %s36, 0
      %p173 = por %p171, %p172
      %p174 = scmp.ne.s32.totalorder %s160, %s161
      %p175 = scmp.eq.s32.totalorder %s37, 3
      %p176 = por %p174, %p175
      %p178 = scmp.ne.s32.totalorder %s161, %s177
      %p179 = scmp.eq.s32.totalorder %s37, 0
      %p180 = por %p178, %p179
      %s181 = ssub.s32 %s39, %s46
      %p182 = scmp.eq.s32.totalorder %s181, 0
      %s184 = sadd.s32 %s183, 1
      %s185 = scalar_select %p182, %s183, %s184
      %p188 = pneg %p182
      %p189 = scmp.eq.s32.totalorder %s31, 3
      %p190 = por %p188, %p189
      %p191 = scmp.ne.s32.totalorder %s183, %s186
      %p192 = scmp.eq.s32.totalorder %s31, 0
      %p193 = por %p191, %p192
      %p194 = scmp.ne.s32.totalorder %s183, %s186
      %p195 = scmp.eq.s32.totalorder %s36, 3
      %p196 = por %p194, %p195
      %p197 = scmp.ne.s32.totalorder %s186, %s187
      %p198 = scmp.eq.s32.totalorder %s36, 0
      %p199 = por %p197, %p198
      %p200 = scmp.ne.s32.totalorder %s186, %s187
      %p201 = scmp.eq.s32.totalorder %s37, 3
      %p202 = por %p200, %p201
      %p204 = scmp.ne.s32.totalorder %s187, %s203
      %p205 = scmp.eq.s32.totalorder %s37, 0
      %p206 = por %p204, %p205
      %s207 = ssub.s32 %s39, %s46
      %p208 = scmp.eq.s32.totalorder %s207, 0
      %s210 = sadd.s32 %s209, 1
      %s211 = scalar_select %p208, %s209, %s210
      %p214 = pneg %p208
      %p215 = scmp.eq.s32.totalorder %s31, 3
      %p216 = por %p214, %p215
      %p217 = scmp.ne.s32.totalorder %s209, %s212
      %p218 = scmp.eq.s32.totalorder %s31, 0
      %p219 = por %p217, %p218
      %p220 = scmp.ne.s32.totalorder %s209, %s212
      %p221 = scmp.eq.s32.totalorder %s36, 3
      %p222 = por %p220, %p221
      %p223 = scmp.ne.s32.totalorder %s212, %s213
      %p224 = scmp.eq.s32.totalorder %s36, 0
      %p225 = por %p223, %p224
      %p226 = scmp.ne.s32.totalorder %s212, %s213
      %p227 = scmp.eq.s32.totalorder %s37, 3
      %p228 = por %p226, %p227
      %p230 = scmp.ne.s32.totalorder %s213, %s229
      %p231 = scmp.eq.s32.totalorder %s37, 0
      %p232 = por %p230, %p231
      %s233 = ssub.s32 %s39, %s46
      %p234 = scmp.eq.s32.totalorder %s233, 0
      %s236 = sadd.s32 %s235, 1
      %s237 = scalar_select %p234, %s235, %s236
      %p240 = pneg %p234
      %p241 = scmp.eq.s32.totalorder %s31, 3
      %p242 = por %p240, %p241
      %p243 = scmp.ne.s32.totalorder %s235, %s238
      %p244 = scmp.eq.s32.totalorder %s31, 0
      %p245 = por %p243, %p244
      %p246 = scmp.ne.s32.totalorder %s235, %s238
      %p247 = scmp.eq.s32.totalorder %s36, 3
      %p248 = por %p246, %p247
      %p249 = scmp.ne.s32.totalorder %s238, %s239
      %p250 = scmp.eq.s32.totalorder %s36, 0
      %p251 = por %p249, %p250
      %p252 = scmp.ne.s32.totalorder %s238, %s239
      %p253 = scmp.eq.s32.totalorder %s37, 3
      %p254 = por %p252, %p253
      %p256 = scmp.ne.s32.totalorder %s239, %s255
      %p257 = scmp.eq.s32.totalorder %s37, 0
      %p258 = por %p256, %p257
      %s259 = ssub.s32 %s39, %s46
      %p260 = scmp.eq.s32.totalorder %s259, 0
      %s262 = sadd.s32 %s261, 1
      %s263 = scalar_select %p260, %s261, %s262
      %p266 = pneg %p260
      %p267 = scmp.eq.s32.totalorder %s31, 3
      %p268 = por %p266, %p267
      %p269 = scmp.ne.s32.totalorder %s261, %s264
      %p270 = scmp.eq.s32.totalorder %s31, 0
      %p271 = por %p269, %p270
      %p272 = scmp.ne.s32.totalorder %s261, %s264
      %p273 = scmp.eq.s32.totalorder %s36, 3
      %p274 = por %p272, %p273
      %p275 = scmp.ne.s32.totalorder %s264, %s265
      %p276 = scmp.eq.s32.totalorder %s36, 0
      %p277 = por %p275, %p276
      %p278 = scmp.ne.s32.totalorder %s264, %s265
      %p279 = scmp.eq.s32.totalorder %s37, 3
      %p280 = por %p278, %p279
      %p282 = scmp.ne.s32.totalorder %s265, %s281
      %p283 = scmp.eq.s32.totalorder %s37, 0
      %p284 = por %p282, %p283
      %s285 = ssub.s32 %s39, %s46
      %p286 = scmp.eq.s32.totalorder %s285, 0
      %s288 = sadd.s32 %s287, 1
      %s289 = scalar_select %p286, %s287, %s288
      %p292 = pneg %p286
      %p293 = scmp.eq.s32.totalorder %s31, 3
      %p294 = por %p292, %p293
      %p295 = scmp.ne.s32.totalorder %s287, %s290
      %p296 = scmp.eq.s32.totalorder %s31, 0
      %p297 = por %p295, %p296
      %p298 = scmp.ne.s32.totalorder %s287, %s290
      %p299 = scmp.eq.s32.totalorder %s36, 3
      %p300 = por %p298, %p299
      %p301 = scmp.ne.s32.totalorder %s290, %s291
      %p302 = scmp.eq.s32.totalorder %s36, 0
      %p303 = por %p301, %p302
      %p304 = scmp.ne.s32.totalorder %s290, %s291
      %p305 = scmp.eq.s32.totalorder %s37, 3
      %p306 = por %p304, %p305
      %p308 = scmp.ne.s32.totalorder %s291, %s307
      %p309 = scmp.eq.s32.totalorder %s37, 0
      %p310 = por %p308, %p309
      %s311 = ssub.s32 %s39, %s46
      %p312 = scmp.eq.s32.totalorder %s311, 0
      %s314 = sadd.s32 %s313, 1
      %s315 = scalar_select %p312, %s313, %s314
      %p318 = pneg %p312
      %p319 = scmp.eq.s32.totalorder %s31, 3
      %p320 = por %p318, %p319
      %p321 = scmp.ne.s32.totalorder %s313, %s316
      %p322 = scmp.eq.s32.totalorder %s31, 0
      %p323 = por %p321, %p322
      %p324 = scmp.ne.s32.totalorder %s313, %s316
      %p325 = scmp.eq.s32.totalorder %s36, 3
      %p326 = por %p324, %p325
      %p327 = scmp.ne.s32.totalorder %s316, %s317
      %p328 = scmp.eq.s32.totalorder %s36, 0
      %p329 = por %p327, %p328
      %p330 = scmp.ne.s32.totalorder %s316, %s317
      %p331 = scmp.eq.s32.totalorder %s37, 3
      %p332 = por %p330, %p331
      %p334 = scmp.ne.s32.totalorder %s317, %s333
      %p335 = scmp.eq.s32.totalorder %s37, 0
      %p336 = por %p334, %p335
      %s337 = ssub.s32 %s39, %s46
      %p338 = scmp.eq.s32.totalorder %s337, 0
      %s340 = sadd.s32 %s339, 1
      %s341 = scalar_select %p338, %s339, %s340
      %p344 = pneg %p338
      %p345 = scmp.eq.s32.totalorder %s31, 3
      %p346 = por %p344, %p345
      %p347 = scmp.ne.s32.totalorder %s339, %s342
      %p348 = scmp.eq.s32.totalorder %s31, 0
      %p349 = por %p347, %p348
      %p350 = scmp.ne.s32.totalorder %s339, %s342
      %p351 = scmp.eq.s32.totalorder %s36, 3
      %p352 = por %p350, %p351
      %p353 = scmp.ne.s32.totalorder %s342, %s343
      %p354 = scmp.eq.s32.totalorder %s36, 0
      %p355 = por %p353, %p354
      %p356 = scmp.ne.s32.totalorder %s342, %s343
      %p357 = scmp.eq.s32.totalorder %s37, 3
      %p358 = por %p356, %p357
      %p360 = scmp.ne.s32.totalorder %s343, %s359
      %p361 = scmp.eq.s32.totalorder %s37, 0
      %p362 = por %p360, %p361
      %s363 = ssub.s32 %s39, %s46
      %p364 = scmp.eq.s32.totalorder %s363, 0
      %s366 = sadd.s32 %s365, 1
      %s367 = scalar_select %p364, %s365, %s366
      %p370 = pneg %p364
      %p371 = scmp.eq.s32.totalorder %s31, 3
      %p372 = por %p370, %p371
      %p373 = scmp.ne.s32.totalorder %s365, %s368
      %p374 = scmp.eq.s32.totalorder %s31, 0
      %p375 = por %p373, %p374
      %p376 = scmp.ne.s32.totalorder %s365, %s368
      %p377 = scmp.eq.s32.totalorder %s36, 3
      %p378 = por %p376, %p377
      %p379 = scmp.ne.s32.totalorder %s368, %s369
      %p380 = scmp.eq.s32.totalorder %s36, 0
      %p381 = por %p379, %p380
      %p382 = scmp.ne.s32.totalorder %s368, %s369
      %p383 = scmp.eq.s32.totalorder %s37, 3
      %p384 = por %p382, %p383
      %p386 = scmp.ne.s32.totalorder %s369, %s385
      %p387 = scmp.eq.s32.totalorder %s37, 0
      %p388 = por %p386, %p387
      %s389 = ssub.s32 %s38, %s50
      %p390 = scmp.eq.s32.totalorder %s389, 0
      %s392 = sadd.s32 %s391, 1
      %s393 = scalar_select %p390, %s391, %s392
      %p396 = pneg %p390
      %p397 = scmp.eq.s32.totalorder %s31, 3
      %p398 = por %p396, %p397
      %p399 = scmp.ne.s32.totalorder %s391, %s394
      %p400 = scmp.eq.s32.totalorder %s31, 0
      %p401 = por %p399, %p400
      %p402 = scmp.ne.s32.totalorder %s391, %s394
      %p403 = scmp.eq.s32.totalorder %s36, 3
      %p404 = por %p402, %p403
      %p405 = scmp.ne.s32.totalorder %s394, %s395
      %p406 = scmp.eq.s32.totalorder %s36, 0
      %p407 = por %p405, %p406
      %p408 = scmp.ne.s32.totalorder %s394, %s395
      %p409 = scmp.eq.s32.totalorder %s37, 3
      %p410 = por %p408, %p409
      %p412 = scmp.ne.s32.totalorder %s395, %s411
      %p413 = scmp.eq.s32.totalorder %s37, 0
      %p414 = por %p412, %p413
      %p415 = scmp.le.s32.totalorder 1, %s31
      %p416 = scmp.lt.s32.totalorder %s31, 5
      %p417 = pnand %p415, %p416
      %p418 = pneg %p417
      // Predicated region
      $region9: #{tpu_custom_call.1} parent=5 // pred_check
        _
      $region10: #{tpu_custom_call.1} parent=5 // pred_check_branch
        %420 = sbr.rel (%p417) target = $region12
      $region11: #{tpu_custom_call.1} parent=5 // pred_region
        %s421 = ssub.s32 %s31, 1
      $region12: #{tpu_custom_call.1} parent=5 // pred_fallthru
        _
      %p422 = scmp.lt.s32.totalorder %s31, 4
      // Predicated region
      $region13: #{tpu_custom_call.1} parent=5 // pred_check
        %p423 = pneg %p422
      $region14: #{tpu_custom_call.1} parent=5 // pred_check_branch
        %425 = sbr.rel (%p423) target = $region16
      $region15: #{tpu_custom_call.1} parent=5 // pred_region
        // Predicated region
        $region17: #{tpu_custom_call.1} parent=15 // pred_check
          %p426 = pneg %p63
        $region18: #{tpu_custom_call.1} parent=15 // pred_check_branch
          %428 = sbr.rel (%p426) target = $region20
        $region19: #{tpu_custom_call.1} parent=15 // pred_region
          %s429 = sand.u32 %s53, 1
          %s430 = scalar_lea.sflag [#allocation3], %s429
          %s431 = sand.u32 %s53, 1
          %s432 = smul.addr %s431, 32
          %s433 = scalar_lea.vmem [#allocation2], %s432
          %s435 = ssub.s32 512, 512
          %436 = vsyncadd %s430, %s435
          %s437 = smul.addr %s38, 4
          %s438 = smul.addr %s437, 128
          %s439 = scalar_lea.hbm %s0, %s438
          %s440 = sshll.u32 %s433, 4
          %s441 = int_to_ptr.vmem [resolvable:$true] %s440
          %446 = dma.hbm_to_vmem [thread:$0]  %s439, 512, %s441, %s430, 128, 128, 8
        $region20: #{tpu_custom_call.1} parent=15 // pred_fallthru
          _
        // Predicated region
        $region21: #{tpu_custom_call.1} parent=15 // pred_check
          %p447 = pneg %p89
        $region22: #{tpu_custom_call.1} parent=15 // pred_check_branch
          %449 = sbr.rel (%p447) target = $region24
        $region23: #{tpu_custom_call.1} parent=15 // pred_region
          %p450 = scmp.lt.s32.totalorder %s38, 1
          %s451 = scalar_select %p450, %s38, 1
          %s452 = scalar_lea.vmem %s1, %s451
        $region24: #{tpu_custom_call.1} parent=15 // pred_fallthru
          _
        // Predicated region
        $region25: #{tpu_custom_call.1} parent=15 // pred_check
          %p453 = pneg %p115
        $region26: #{tpu_custom_call.1} parent=15 // pred_check_branch
          %455 = sbr.rel (%p453) target = $region28
        $region27: #{tpu_custom_call.1} parent=15 // pred_region
          %s456 = sand.u32 %s31, 1
          %s457 = scalar_lea.sflag [#allocation6], %s456
          %s458 = sand.u32 %s105, 1
          %s459 = smul.addr %s458, 384
          %s460 = scalar_lea.vmem [#allocation5], %s459
          %s462 = ssub.s32 6144, 6144
          %463 = vsyncadd %s457, %s462
          %s464 = smul.addr %s39, 48
          %s465 = smul.addr %s464, 128
          %s466 = scalar_lea.hbm %s2, %s465
          %s467 = sshll.u32 %s460, 4
          %s468 = int_to_ptr.vmem [resolvable:$true] %s467
          %473 = dma.hbm_to_vmem [thread:$0]  %s466, 6144, %s468, %s457, 384, 384, 24
        $region28: #{tpu_custom_call.1} parent=15 // pred_fallthru
          _
        // Predicated region
        $region29: #{tpu_custom_call.1} parent=15 // pred_check
          %p474 = pneg %p141
        $region30: #{tpu_custom_call.1} parent=15 // pred_check_branch
          %476 = sbr.rel (%p474) target = $region32
        $region31: #{tpu_custom_call.1} parent=15 // pred_region
          %s477 = sand.u32 %s31, 1
          %s478 = scalar_lea.sflag [#allocation6], %s477
          %s479 = sand.u32 %s131, 1
          %s480 = smul.addr %s479, 128
          %s481 = scalar_lea.vmem [#allocation7], %s480
          %s483 = ssub.s32 2048, 2048
          %484 = vsyncadd %s478, %s483
          %s485 = smul.addr %s39, 16
          %s486 = smul.addr %s485, 128
          %s487 = scalar_lea.hbm %s3, %s486
          %s488 = sshll.u32 %s481, 4
          %s489 = int_to_ptr.vmem [resolvable:$true] %s488
          %494 = dma.hbm_to_vmem [thread:$0]  %s487, 2048, %s489, %s478, 128, 128, 8
        $region32: #{tpu_custom_call.1} parent=15 // pred_fallthru
          _
        // Predicated region
        $region33: #{tpu_custom_call.1} parent=15 // pred_check
          %p495 = pneg %p167
        $region34: #{tpu_custom_call.1} parent=15 // pred_check_branch
          %497 = sbr.rel (%p495) target = $region36
        $region35: #{tpu_custom_call.1} parent=15 // pred_region
          %p498 = scmp.lt.s32.totalorder %s39, 1
          %s499 = scalar_select %p498, %s39, 1
          %s500 = scalar_lea.vmem %s4, %s499
        $region36: #{tpu_custom_call.1} parent=15 // pred_fallthru
          _
        // Predicated region
        $region37: #{tpu_custom_call.1} parent=15 // pred_check
          %p501 = pneg %p193
        $region38: #{tpu_custom_call.1} parent=15 // pred_check_branch
          %503 = sbr.rel (%p501) target = $region40
        $region39: #{tpu_custom_call.1} parent=15 // pred_region
          %p504 = scmp.lt.s32.totalorder %s39, 1
          %s505 = scalar_select %p504, %s39, 1
          %s506 = scalar_lea.vmem %s5, %s505
        $region40: #{tpu_custom_call.1} parent=15 // pred_fallthru
          _
        // Predicated region
        $region41: #{tpu_custom_call.1} parent=15 // pred_check
          %p507 = pneg %p219
        $region42: #{tpu_custom_call.1} parent=15 // pred_check_branch
          %509 = sbr.rel (%p507) target = $region44
        $region43: #{tpu_custom_call.1} parent=15 // pred_region
          %p510 = scmp.lt.s32.totalorder %s39, 1
          %s511 = scalar_select %p510, %s39, 1
          %s512 = scalar_lea.vmem %s6, %s511
        $region44: #{tpu_custom_call.1} parent=15 // pred_fallthru
          _
        // Predicated region
        $region45: #{tpu_custom_call.1} parent=15 // pred_check
          %p513 = pneg %p245
        $region46: #{tpu_custom_call.1} parent=15 // pred_check_branch
          %515 = sbr.rel (%p513) target = $region48
        $region47: #{tpu_custom_call.1} parent=15 // pred_region
          %s516 = sand.u32 %s31, 1
          %s517 = scalar_lea.sflag [#allocation9], %s516
          %s518 = sand.u32 %s235, 1
          %s519 = smul.addr %s518, 256
          %s520 = scalar_lea.vmem [#allocation8], %s519
          %s522 = ssub.s32 4096, 4096
          %523 = vsyncadd %s517, %s522
          %s524 = smul.addr %s39, 32
          %s525 = smul.addr %s524, 128
          %s526 = scalar_lea.hbm %s7, %s525
          %s527 = sshll.u32 %s520, 4
          %s528 = int_to_ptr.vmem [resolvable:$true] %s527
          %533 = dma.hbm_to_vmem [thread:$0]  %s526, 4096, %s528, %s517, 256, 256, 16
        $region48: #{tpu_custom_call.1} parent=15 // pred_fallthru
          _
        // Predicated region
        $region49: #{tpu_custom_call.1} parent=15 // pred_check
          %p534 = pneg %p271
        $region50: #{tpu_custom_call.1} parent=15 // pred_check_branch
          %536 = sbr.rel (%p534) target = $region52
        $region51: #{tpu_custom_call.1} parent=15 // pred_region
          %p537 = scmp.lt.s32.totalorder %s39, 1
          %s538 = scalar_select %p537, %s39, 1
          %s539 = smul.addr %s538, 2
          %s540 = scalar_lea.vmem %s8, %s539
        $region52: #{tpu_custom_call.1} parent=15 // pred_fallthru
          _
        // Predicated region
        $region53: #{tpu_custom_call.1} parent=15 // pred_check
          %p541 = pneg %p297
        $region54: #{tpu_custom_call.1} parent=15 // pred_check_branch
          %543 = sbr.rel (%p541) target = $region56
        $region55: #{tpu_custom_call.1} parent=15 // pred_region
          %s544 = sand.u32 %s31, 1
          %s545 = scalar_lea.sflag [#allocation9], %s544
          %s546 = sand.u32 %s287, 1
          %s547 = smul.addr %s546, 256
          %s548 = scalar_lea.vmem [#allocation10], %s547
          %s550 = ssub.s32 4096, 4096
          %551 = vsyncadd %s545, %s550
          %s552 = smul.addr %s39, 32
          %s553 = smul.addr %s552, 128
          %s554 = scalar_lea.hbm %s9, %s553
          %s555 = sshll.u32 %s548, 4
          %s556 = int_to_ptr.vmem [resolvable:$true] %s555
          %561 = dma.hbm_to_vmem [thread:$0]  %s554, 4096, %s556, %s545, 128, 128, 8
        $region56: #{tpu_custom_call.1} parent=15 // pred_fallthru
          _
        // Predicated region
        $region57: #{tpu_custom_call.1} parent=15 // pred_check
          %p562 = pneg %p323
        $region58: #{tpu_custom_call.1} parent=15 // pred_check_branch
          %564 = sbr.rel (%p562) target = $region60
        $region59: #{tpu_custom_call.1} parent=15 // pred_region
          %p565 = scmp.lt.s32.totalorder %s39, 1
          %s566 = scalar_select %p565, %s39, 1
          %s567 = scalar_lea.vmem %s10, %s566
        $region60: #{tpu_custom_call.1} parent=15 // pred_fallthru
          _
        // Predicated region
        $region61: #{tpu_custom_call.1} parent=15 // pred_check
          %p568 = pneg %p349
        $region62: #{tpu_custom_call.1} parent=15 // pred_check_branch
          %570 = sbr.rel (%p568) target = $region64
        $region63: #{tpu_custom_call.1} parent=15 // pred_region
          %p571 = scmp.lt.s32.totalorder %s39, 1
          %s572 = scalar_select %p571, %s39, 1
          %s573 = scalar_lea.vmem %s11, %s572
        $region64: #{tpu_custom_call.1} parent=15 // pred_fallthru
          _
        // Predicated region
        $region65: #{tpu_custom_call.1} parent=15 // pred_check
          %p574 = pneg %p375
        $region66: #{tpu_custom_call.1} parent=15 // pred_check_branch
          %576 = sbr.rel (%p574) target = $region68
        $region67: #{tpu_custom_call.1} parent=15 // pred_region
          %p577 = scmp.lt.s32.totalorder %s39, 1
          %s578 = scalar_select %p577, %s39, 1
          %s579 = scalar_lea.vmem %s12, %s578
        $region68: #{tpu_custom_call.1} parent=15 // pred_fallthru
          _
      $region16: #{tpu_custom_call.1} parent=5 // pred_fallthru
        _
      %p580 = scmp.le.s32.totalorder 1, %s31
      %p581 = scmp.lt.s32.totalorder %s31, 5
      %p582 = pnand %p580, %p581
      %p583 = pneg %p582
      // Predicated region
      $region69: #{tpu_custom_call.1} parent=5 // pred_check
        _
      $region70: #{tpu_custom_call.1} parent=5 // pred_check_branch
        %585 = sbr.rel (%p582) target = $region72
      $region71: #{tpu_custom_call.1} parent=5 // pred_region
        %s586 = ssub.s32 %s31, 1
        %s587 = sand.u32 %s56, 1
        %s588 = scalar_lea.sflag [#allocation3], %s587
        %s589 = sand.u32 %s56, 1
        %s590 = smul.addr %s589, 32
        %s591 = scalar_lea.vmem [#allocation2], %s590
        // Predicated region
        $region73: #{tpu_custom_call.1} parent=71 // pred_check
          %p592 = pneg %p69
        $region74: #{tpu_custom_call.1} parent=71 // pred_check_branch
          %594 = sbr.rel (%p592) target = $region76
        $region75: #{tpu_custom_call.1} parent=71 // pred_region
          %595 = dma.done %s588, 512
        $region76: #{tpu_custom_call.1} parent=71 // pred_fallthru
          _
        %s596 = sand.u32 %s36, 1
        %s597 = scalar_lea.sflag [#allocation6], %s596
        %s598 = sand.u32 %s108, 1
        %s599 = smul.addr %s598, 384
        %s600 = scalar_lea.vmem [#allocation5], %s599
        // Predicated region
        $region77: #{tpu_custom_call.1} parent=71 // pred_check
          %p601 = pneg %p121
        $region78: #{tpu_custom_call.1} parent=71 // pred_check_branch
          %603 = sbr.rel (%p601) target = $region80
        $region79: #{tpu_custom_call.1} parent=71 // pred_region
          %604 = dma.done %s597, 6144
        $region80: #{tpu_custom_call.1} parent=71 // pred_fallthru
          _
        %s605 = sand.u32 %s36, 1
        %s606 = scalar_lea.sflag [#allocation6], %s605
        %s607 = sand.u32 %s134, 1
        %s608 = smul.addr %s607, 128
        %s609 = scalar_lea.vmem [#allocation7], %s608
        // Predicated region
        $region81: #{tpu_custom_call.1} parent=71 // pred_check
          %p610 = pneg %p147
        $region82: #{tpu_custom_call.1} parent=71 // pred_check_branch
          %612 = sbr.rel (%p610) target = $region84
        $region83: #{tpu_custom_call.1} parent=71 // pred_region
          %613 = dma.done %s606, 2048
        $region84: #{tpu_custom_call.1} parent=71 // pred_fallthru
          _
        %s614 = sand.u32 %s36, 1
        %s615 = scalar_lea.sflag [#allocation9], %s614
        %s616 = sand.u32 %s238, 1
        %s617 = smul.addr %s616, 256
        %s618 = scalar_lea.vmem [#allocation8], %s617
        // Predicated region
        $region85: #{tpu_custom_call.1} parent=71 // pred_check
          %p619 = pneg %p251
        $region86: #{tpu_custom_call.1} parent=71 // pred_check_branch
          %621 = sbr.rel (%p619) target = $region88
        $region87: #{tpu_custom_call.1} parent=71 // pred_region
          %622 = dma.done %s615, 4096
        $region88: #{tpu_custom_call.1} parent=71 // pred_fallthru
          _
        %s623 = sand.u32 %s36, 1
        %s624 = scalar_lea.sflag [#allocation9], %s623
        %s625 = sand.u32 %s290, 1
        %s626 = smul.addr %s625, 256
        %s627 = scalar_lea.vmem [#allocation10], %s626
        // Predicated region
        $region89: #{tpu_custom_call.1} parent=71 // pred_check
          %p628 = pneg %p303
        $region90: #{tpu_custom_call.1} parent=71 // pred_check_branch
          %630 = sbr.rel (%p628) target = $region92
        $region91: #{tpu_custom_call.1} parent=71 // pred_region
          %631 = dma.done %s624, 4096
        $region92: #{tpu_custom_call.1} parent=71 // pred_fallthru
          _
        %s632 = sand.u32 %s56, 1
        %s633 = scalar_lea.sflag [#allocation3], %s632
        %s634 = sand.u32 %s56, 1
        %s635 = smul.addr %s634, 32
        %s636 = scalar_lea.vmem [#allocation2], %s635
        %p637 = pneg %p69
        %p638 = pneg %p66
        %p639 = scmp.lt.s32.totalorder %s40, 1
        %s640 = scalar_select %p639, %s40, 1
        %s641 = scalar_lea.vmem %s1, %s640
        %p642 = pneg %p95
        %p643 = pneg %p92
        %s644 = sand.u32 %s36, 1
        %s645 = scalar_lea.sflag [#allocation6], %s644
        %s646 = sand.u32 %s108, 1
        %s647 = smul.addr %s646, 384
        %s648 = scalar_lea.vmem [#allocation5], %s647
        %p649 = pneg %p121
        %p650 = pneg %p118
        %s651 = sand.u32 %s36, 1
        %s652 = scalar_lea.sflag [#allocation6], %s651
        %s653 = sand.u32 %s134, 1
        %s654 = smul.addr %s653, 128
        %s655 = scalar_lea.vmem [#allocation7], %s654
        %p656 = pneg %p147
        %p657 = pneg %p144
        %p658 = scmp.lt.s32.totalorder %s41, 1
        %s659 = scalar_select %p658, %s41, 1
        %s660 = scalar_lea.vmem %s4, %s659
        %p661 = pneg %p173
        %p662 = pneg %p170
        %p663 = scmp.lt.s32.totalorder %s41, 1
        %s664 = scalar_select %p663, %s41, 1
        %s665 = scalar_lea.vmem %s5, %s664
        %p666 = pneg %p199
        %p667 = pneg %p196
        %p668 = scmp.lt.s32.totalorder %s41, 1
        %s669 = scalar_select %p668, %s41, 1
        %s670 = scalar_lea.vmem %s6, %s669
        %p671 = pneg %p225
        %p672 = pneg %p222
        %s673 = sand.u32 %s36, 1
        %s674 = scalar_lea.sflag [#allocation9], %s673
        %s675 = sand.u32 %s238, 1
        %s676 = smul.addr %s675, 256
        %s677 = scalar_lea.vmem [#allocation8], %s676
        %p678 = pneg %p251
        %p679 = pneg %p248
        %p680 = scmp.lt.s32.totalorder %s41, 1
        %s681 = scalar_select %p680, %s41, 1
        %s682 = smul.addr %s681, 2
        %s683 = scalar_lea.vmem %s8, %s682
        %p684 = pneg %p277
        %p685 = pneg %p274
        %s686 = sand.u32 %s36, 1
        %s687 = scalar_lea.sflag [#allocation9], %s686
        %s688 = sand.u32 %s290, 1
        %s689 = smul.addr %s688, 256
        %s690 = scalar_lea.vmem [#allocation10], %s689
        %p691 = pneg %p303
        %p692 = pneg %p300
        %p693 = scmp.lt.s32.totalorder %s41, 1
        %s694 = scalar_select %p693, %s41, 1
        %s695 = scalar_lea.vmem %s10, %s694
        %p696 = pneg %p329
        %p697 = pneg %p326
        %p698 = scmp.lt.s32.totalorder %s41, 1
        %s699 = scalar_select %p698, %s41, 1
        %s700 = scalar_lea.vmem %s11, %s699
        %p701 = pneg %p355
        %p702 = pneg %p352
        %p703 = scmp.lt.s32.totalorder %s41, 1
        %s704 = scalar_select %p703, %s41, 1
        %s705 = scalar_lea.vmem %s12, %s704
        %p706 = pneg %p381
        %p707 = pneg %p378
        %p708 = pneg %p407
        %p709 = pneg %p404
        %s710 = sand.u32 %s394, 1
        %s711 = scalar_lea.sflag [#allocation4], %s710
        %s712 = sand.u32 %s394, 1
        %s713 = smul.addr %s712, 32
        %s714 = scalar_lea.vmem [#allocation11], %s713
        %p715 = scmp.lt.s32.totalorder %s40, 1
        %s716 = scalar_select %p715, %s40, 1
        %s717 = scalar_lea.vmem %s1, %s716
        %p718 = scmp.lt.s32.totalorder %s41, 1
        %s719 = scalar_select %p718, %s41, 1
        %s720 = scalar_lea.vmem %s4, %s719
        %p721 = scmp.lt.s32.totalorder %s41, 1
        %s722 = scalar_select %p721, %s41, 1
        %s723 = scalar_lea.vmem %s5, %s722
        %p724 = scmp.lt.s32.totalorder %s41, 1
        %s725 = scalar_select %p724, %s41, 1
        %s726 = scalar_lea.vmem %s6, %s725
        %p727 = scmp.lt.s32.totalorder %s41, 1
        %s728 = scalar_select %p727, %s41, 1
        %s729 = smul.addr %s728, 2
        %s730 = scalar_lea.vmem %s8, %s729
        %p731 = scmp.lt.s32.totalorder %s41, 1
        %s732 = scalar_select %p731, %s41, 1
        %s733 = scalar_lea.vmem %s10, %s732
        %p734 = scmp.lt.s32.totalorder %s41, 1
        %s735 = scalar_select %p734, %s41, 1
        %s736 = scalar_lea.vmem %s11, %s735
        %p737 = scmp.lt.s32.totalorder %s41, 1
        %s738 = scalar_select %p737, %s41, 1
        %s739 = scalar_lea.vmem %s12, %s738
        %p740 = scmp.eq.s32.totalorder %s41, 0
        // Predicated region
        $region93: #{tpu_custom_call.1} parent=71 // pred_check
          %p741 = pneg %p740
        $region94: #{tpu_custom_call.1} parent=71 // pred_check_branch
          %743 = sbr.rel (%p741) target = $region96
        $region95: #{tpu_custom_call.1} parent=71 // pred_region
          %v744 = vld [vmem:[%s591] sm:$0xff]
          %v745 = vld [vmem:[%s591 + $0x8] sm:$0xff]
          %v746 = vld [vmem:[%s591 + $0x10] sm:$0xff]
          %v747 = vld [vmem:[%s591 + $0x18] sm:$0xff]
          %748 = vst [vmem:[%s714] sm:$0xff] %v744
          %749 = vst [vmem:[%s714 + $0x8] sm:$0xff] %v745
          %750 = vst [vmem:[%s714 + $0x10] sm:$0xff] %v746
          %751 = vst [vmem:[%s714 + $0x18] sm:$0xff] %v747
        $region96: #{tpu_custom_call.1} parent=71 // pred_fallthru
          _
        %v752 = vld [vmem:[%s714] sm:$0xff]
        %v753 = vld [vmem:[%s714 + $0x8] sm:$0xff]
        %v754 = vld [vmem:[%s714 + $0x10] sm:$0xff]
        %v755 = vld [vmem:[%s714 + $0x18] sm:$0xff]
        %v756 = vld [vmem:[%s600] sm:$0xff]
        %v757 = vld [vmem:[%s600 + $0x8] sm:$0xff]
        %v758 = vld [vmem:[%s600 + $0x10] sm:$0xff]
        %v759 = vld [vmem:[%s600 + $0x18] sm:$0xff]
        %v760 = vld [vmem:[%s600 + $0x20] sm:$0xff]
        %v761 = vld [vmem:[%s600 + $0x28] sm:$0xff]
        %v762 = vld [vmem:[%s600 + $0x30] sm:$0xff]
        %v763 = vld [vmem:[%s600 + $0x38] sm:$0xff]
        %v764 = vld [vmem:[%s600 + $0x40] sm:$0xff]
        %v765 = vld [vmem:[%s600 + $0x48] sm:$0xff]
        %v766 = vld [vmem:[%s600 + $0x50] sm:$0xff]
        %v767 = vld [vmem:[%s600 + $0x58] sm:$0xff]
        %v768 = vld [vmem:[%s600 + $0x60] sm:$0xff]
        %v769 = vld [vmem:[%s600 + $0x68] sm:$0xff]
        %v770 = vld [vmem:[%s600 + $0x70] sm:$0xff]
        %v771 = vld [vmem:[%s600 + $0x78] sm:$0xff]
        %v772 = vld [vmem:[%s600 + $0x80] sm:$0xff]
        %v773 = vld [vmem:[%s600 + $0x88] sm:$0xff]
        %v774 = vld [vmem:[%s600 + $0x90] sm:$0xff]
        %v775 = vld [vmem:[%s600 + $0x98] sm:$0xff]
        %v776 = vld [vmem:[%s600 + $0xa0] sm:$0xff]
        %v777 = vld [vmem:[%s600 + $0xa8] sm:$0xff]
        %v778 = vld [vmem:[%s600 + $0xb0] sm:$0xff]
        %v779 = vld [vmem:[%s600 + $0xb8] sm:$0xff]
        %v780 = vld [vmem:[%s600 + $0xc0] sm:$0xff]
        %v781 = vld [vmem:[%s600 + $0xc8] sm:$0xff]
        %v782 = vld [vmem:[%s600 + $0xd0] sm:$0xff]
        %v783 = vld [vmem:[%s600 + $0xd8] sm:$0xff]
        %v784 = vld [vmem:[%s600 + $0xe0] sm:$0xff]
        %v785 = vld [vmem:[%s600 + $0xe8] sm:$0xff]
        %v786 = vld [vmem:[%s600 + $0xf0] sm:$0xff]
        %v787 = vld [vmem:[%s600 + $0xf8] sm:$0xff]
        %v788 = vld [vmem:[%s600 + $0x100] sm:$0xff]
        %v789 = vld [vmem:[%s600 + $0x108] sm:$0xff]
        %v790 = vld [vmem:[%s600 + $0x110] sm:$0xff]
        %v791 = vld [vmem:[%s600 + $0x118] sm:$0xff]
        %v792 = vld [vmem:[%s600 + $0x120] sm:$0xff]
        %v793 = vld [vmem:[%s600 + $0x128] sm:$0xff]
        %v794 = vld [vmem:[%s600 + $0x130] sm:$0xff]
        %v795 = vld [vmem:[%s600 + $0x138] sm:$0xff]
        %v796 = vld [vmem:[%s600 + $0x140] sm:$0xff]
        %v797 = vld [vmem:[%s600 + $0x148] sm:$0xff]
        %v798 = vld [vmem:[%s600 + $0x150] sm:$0xff]
        %v799 = vld [vmem:[%s600 + $0x158] sm:$0xff]
        %v800 = vld [vmem:[%s600 + $0x160] sm:$0xff]
        %v801 = vld [vmem:[%s600 + $0x168] sm:$0xff]
        %v802 = vld [vmem:[%s600 + $0x170] sm:$0xff]
        %v803 = vld [vmem:[%s600 + $0x178] sm:$0xff]
        %804 = vmatprep.subr.mxu0 %v757
        %805 = vmatpush1.msra.mxu0 %v756
        %806 = vmatprep.subr.mxu0 %v760
        %807 = vmatpush1.msra.mxu0 %v759
        %808 = vmatprep.subr.mxu0 %v763
        %809 = vmatpush1.msra.mxu0 %v762
        %810 = vmatprep.subr.mxu0 %v766
        %811 = vmatpush1.msra.mxu0 %v765
        %812 = vmatprep.subr.mxu0 %v769
        %813 = vmatpush1.msra.mxu0 %v768
        %814 = vmatprep.subr.mxu0 %v772
        %815 = vmatpush1.msra.mxu0 %v771
        %816 = vmatprep.subr.mxu0 %v775
        %817 = vmatpush1.msra.mxu0 %v774
        %818 = vmatprep.subr.mxu0 %v778
        %819 = vmatpush1.msra.mxu0 %v777
        %820 = vmatprep.subr.mxu0 %v781
        %821 = vmatpush1.msra.mxu0 %v780
        %822 = vmatprep.subr.mxu0 %v784
        %823 = vmatpush1.msra.mxu0 %v783
        %824 = vmatprep.subr.mxu0 %v787
        %825 = vmatpush1.msra.mxu0 %v786
        %826 = vmatprep.subr.mxu0 %v790
        %827 = vmatpush1.msra.mxu0 %v789
        %828 = vmatprep.subr.mxu0 %v793
        %829 = vmatpush1.msra.mxu0 %v792
        %830 = vmatprep.subr.mxu0 %v796
        %831 = vmatpush1.msra.mxu0 %v795
        %832 = vmatprep.subr.mxu0 %v799
        %833 = vmatpush1.msra.mxu0 %v798
        %834 = vmatprep.subr.mxu0 %v802
        %835 = vmatpush1.msra.mxu0 %v801
        %836 = vmatprep.subr.mxu0 0.0
        %837 = vmatpush1.msra.mxu0 0.0
        %838 = vmatprep.subr.mxu0 0.0
        %839 = vmatpush1.msra.mxu0 0.0
        %840 = vmatprep.subr.mxu0 0.0
        %841 = vmatpush1.msra.mxu0 0.0
        %842 = vmatprep.subr.mxu0 0.0
        %843 = vmatpush1.msra.mxu0 0.0
        %844 = vmatprep.subr.mxu0 0.0
        %845 = vmatpush1.msra.mxu0 0.0
        %846 = vmatprep.subr.mxu0 0.0
        %847 = vmatpush1.msra.mxu0 0.0
        %848 = vmatprep.subr.mxu0 0.0
        %849 = vmatpush1.msra.mxu0 0.0
        %850 = vmatprep.subr.mxu0 0.0
        %851 = vmatpush1.msra.mxu0 0.0
        %852 = vmatprep.subr.mxu0 0.0
        %853 = vmatpush1.msra.mxu0 0.0
        %854 = vmatprep.subr.mxu0 0.0
        %855 = vmatpush1.msra.mxu0 0.0
        %856 = vmatprep.subr.mxu0 0.0
        %857 = vmatpush1.msra.mxu0 0.0
        %858 = vmatprep.subr.mxu0 0.0
        %859 = vmatpush1.msra.mxu0 0.0
        %860 = vmatprep.subr.mxu0 0.0
        %861 = vmatpush1.msra.mxu0 0.0
        %862 = vmatprep.subr.mxu0 0.0
        %863 = vmatpush1.msra.mxu0 0.0
        %864 = vmatprep.subr.mxu0 0.0
        %865 = vmatpush1.msra.mxu0 0.0
        %866 = vmatprep.subr.mxu0 0.0
        %867 = vmatpush1.msra.mxu0 0.0
        %868 = vmatprep.mubr.f32.mxu0 0.0
        %869 = vmatmul.mubr.f32.gmra.mrb[0].mxu0 %v752
        %v870 = vpop.f32.mrb[0].mxu0
        %v871 = vadd.f32 0.0, %v870
        %v872 = vpop.f32.mrb[0].mxu0
        %v873 = vadd.f32 0.0, %v872
        %874 = vmatprep.mubr.f32.mxu0 0.0
        %875 = vmatmul.mubr.f32.gmra.mrb[0].mxu0 %v753
        %v876 = vpop.f32.mrb[0].mxu0
        %v877 = vadd.f32 0.0, %v876
        %v878 = vpop.f32.mrb[0].mxu0
        %v879 = vadd.f32 0.0, %v878
        %880 = vmatprep.mubr.f32.mxu0 0.0
        %881 = vmatmul.mubr.f32.gmra.mrb[0].mxu0 %v754
        %v882 = vpop.f32.mrb[0].mxu0
        %v883 = vadd.f32 0.0, %v882
        %v884 = vpop.f32.mrb[0].mxu0
        %v885 = vadd.f32 0.0, %v884
        %886 = vmatprep.mubr.f32.mxu0 0.0
        %887 = vmatmul.mubr.f32.gmra.mrb[0].mxu0 %v755
        %v888 = vpop.f32.mrb[0].mxu0
        %v889 = vadd.f32 0.0, %v888
        %v890 = vpop.f32.mrb[0].mxu0
        %v891 = vadd.f32 0.0, %v890
        %892 = vdwg.mxu0
        %893 = vmatprep.subr.mxu0 0.0
        %894 = vmatpush1.msra.mxu0 %v758
        %895 = vmatprep.subr.mxu0 0.0
        %896 = vmatpush1.msra.mxu0 %v761
        %897 = vmatprep.subr.mxu0 0.0
        %898 = vmatpush1.msra.mxu0 %v764
        %899 = vmatprep.subr.mxu0 0.0
        %900 = vmatpush1.msra.mxu0 %v767
        %901 = vmatprep.subr.mxu0 0.0
        %902 = vmatpush1.msra.mxu0 %v770
        %903 = vmatprep.subr.mxu0 0.0
        %904 = vmatpush1.msra.mxu0 %v773
        %905 = vmatprep.subr.mxu0 0.0
        %906 = vmatpush1.msra.mxu0 %v776
        %907 = vmatprep.subr.mxu0 0.0
        %908 = vmatpush1.msra.mxu0 %v779
        %909 = vmatprep.subr.mxu0 0.0
        %910 = vmatpush1.msra.mxu0 %v782
        %911 = vmatprep.subr.mxu0 0.0
        %912 = vmatpush1.msra.mxu0 %v785
        %913 = vmatprep.subr.mxu0 0.0
        %914 = vmatpush1.msra.mxu0 %v788
        %915 = vmatprep.subr.mxu0 0.0
        %916 = vmatpush1.msra.mxu0 %v791
        %917 = vmatprep.subr.mxu0 0.0
        %918 = vmatpush1.msra.mxu0 %v794
        %919 = vmatprep.subr.mxu0 0.0
        %920 = vmatpush1.msra.mxu0 %v797
        %921 = vmatprep.subr.mxu0 0.0
        %922 = vmatpush1.msra.mxu0 %v800
        %923 = vmatprep.subr.mxu0 0.0
        %924 = vmatpush1.msra.mxu0 %v803
        %925 = vmatprep.subr.mxu0 0.0
        %926 = vmatpush1.msra.mxu0 0.0
        %927 = vmatprep.subr.mxu0 0.0
        %928 = vmatpush1.msra.mxu0 0.0
        %929 = vmatprep.subr.mxu0 0.0
        %930 = vmatpush1.msra.mxu0 0.0
        %931 = vmatprep.subr.mxu0 0.0
        %932 = vmatpush1.msra.mxu0 0.0
        %933 = vmatprep.subr.mxu0 0.0
        %934 = vmatpush1.msra.mxu0 0.0
        %935 = vmatprep.subr.mxu0 0.0
        %936 = vmatpush1.msra.mxu0 0.0
        %937 = vmatprep.subr.mxu0 0.0
        %938 = vmatpush1.msra.mxu0 0.0
        %939 = vmatprep.subr.mxu0 0.0
        %940 = vmatpush1.msra.mxu0 0.0
        %941 = vmatprep.subr.mxu0 0.0
        %942 = vmatpush1.msra.mxu0 0.0
        %943 = vmatprep.subr.mxu0 0.0
        %944 = vmatpush1.msra.mxu0 0.0
        %945 = vmatprep.subr.mxu0 0.0
        %946 = vmatpush1.msra.mxu0 0.0
        %947 = vmatprep.subr.mxu0 0.0
        %948 = vmatpush1.msra.mxu0 0.0
        %949 = vmatprep.subr.mxu0 0.0
        %950 = vmatpush1.msra.mxu0 0.0
        %951 = vmatprep.subr.mxu0 0.0
        %952 = vmatpush1.msra.mxu0 0.0
        %953 = vmatprep.subr.mxu0 0.0
        %954 = vmatpush1.msra.mxu0 0.0
        %955 = vmatprep.subr.mxu0 0.0
        %956 = vmatpush1.msra.mxu0 0.0
        %957 = vmatprep.mubr.f32.mxu0 0.0
        %958 = vmatmul.mubr.f32.gmra.mrb[0].mxu0 %v752
        %v959 = vpop.f32.mrb[0].mxu0
        %v960 = vadd.f32 0.0, %v959
        %v961 = vpop.f32.mrb[0].mxu0
        %962 = vmatprep.mubr.f32.mxu0 0.0
        %963 = vmatmul.mubr.f32.gmra.mrb[0].mxu0 %v753
        %v964 = vpop.f32.mrb[0].mxu0
        %v965 = vadd.f32 0.0, %v964
        %v966 = vpop.f32.mrb[0].mxu0
        %967 = vmatprep.mubr.f32.mxu0 0.0
        %968 = vmatmul.mubr.f32.gmra.mrb[0].mxu0 %v754
        %v969 = vpop.f32.mrb[0].mxu0
        %v970 = vadd.f32 0.0, %v969
        %v971 = vpop.f32.mrb[0].mxu0
        %972 = vmatprep.mubr.f32.mxu0 0.0
        %973 = vmatmul.mubr.f32.gmra.mrb[0].mxu0 %v755
        %v974 = vpop.f32.mrb[0].mxu0
        %v975 = vadd.f32 0.0, %v974
        %v976 = vpop.f32.mrb[0].mxu0
        %977 = vdwg.mxu0
        %v978 = vld [vmem:[%s609] sm:$0xff]
        %v979 = vld [vmem:[%s609 + $0x8] sm:$0xff]
        %v980 = vld [vmem:[%s609 + $0x10] sm:$0xff]
        %v981 = vld [vmem:[%s609 + $0x18] sm:$0xff]
        %v982 = vld [vmem:[%s609 + $0x20] sm:$0xff]
        %v983 = vld [vmem:[%s609 + $0x28] sm:$0xff]
        %v984 = vld [vmem:[%s609 + $0x30] sm:$0xff]
        %v985 = vld [vmem:[%s609 + $0x38] sm:$0xff]
        %v986 = vld [vmem:[%s609 + $0x40] sm:$0xff]
        %v987 = vld [vmem:[%s609 + $0x48] sm:$0xff]
        %v988 = vld [vmem:[%s609 + $0x50] sm:$0xff]
        %v989 = vld [vmem:[%s609 + $0x58] sm:$0xff]
        %v990 = vld [vmem:[%s609 + $0x60] sm:$0xff]
        %v991 = vld [vmem:[%s609 + $0x68] sm:$0xff]
        %v992 = vld [vmem:[%s609 + $0x70] sm:$0xff]
        %v993 = vld [vmem:[%s609 + $0x78] sm:$0xff]
        %v994 = vld [vmem:[%s717] sm:$0x1]
        %v996 = vlaneseq
        %v997 = vshrl.u32 %v996, 7
        %v998 = vsub.s32 0, %v997
        %v999 = vrot.slane %v994, %v998
        %vm1001 = vcmask 261120
        %v1003 = vsel %vm1001, %v871, 0
        %v1006 = vsel %vm1001, %v877, 0
        %v1009 = vsel %vm1001, %v883, 0
        %v1012 = vsel %vm1001, %v889, 0
        %v1015 = vsel %vm1001, %v873, 0
        %v1018 = vsel %vm1001, %v879, 0
        %v1021 = vsel %vm1001, %v885, 0
        %v1024 = vsel %vm1001, %v891, 0
        %1026 = vmatprep.subr.mxu0 0.0
        %1027 = vmatpush1.xpose.msra.mxu0 %v1015
        %1028 = vmatprep.subr.mxu0 0.0
        %1029 = vmatpush1.xpose.msra.mxu0 %v1018
        %1030 = vmatprep.subr.mxu0 0.0
        %1031 = vmatpush1.xpose.msra.mxu0 %v1021
        %1032 = vmatprep.subr.mxu0 0.0
        %1033 = vmatpush1.xpose.msra.mxu0 %v1024
        %1034 = vmatprep.subr.mxu0 0.0
        %1035 = vmatpush1.xpose.msra.mxu0 0.0
        %1036 = vmatprep.subr.mxu0 0.0
        %1037 = vmatpush1.xpose.msra.mxu0 0.0
        %1038 = vmatprep.subr.mxu0 0.0
        %1039 = vmatpush1.xpose.msra.mxu0 0.0
        %1040 = vmatprep.subr.mxu0 0.0
        %1041 = vmatpush1.xpose.msra.mxu0 0.0
        %1042 = vmatprep.subr.mxu0 0.0
        %1043 = vmatpush1.xpose.msra.mxu0 0.0
        %1044 = vmatprep.subr.mxu0 0.0
        %1045 = vmatpush1.xpose.msra.mxu0 0.0
        %1046 = vmatprep.subr.mxu0 0.0
        %1047 = vmatpush1.xpose.msra.mxu0 0.0
        %1048 = vmatprep.subr.mxu0 0.0
        %1049 = vmatpush1.xpose.msra.mxu0 0.0
        %1050 = vmatprep.subr.mxu0 0.0
        %1051 = vmatpush1.xpose.msra.mxu0 0.0
        %1052 = vmatprep.subr.mxu0 0.0
        %1053 = vmatpush1.xpose.msra.mxu0 0.0
        %1054 = vmatprep.subr.mxu0 0.0
        %1055 = vmatpush1.xpose.msra.mxu0 0.0
        %1056 = vmatprep.subr.mxu0 0.0
        %1057 = vmatpush1.xpose.msra.mxu0 0.0
        %1058 = vmatprep.subr.mxu0 0.0
        %1059 = vmatpush1.xpose.msra.mxu0 0.0
        %1060 = vmatprep.subr.mxu0 0.0
        %1061 = vmatpush1.xpose.msra.mxu0 0.0
        %1062 = vmatprep.subr.mxu0 0.0
        %1063 = vmatpush1.xpose.msra.mxu0 0.0
        %1064 = vmatprep.subr.mxu0 0.0
        %1065 = vmatpush1.xpose.msra.mxu0 0.0
        %1066 = vmatprep.subr.mxu0 0.0
        %1067 = vmatpush1.xpose.msra.mxu0 0.0
        %1068 = vmatprep.subr.mxu0 0.0
        %1069 = vmatpush1.xpose.msra.mxu0 0.0
        %1070 = vmatprep.subr.mxu0 0.0
        %1071 = vmatpush1.xpose.msra.mxu0 0.0
        %1072 = vmatprep.subr.mxu0 0.0
        %1073 = vmatpush1.xpose.msra.mxu0 0.0
        %1074 = vmatprep.subr.mxu0 0.0
        %1075 = vmatpush1.xpose.msra.mxu0 0.0
        %1076 = vmatprep.subr.mxu0 0.0
        %1077 = vmatpush1.xpose.msra.mxu0 0.0
        %1078 = vmatprep.subr.mxu0 0.0
        %1079 = vmatpush1.xpose.msra.mxu0 0.0
        %1080 = vmatprep.subr.mxu0 0.0
        %1081 = vmatpush1.xpose.msra.mxu0 0.0
        %1082 = vmatprep.subr.mxu0 0.0
        %1083 = vmatpush1.xpose.msra.mxu0 0.0
        %1084 = vmatprep.subr.mxu0 0.0
        %1085 = vmatpush1.xpose.msra.mxu0 0.0
        %1086 = vmatprep.subr.mxu0 0.0
        %1087 = vmatpush1.xpose.msra.mxu0 0.0
        %1088 = vmatprep.subr.mxu0 0.0
        %1089 = vmatpush1.xpose.msra.mxu0 0.0
        %1090 = vmatprep.mubr.f32.mxu0 0.0
        %1091 = vmatmul.mubr.f32.gmra.mrb[0].mxu0 %v1003
        %v1092 = vpop.f32.mrb[0].mxu0
        %v1093 = vadd.f32 %v999, %v1092
        %v1094 = vpop.f32.mrb[0].mxu0
        %1095 = vmatprep.mubr.f32.mxu0 0.0
        %1096 = vmatmul.mubr.f32.gmra.mrb[0].mxu0 %v1006
        %v1097 = vpop.f32.mrb[0].mxu0
        %v1098 = vadd.f32 %v999, %v1097
        %v1099 = vpop.f32.mrb[0].mxu0
        %1100 = vmatprep.mubr.f32.mxu0 0.0
        %1101 = vmatmul.mubr.f32.gmra.mrb[0].mxu0 %v1009
        %v1102 = vpop.f32.mrb[0].mxu0
        %v1103 = vadd.f32 %v999, %v1102
        %v1104 = vpop.f32.mrb[0].mxu0
        %1105 = vmatprep.mubr.f32.mxu0 0.0
        %1106 = vmatmul.mubr.f32.gmra.mrb[0].mxu0 %v1012
        %v1107 = vpop.f32.mrb[0].mxu0
        %v1108 = vadd.f32 %v999, %v1107
        %v1109 = vpop.f32.mrb[0].mxu0
        %1110 = vdwg.mxu0
        %v1111 = vsel %vm1001, %v1093, -inf
        %1112 = vmax.xlane.f32.xlu0 %v1111
        %v1113 = vpop.xlane.xlu0 %1112
        %v1114 = vsel %vm1001, %v1098, -inf
        %1115 = vmax.xlane.f32.xlu0 %v1114
        %v1116 = vpop.xlane.xlu0 %1115
        %v1117 = vsel %vm1001, %v1103, -inf
        %1118 = vmax.xlane.f32.xlu0 %v1117
        %v1119 = vpop.xlane.xlu0 %1118
        %v1120 = vsel %vm1001, %v1108, -inf
        %1121 = vmax.xlane.f32.xlu0 %v1120
        %v1122 = vpop.xlane.xlu0 %1121
        %v1123 = vsub.f32 %v1093, %v1113
        %v1124 = vsub.f32 %v1098, %v1116
        %v1125 = vsub.f32 %v1103, %v1119
        %v1126 = vsub.f32 %v1108, %v1122
        %v1127 = vmul.f32 %v1123, 1.442695
        %v1128 = vpow.pop %v1127
        %v1129 = vmul.f32 %v1124, 1.442695
        %v1130 = vpow.pop %v1129
        %v1131 = vmul.f32 %v1125, 1.442695
        %v1132 = vpow.pop %v1131
        %v1133 = vmul.f32 %v1126, 1.442695
        %v1134 = vpow.pop %v1133
        %v1135 = vsel %vm1001, %v1128, 0.0
        %1136 = vadd.xlane.f32.xlu0 %v1135
        %v1137 = vpop.xlane.xlu0 %1136
        %v1138 = vsel %vm1001, %v1130, 0.0
        %1139 = vadd.xlane.f32.xlu0 %v1138
        %v1140 = vpop.xlane.xlu0 %1139
        %v1141 = vsel %vm1001, %v1132, 0.0
        %1142 = vadd.xlane.f32.xlu0 %v1141
        %v1143 = vpop.xlane.xlu0 %1142
        %v1144 = vsel %vm1001, %v1134, 0.0
        %1145 = vadd.xlane.f32.xlu0 %v1144
        %v1146 = vpop.xlane.xlu0 %1145
        %v1147 = vrcp.pop %v1137
        %v1148 = vrcp.pop %v1140
        %v1149 = vrcp.pop %v1143
        %v1150 = vrcp.pop %v1146
        %v1151 = vmul.f32 %v1128, %v1147
        %v1152 = vmul.f32 %v1130, %v1148
        %v1153 = vmul.f32 %v1132, %v1149
        %v1154 = vmul.f32 %v1134, %v1150
        %v1156 = vsel %vm1001, %v1151, 0
        %v1159 = vsel %vm1001, %v1152, 0
        %v1162 = vsel %vm1001, %v1153, 0
        %v1165 = vsel %vm1001, %v1154, 0
        %1167 = vmatprep.subr.mxu0 0.0
        %1168 = vmatpush1.msra.mxu0 %v960
        %1169 = vmatprep.subr.mxu0 0.0
        %1170 = vmatpush1.msra.mxu0 %v965
        %1171 = vmatprep.subr.mxu0 0.0
        %1172 = vmatpush1.msra.mxu0 %v970
        %1173 = vmatprep.subr.mxu0 0.0
        %1174 = vmatpush1.msra.mxu0 %v975
        %1175 = vmatprep.subr.mxu0 0.0
        %1176 = vmatpush1.msra.mxu0 0.0
        %1177 = vmatprep.subr.mxu0 0.0
        %1178 = vmatpush1.msra.mxu0 0.0
        %1179 = vmatprep.subr.mxu0 0.0
        %1180 = vmatpush1.msra.mxu0 0.0
        %1181 = vmatprep.subr.mxu0 0.0
        %1182 = vmatpush1.msra.mxu0 0.0
        %1183 = vmatprep.subr.mxu0 0.0
        %1184 = vmatpush1.msra.mxu0 0.0
        %1185 = vmatprep.subr.mxu0 0.0
        %1186 = vmatpush1.msra.mxu0 0.0
        %1187 = vmatprep.subr.mxu0 0.0
        %1188 = vmatpush1.msra.mxu0 0.0
        %1189 = vmatprep.subr.mxu0 0.0
        %1190 = vmatpush1.msra.mxu0 0.0
        %1191 = vmatprep.subr.mxu0 0.0
        %1192 = vmatpush1.msra.mxu0 0.0
        %1193 = vmatprep.subr.mxu0 0.0
        %1194 = vmatpush1.msra.mxu0 0.0
        %1195 = vmatprep.subr.mxu0 0.0
        %1196 = vmatpush1.msra.mxu0 0.0
        %1197 = vmatprep.subr.mxu0 0.0
        %1198 = vmatpush1.msra.mxu0 0.0
        %1199 = vmatprep.subr.mxu0 0.0
        %1200 = vmatpush1.msra.mxu0 0.0
        %1201 = vmatprep.subr.mxu0 0.0
        %1202 = vmatpush1.msra.mxu0 0.0
        %1203 = vmatprep.subr.mxu0 0.0
        %1204 = vmatpush1.msra.mxu0 0.0
        %1205 = vmatprep.subr.mxu0 0.0
        %1206 = vmatpush1.msra.mxu0 0.0
        %1207 = vmatprep.subr.mxu0 0.0
        %1208 = vmatpush1.msra.mxu0 0.0
        %1209 = vmatprep.subr.mxu0 0.0
        %1210 = vmatpush1.msra.mxu0 0.0
        %1211 = vmatprep.subr.mxu0 0.0
        %1212 = vmatpush1.msra.mxu0 0.0
        %1213 = vmatprep.subr.mxu0 0.0
        %1214 = vmatpush1.msra.mxu0 0.0
        %1215 = vmatprep.subr.mxu0 0.0
        %1216 = vmatpush1.msra.mxu0 0.0
        %1217 = vmatprep.subr.mxu0 0.0
        %1218 = vmatpush1.msra.mxu0 0.0
        %1219 = vmatprep.subr.mxu0 0.0
        %1220 = vmatpush1.msra.mxu0 0.0
        %1221 = vmatprep.subr.mxu0 0.0
        %1222 = vmatpush1.msra.mxu0 0.0
        %1223 = vmatprep.subr.mxu0 0.0
        %1224 = vmatpush1.msra.mxu0 0.0
        %1225 = vmatprep.subr.mxu0 0.0
        %1226 = vmatpush1.msra.mxu0 0.0
        %1227 = vmatprep.subr.mxu0 0.0
        %1228 = vmatpush1.msra.mxu0 0.0
        %1229 = vmatprep.subr.mxu0 0.0
        %1230 = vmatpush1.msra.mxu0 0.0
        %1231 = vmatprep.mubr.f32.mxu0 0.0
        %1232 = vmatmul.mubr.f32.gmra.mrb[0].mxu0 %v1156
        %v1233 = vpop.f32.mrb[0].mxu0
        %v1234 = vadd.f32 0.0, %v1233
        %v1235 = vpop.f32.mrb[0].mxu0
        %1236 = vmatprep.mubr.f32.mxu0 0.0
        %1237 = vmatmul.mubr.f32.gmra.mrb[0].mxu0 %v1159
        %v1238 = vpop.f32.mrb[0].mxu0
        %v1239 = vadd.f32 0.0, %v1238
        %v1240 = vpop.f32.mrb[0].mxu0
        %1241 = vmatprep.mubr.f32.mxu0 0.0
        %1242 = vmatmul.mubr.f32.gmra.mrb[0].mxu0 %v1162
        %v1243 = vpop.f32.mrb[0].mxu0
        %v1244 = vadd.f32 0.0, %v1243
        %v1245 = vpop.f32.mrb[0].mxu0
        %1246 = vmatprep.mubr.f32.mxu0 0.0
        %1247 = vmatmul.mubr.f32.gmra.mrb[0].mxu0 %v1165
        %v1248 = vpop.f32.mrb[0].mxu0
        %v1249 = vadd.f32 0.0, %v1248
        %v1250 = vpop.f32.mrb[0].mxu0
        %1251 = vdwg.mxu0
        %1252 = vrot.lane.b32.xlu0 %v871, 96
        %v1253 = vpop.permute.xlu0 %1252
        %1254 = vrot.lane.b32.xlu0 %v877, 96
        %v1255 = vpop.permute.xlu0 %1254
        %1256 = vrot.lane.b32.xlu0 %v883, 96
        %v1257 = vpop.permute.xlu0 %1256
        %1258 = vrot.lane.b32.xlu0 %v889, 96
        %v1259 = vpop.permute.xlu0 %1258
        %1260 = vrot.lane.b32.xlu0 %v873, 96
        %v1261 = vpop.permute.xlu0 %1260
        %1262 = vrot.lane.b32.xlu0 %v879, 96
        %v1263 = vpop.permute.xlu0 %1262
        %1264 = vrot.lane.b32.xlu0 %v885, 96
        %v1265 = vpop.permute.xlu0 %1264
        %1266 = vrot.lane.b32.xlu0 %v891, 96
        %v1267 = vpop.permute.xlu0 %1266
        %v1268 = vsel %vm1001, %v1253, 0
        %v1270 = vsel %vm1001, %v1255, 0
        %v1272 = vsel %vm1001, %v1257, 0
        %v1274 = vsel %vm1001, %v1259, 0
        %v1276 = vsel %vm1001, %v1261, 0
        %v1278 = vsel %vm1001, %v1263, 0
        %v1280 = vsel %vm1001, %v1265, 0
        %v1282 = vsel %vm1001, %v1267, 0
        %1284 = vmatprep.subr.mxu0 0.0
        %1285 = vmatpush1.xpose.msra.mxu0 %v1276
        %1286 = vmatprep.subr.mxu0 0.0
        %1287 = vmatpush1.xpose.msra.mxu0 %v1278
        %1288 = vmatprep.subr.mxu0 0.0
        %1289 = vmatpush1.xpose.msra.mxu0 %v1280
        %1290 = vmatprep.subr.mxu0 0.0
        %1291 = vmatpush1.xpose.msra.mxu0 %v1282
        %1292 = vmatprep.subr.mxu0 0.0
        %1293 = vmatpush1.xpose.msra.mxu0 0.0
        %1294 = vmatprep.subr.mxu0 0.0
        %1295 = vmatpush1.xpose.msra.mxu0 0.0
        %1296 = vmatprep.subr.mxu0 0.0
        %1297 = vmatpush1.xpose.msra.mxu0 0.0
        %1298 = vmatprep.subr.mxu0 0.0
        %1299 = vmatpush1.xpose.msra.mxu0 0.0
        %1300 = vmatprep.subr.mxu0 0.0
        %1301 = vmatpush1.xpose.msra.mxu0 0.0
        %1302 = vmatprep.subr.mxu0 0.0
        %1303 = vmatpush1.xpose.msra.mxu0 0.0
        %1304 = vmatprep.subr.mxu0 0.0
        %1305 = vmatpush1.xpose.msra.mxu0 0.0
        %1306 = vmatprep.subr.mxu0 0.0
        %1307 = vmatpush1.xpose.msra.mxu0 0.0
        %1308 = vmatprep.subr.mxu0 0.0
        %1309 = vmatpush1.xpose.msra.mxu0 0.0
        %1310 = vmatprep.subr.mxu0 0.0
        %1311 = vmatpush1.xpose.msra.mxu0 0.0
        %1312 = vmatprep.subr.mxu0 0.0
        %1313 = vmatpush1.xpose.msra.mxu0 0.0
        %1314 = vmatprep.subr.mxu0 0.0
        %1315 = vmatpush1.xpose.msra.mxu0 0.0
        %1316 = vmatprep.subr.mxu0 0.0
        %1317 = vmatpush1.xpose.msra.mxu0 0.0
        %1318 = vmatprep.subr.mxu0 0.0
        %1319 = vmatpush1.xpose.msra.mxu0 0.0
        %1320 = vmatprep.subr.mxu0 0.0
        %1321 = vmatpush1.xpose.msra.mxu0 0.0
        %1322 = vmatprep.subr.mxu0 0.0
        %1323 = vmatpush1.xpose.msra.mxu0 0.0
        %1324 = vmatprep.subr.mxu0 0.0
        %1325 = vmatpush1.xpose.msra.mxu0 0.0
        %1326 = vmatprep.subr.mxu0 0.0
        %1327 = vmatpush1.xpose.msra.mxu0 0.0
        %1328 = vmatprep.subr.mxu0 0.0
        %1329 = vmatpush1.xpose.msra.mxu0 0.0
        %1330 = vmatprep.subr.mxu0 0.0
        %1331 = vmatpush1.xpose.msra.mxu0 0.0
        %1332 = vmatprep.subr.mxu0 0.0
        %1333 = vmatpush1.xpose.msra.mxu0 0.0
        %1334 = vmatprep.subr.mxu0 0.0
        %1335 = vmatpush1.xpose.msra.mxu0 0.0
        %1336 = vmatprep.subr.mxu0 0.0
        %1337 = vmatpush1.xpose.msra.mxu0 0.0
        %1338 = vmatprep.subr.mxu0 0.0
        %1339 = vmatpush1.xpose.msra.mxu0 0.0
        %1340 = vmatprep.subr.mxu0 0.0
        %1341 = vmatpush1.xpose.msra.mxu0 0.0
        %1342 = vmatprep.subr.mxu0 0.0
        %1343 = vmatpush1.xpose.msra.mxu0 0.0
        %1344 = vmatprep.subr.mxu0 0.0
        %1345 = vmatpush1.xpose.msra.mxu0 0.0
        %1346 = vmatprep.subr.mxu0 0.0
        %1347 = vmatpush1.xpose.msra.mxu0 0.0
        %1348 = vmatprep.mubr.f32.mxu0 0.0
        %1349 = vmatmul.mubr.f32.gmra.mrb[0].mxu0 %v1268
        %v1350 = vpop.f32.mrb[0].mxu0
        %v1351 = vadd.f32 %v999, %v1350
        %v1352 = vpop.f32.mrb[0].mxu0
        %1353 = vmatprep.mubr.f32.mxu0 0.0
        %1354 = vmatmul.mubr.f32.gmra.mrb[0].mxu0 %v1270
        %v1355 = vpop.f32.mrb[0].mxu0
        %v1356 = vadd.f32 %v999, %v1355
        %v1357 = vpop.f32.mrb[0].mxu0
        %1358 = vmatprep.mubr.f32.mxu0 0.0
        %1359 = vmatmul.mubr.f32.gmra.mrb[0].mxu0 %v1272
        %v1360 = vpop.f32.mrb[0].mxu0
        %v1361 = vadd.f32 %v999, %v1360
        %v1362 = vpop.f32.mrb[0].mxu0
        %1363 = vmatprep.mubr.f32.mxu0 0.0
        %1364 = vmatmul.mubr.f32.gmra.mrb[0].mxu0 %v1274
        %v1365 = vpop.f32.mrb[0].mxu0
        %v1366 = vadd.f32 %v999, %v1365
        %v1367 = vpop.f32.mrb[0].mxu0
        %1368 = vdwg.mxu0
        %v1369 = vsel %vm1001, %v1351, -inf
        %1370 = vmax.xlane.f32.xlu0 %v1369
        %v1371 = vpop.xlane.xlu0 %1370
        %v1372 = vsel %vm1001, %v1356, -inf
        %1373 = vmax.xlane.f32.xlu0 %v1372
        %v1374 = vpop.xlane.xlu0 %1373
        %v1375 = vsel %vm1001, %v1361, -inf
        %1376 = vmax.xlane.f32.xlu0 %v1375
        %v1377 = vpop.xlane.xlu0 %1376
        %v1378 = vsel %vm1001, %v1366, -inf
        %1379 = vmax.xlane.f32.xlu0 %v1378
        %v1380 = vpop.xlane.xlu0 %1379
        %v1381 = vsub.f32 %v1351, %v1371
        %v1382 = vsub.f32 %v1356, %v1374
        %v1383 = vsub.f32 %v1361, %v1377
        %v1384 = vsub.f32 %v1366, %v1380
        %v1385 = vmul.f32 %v1381, 1.442695
        %v1386 = vpow.pop %v1385
        %v1387 = vmul.f32 %v1382, 1.442695
        %v1388 = vpow.pop %v1387
        %v1389 = vmul.f32 %v1383, 1.442695
        %v1390 = vpow.pop %v1389
        %v1391 = vmul.f32 %v1384, 1.442695
        %v1392 = vpow.pop %v1391
        %v1393 = vsel %vm1001, %v1386, 0.0
        %1394 = vadd.xlane.f32.xlu0 %v1393
        %v1395 = vpop.xlane.xlu0 %1394
        %v1396 = vsel %vm1001, %v1388, 0.0
        %1397 = vadd.xlane.f32.xlu0 %v1396
        %v1398 = vpop.xlane.xlu0 %1397
        %v1399 = vsel %vm1001, %v1390, 0.0
        %1400 = vadd.xlane.f32.xlu0 %v1399
        %v1401 = vpop.xlane.xlu0 %1400
        %v1402 = vsel %vm1001, %v1392, 0.0
        %1403 = vadd.xlane.f32.xlu0 %v1402
        %v1404 = vpop.xlane.xlu0 %1403
        %v1405 = vrcp.pop %v1395
        %v1406 = vrcp.pop %v1398
        %v1407 = vrcp.pop %v1401
        %v1408 = vrcp.pop %v1404
        %v1409 = vmul.f32 %v1386, %v1405
        %v1410 = vmul.f32 %v1388, %v1406
        %v1411 = vmul.f32 %v1390, %v1407
        %v1412 = vmul.f32 %v1392, %v1408
        %1417 = vrot.lane.b32.xlu0 %v960, 96
        %v1418 = vpop.permute.xlu0 %1417
        %1419 = vrot.lane.b32.xlu0 %v965, 96
        %v1420 = vpop.permute.xlu0 %1419
        %1421 = vrot.lane.b32.xlu0 %v970, 96
        %v1422 = vpop.permute.xlu0 %1421
        %1423 = vrot.lane.b32.xlu0 %v975, 96
        %v1424 = vpop.permute.xlu0 %1423
        %v1430 = vsel %vm1001, %v1409, 0
        %v1433 = vsel %vm1001, %v1410, 0
        %v1436 = vsel %vm1001, %v1411, 0
        %v1439 = vsel %vm1001, %v1412, 0
        %1441 = vmatprep.subr.mxu0 0.0
        %1442 = vmatpush1.msra.mxu0 %v1418
        %1443 = vmatprep.subr.mxu0 0.0
        %1444 = vmatpush1.msra.mxu0 %v1420
        %1445 = vmatprep.subr.mxu0 0.0
        %1446 = vmatpush1.msra.mxu0 %v1422
        %1447 = vmatprep.subr.mxu0 0.0
        %1448 = vmatpush1.msra.mxu0 %v1424
        %1449 = vmatprep.subr.mxu0 0.0
        %1450 = vmatpush1.msra.mxu0 0.0
        %1451 = vmatprep.subr.mxu0 0.0
        %1452 = vmatpush1.msra.mxu0 0.0
        %1453 = vmatprep.subr.mxu0 0.0
        %1454 = vmatpush1.msra.mxu0 0.0
        %1455 = vmatprep.subr.mxu0 0.0
        %1456 = vmatpush1.msra.mxu0 0.0
        %1457 = vmatprep.subr.mxu0 0.0
        %1458 = vmatpush1.msra.mxu0 0.0
        %1459 = vmatprep.subr.mxu0 0.0
        %1460 = vmatpush1.msra.mxu0 0.0
        %1461 = vmatprep.subr.mxu0 0.0
        %1462 = vmatpush1.msra.mxu0 0.0
        %1463 = vmatprep.subr.mxu0 0.0
        %1464 = vmatpush1.msra.mxu0 0.0
        %1465 = vmatprep.subr.mxu0 0.0
        %1466 = vmatpush1.msra.mxu0 0.0
        %1467 = vmatprep.subr.mxu0 0.0
        %1468 = vmatpush1.msra.mxu0 0.0
        %1469 = vmatprep.subr.mxu0 0.0
        %1470 = vmatpush1.msra.mxu0 0.0
        %1471 = vmatprep.subr.mxu0 0.0
        %1472 = vmatpush1.msra.mxu0 0.0
        %1473 = vmatprep.subr.mxu0 0.0
        %1474 = vmatpush1.msra.mxu0 0.0
        %1475 = vmatprep.subr.mxu0 0.0
        %1476 = vmatpush1.msra.mxu0 0.0
        %1477 = vmatprep.subr.mxu0 0.0
        %1478 = vmatpush1.msra.mxu0 0.0
        %1479 = vmatprep.subr.mxu0 0.0
        %1480 = vmatpush1.msra.mxu0 0.0
        %1481 = vmatprep.subr.mxu0 0.0
        %1482 = vmatpush1.msra.mxu0 0.0
        %1483 = vmatprep.subr.mxu0 0.0
        %1484 = vmatpush1.msra.mxu0 0.0
        %1485 = vmatprep.subr.mxu0 0.0
        %1486 = vmatpush1.msra.mxu0 0.0
        %1487 = vmatprep.subr.mxu0 0.0
        %1488 = vmatpush1.msra.mxu0 0.0
        %1489 = vmatprep.subr.mxu0 0.0
        %1490 = vmatpush1.msra.mxu0 0.0
        %1491 = vmatprep.subr.mxu0 0.0
        %1492 = vmatpush1.msra.mxu0 0.0
        %1493 = vmatprep.subr.mxu0 0.0
        %1494 = vmatpush1.msra.mxu0 0.0
        %1495 = vmatprep.subr.mxu0 0.0
        %1496 = vmatpush1.msra.mxu0 0.0
        %1497 = vmatprep.subr.mxu0 0.0
        %1498 = vmatpush1.msra.mxu0 0.0
        %1499 = vmatprep.subr.mxu0 0.0
        %1500 = vmatpush1.msra.mxu0 0.0
        %1501 = vmatprep.subr.mxu0 0.0
        %1502 = vmatpush1.msra.mxu0 0.0
        %1503 = vmatprep.subr.mxu0 0.0
        %1504 = vmatpush1.msra.mxu0 0.0
        %1505 = vmatprep.mubr.f32.mxu0 0.0
        %1506 = vmatmul.mubr.f32.gmra.mrb[0].mxu0 %v1430
        %v1507 = vpop.f32.mrb[0].mxu0
        %v1508 = vadd.f32 0.0, %v1507
        %v1509 = vpop.f32.mrb[0].mxu0
        %1510 = vmatprep.mubr.f32.mxu0 0.0
        %1511 = vmatmul.mubr.f32.gmra.mrb[0].mxu0 %v1433
        %v1512 = vpop.f32.mrb[0].mxu0
        %v1513 = vadd.f32 0.0, %v1512
        %v1514 = vpop.f32.mrb[0].mxu0
        %1515 = vmatprep.mubr.f32.mxu0 0.0
        %1516 = vmatmul.mubr.f32.gmra.mrb[0].mxu0 %v1436
        %v1517 = vpop.f32.mrb[0].mxu0
        %v1518 = vadd.f32 0.0, %v1517
        %v1519 = vpop.f32.mrb[0].mxu0
        %1520 = vmatprep.mubr.f32.mxu0 0.0
        %1521 = vmatmul.mubr.f32.gmra.mrb[0].mxu0 %v1439
        %v1522 = vpop.f32.mrb[0].mxu0
        %v1523 = vadd.f32 0.0, %v1522
        %v1524 = vpop.f32.mrb[0].mxu0
        %1525 = vdwg.mxu0
        %v1527 = vsel %vm1001, %v1508, 0
        %v1530 = vsel %vm1001, %v1513, 0
        %v1533 = vsel %vm1001, %v1518, 0
        %v1536 = vsel %vm1001, %v1523, 0
        %1538 = vmatprep.subr.mxu0 0.0
        %1539 = vmatpush1.msra.mxu0 %v982
        %1540 = vmatprep.subr.mxu0 0.0
        %1541 = vmatpush1.msra.mxu0 %v983
        %1542 = vmatprep.subr.mxu0 0.0
        %1543 = vmatpush1.msra.mxu0 %v984
        %1544 = vmatprep.subr.mxu0 0.0
        %1545 = vmatpush1.msra.mxu0 %v985
        %1546 = vmatprep.subr.mxu0 0.0
        %1547 = vmatpush1.msra.mxu0 0.0
        %1548 = vmatprep.subr.mxu0 0.0
        %1549 = vmatpush1.msra.mxu0 0.0
        %1550 = vmatprep.subr.mxu0 0.0
        %1551 = vmatpush1.msra.mxu0 0.0
        %1552 = vmatprep.subr.mxu0 0.0
        %1553 = vmatpush1.msra.mxu0 0.0
        %1554 = vmatprep.subr.mxu0 0.0
        %1555 = vmatpush1.msra.mxu0 0.0
        %1556 = vmatprep.subr.mxu0 0.0
        %1557 = vmatpush1.msra.mxu0 0.0
        %1558 = vmatprep.subr.mxu0 0.0
        %1559 = vmatpush1.msra.mxu0 0.0
        %1560 = vmatprep.subr.mxu0 0.0
        %1561 = vmatpush1.msra.mxu0 0.0
        %1562 = vmatprep.subr.mxu0 0.0
        %1563 = vmatpush1.msra.mxu0 0.0
        %1564 = vmatprep.subr.mxu0 0.0
        %1565 = vmatpush1.msra.mxu0 0.0
        %1566 = vmatprep.subr.mxu0 0.0
        %1567 = vmatpush1.msra.mxu0 0.0
        %1568 = vmatprep.subr.mxu0 0.0
        %1569 = vmatpush1.msra.mxu0 0.0
        %1570 = vmatprep.subr.mxu0 0.0
        %1571 = vmatpush1.msra.mxu0 0.0
        %1572 = vmatprep.subr.mxu0 0.0
        %1573 = vmatpush1.msra.mxu0 0.0
        %1574 = vmatprep.subr.mxu0 0.0
        %1575 = vmatpush1.msra.mxu0 0.0
        %1576 = vmatprep.subr.mxu0 0.0
        %1577 = vmatpush1.msra.mxu0 0.0
        %1578 = vmatprep.subr.mxu0 0.0
        %1579 = vmatpush1.msra.mxu0 0.0
        %1580 = vmatprep.subr.mxu0 0.0
        %1581 = vmatpush1.msra.mxu0 0.0
        %1582 = vmatprep.subr.mxu0 0.0
        %1583 = vmatpush1.msra.mxu0 0.0
        %1584 = vmatprep.subr.mxu0 0.0
        %1585 = vmatpush1.msra.mxu0 0.0
        %1586 = vmatprep.subr.mxu0 0.0
        %1587 = vmatpush1.msra.mxu0 0.0
        %1588 = vmatprep.subr.mxu0 0.0
        %1589 = vmatpush1.msra.mxu0 0.0
        %1590 = vmatprep.subr.mxu0 0.0
        %1591 = vmatpush1.msra.mxu0 0.0
        %1592 = vmatprep.subr.mxu0 0.0
        %1593 = vmatpush1.msra.mxu0 0.0
        %1594 = vmatprep.subr.mxu0 0.0
        %1595 = vmatpush1.msra.mxu0 0.0
        %1596 = vmatprep.subr.mxu0 0.0
        %1597 = vmatpush1.msra.mxu0 0.0
        %1598 = vmatprep.subr.mxu0 0.0
        %1599 = vmatpush1.msra.mxu0 0.0
        %1600 = vmatprep.subr.mxu0 0.0
        %1601 = vmatpush1.msra.mxu0 0.0
        %1602 = vmatprep.mubr.f32.mxu0 0.0
        %1603 = vmatmul.mubr.f32.gmra.mrb[0].mxu0 %v1527
        %v1604 = vpop.f32.mrb[0].mxu0
        %v1605 = vadd.f32 0.0, %v1604
        %v1606 = vpop.f32.mrb[0].mxu0
        %1607 = vmatprep.mubr.f32.mxu0 0.0
        %1608 = vmatmul.mubr.f32.gmra.mrb[0].mxu0 %v1530
        %v1609 = vpop.f32.mrb[0].mxu0
        %v1610 = vadd.f32 0.0, %v1609
        %v1611 = vpop.f32.mrb[0].mxu0
        %1612 = vmatprep.mubr.f32.mxu0 0.0
        %1613 = vmatmul.mubr.f32.gmra.mrb[0].mxu0 %v1533
        %v1614 = vpop.f32.mrb[0].mxu0
        %v1615 = vadd.f32 0.0, %v1614
        %v1616 = vpop.f32.mrb[0].mxu0
        %1617 = vmatprep.mubr.f32.mxu0 0.0
        %1618 = vmatmul.mubr.f32.gmra.mrb[0].mxu0 %v1536
        %v1619 = vpop.f32.mrb[0].mxu0
        %v1620 = vadd.f32 0.0, %v1619
        %v1621 = vpop.f32.mrb[0].mxu0
        %1622 = vdwg.mxu0
        %v1624 = vsel %vm1001, %v1234, 0
        %v1627 = vsel %vm1001, %v1239, 0
        %v1630 = vsel %vm1001, %v1244, 0
        %v1633 = vsel %vm1001, %v1249, 0
        %1635 = vmatprep.subr.mxu0 0.0
        %1636 = vmatpush1.msra.mxu0 %v978
        %1637 = vmatprep.subr.mxu0 0.0
        %1638 = vmatpush1.msra.mxu0 %v979
        %1639 = vmatprep.subr.mxu0 0.0
        %1640 = vmatpush1.msra.mxu0 %v980
        %1641 = vmatprep.subr.mxu0 0.0
        %1642 = vmatpush1.msra.mxu0 %v981
        %1643 = vmatprep.subr.mxu0 0.0
        %1644 = vmatpush1.msra.mxu0 0.0
        %1645 = vmatprep.subr.mxu0 0.0
        %1646 = vmatpush1.msra.mxu0 0.0
        %1647 = vmatprep.subr.mxu0 0.0
        %1648 = vmatpush1.msra.mxu0 0.0
        %1649 = vmatprep.subr.mxu0 0.0
        %1650 = vmatpush1.msra.mxu0 0.0
        %1651 = vmatprep.subr.mxu0 0.0
        %1652 = vmatpush1.msra.mxu0 0.0
        %1653 = vmatprep.subr.mxu0 0.0
        %1654 = vmatpush1.msra.mxu0 0.0
        %1655 = vmatprep.subr.mxu0 0.0
        %1656 = vmatpush1.msra.mxu0 0.0
        %1657 = vmatprep.subr.mxu0 0.0
        %1658 = vmatpush1.msra.mxu0 0.0
        %1659 = vmatprep.subr.mxu0 0.0
        %1660 = vmatpush1.msra.mxu0 0.0
        %1661 = vmatprep.subr.mxu0 0.0
        %1662 = vmatpush1.msra.mxu0 0.0
        %1663 = vmatprep.subr.mxu0 0.0
        %1664 = vmatpush1.msra.mxu0 0.0
        %1665 = vmatprep.subr.mxu0 0.0
        %1666 = vmatpush1.msra.mxu0 0.0
        %1667 = vmatprep.subr.mxu0 0.0
        %1668 = vmatpush1.msra.mxu0 0.0
        %1669 = vmatprep.subr.mxu0 0.0
        %1670 = vmatpush1.msra.mxu0 0.0
        %1671 = vmatprep.subr.mxu0 0.0
        %1672 = vmatpush1.msra.mxu0 0.0
        %1673 = vmatprep.subr.mxu0 0.0
        %1674 = vmatpush1.msra.mxu0 0.0
        %1675 = vmatprep.subr.mxu0 0.0
        %1676 = vmatpush1.msra.mxu0 0.0
        %1677 = vmatprep.subr.mxu0 0.0
        %1678 = vmatpush1.msra.mxu0 0.0
        %1679 = vmatprep.subr.mxu0 0.0
        %1680 = vmatpush1.msra.mxu0 0.0
        %1681 = vmatprep.subr.mxu0 0.0
        %1682 = vmatpush1.msra.mxu0 0.0
        %1683 = vmatprep.subr.mxu0 0.0
        %1684 = vmatpush1.msra.mxu0 0.0
        %1685 = vmatprep.subr.mxu0 0.0
        %1686 = vmatpush1.msra.mxu0 0.0
        %1687 = vmatprep.subr.mxu0 0.0
        %1688 = vmatpush1.msra.mxu0 0.0
        %1689 = vmatprep.subr.mxu0 0.0
        %1690 = vmatpush1.msra.mxu0 0.0
        %1691 = vmatprep.subr.mxu0 0.0
        %1692 = vmatpush1.msra.mxu0 0.0
        %1693 = vmatprep.subr.mxu0 0.0
        %1694 = vmatpush1.msra.mxu0 0.0
        %1695 = vmatprep.subr.mxu0 0.0
        %1696 = vmatpush1.msra.mxu0 0.0
        %1697 = vmatprep.subr.mxu0 0.0
        %1698 = vmatpush1.msra.mxu0 0.0
        %1699 = vmatprep.mubr.f32.mxu0 0.0
        %1700 = vmatmul.mubr.f32.gmra.mrb[0].mxu0 %v1624
        %v1701 = vpop.f32.mrb[0].mxu0
        %v1702 = vadd.f32 %v1605, %v1701
        %v1703 = vpop.f32.mrb[0].mxu0
        %1704 = vmatprep.mubr.f32.mxu0 0.0
        %1705 = vmatmul.mubr.f32.gmra.mrb[0].mxu0 %v1627
        %v1706 = vpop.f32.mrb[0].mxu0
        %v1707 = vadd.f32 %v1610, %v1706
        %v1708 = vpop.f32.mrb[0].mxu0
        %1709 = vmatprep.mubr.f32.mxu0 0.0
        %1710 = vmatmul.mubr.f32.gmra.mrb[0].mxu0 %v1630
        %v1711 = vpop.f32.mrb[0].mxu0
        %v1712 = vadd.f32 %v1615, %v1711
        %v1713 = vpop.f32.mrb[0].mxu0
        %1714 = vmatprep.mubr.f32.mxu0 0.0
        %1715 = vmatmul.mubr.f32.gmra.mrb[0].mxu0 %v1633
        %v1716 = vpop.f32.mrb[0].mxu0
        %v1717 = vadd.f32 %v1620, %v1716
        %v1718 = vpop.f32.mrb[0].mxu0
        %1719 = vdwg.mxu0
        %1720 = vrot.lane.b32.xlu0 %v871, 64
        %v1721 = vpop.permute.xlu0 %1720
        %1722 = vrot.lane.b32.xlu0 %v877, 64
        %v1723 = vpop.permute.xlu0 %1722
        %1724 = vrot.lane.b32.xlu0 %v883, 64
        %v1725 = vpop.permute.xlu0 %1724
        %1726 = vrot.lane.b32.xlu0 %v889, 64
        %v1727 = vpop.permute.xlu0 %1726
        %1728 = vrot.lane.b32.xlu0 %v873, 64
        %v1729 = vpop.permute.xlu0 %1728
        %1730 = vrot.lane.b32.xlu0 %v879, 64
        %v1731 = vpop.permute.xlu0 %1730
        %1732 = vrot.lane.b32.xlu0 %v885, 64
        %v1733 = vpop.permute.xlu0 %1732
        %1734 = vrot.lane.b32.xlu0 %v891, 64
        %v1735 = vpop.permute.xlu0 %1734
        %v1736 = vsel %vm1001, %v1721, 0
        %v1738 = vsel %vm1001, %v1723, 0
        %v1740 = vsel %vm1001, %v1725, 0
        %v1742 = vsel %vm1001, %v1727, 0
        %v1744 = vsel %vm1001, %v1729, 0
        %v1746 = vsel %vm1001, %v1731, 0
        %v1748 = vsel %vm1001, %v1733, 0
        %v1750 = vsel %vm1001, %v1735, 0
        %1752 = vmatprep.subr.mxu0 0.0
        %1753 = vmatpush1.xpose.msra.mxu0 %v1744
        %1754 = vmatprep.subr.mxu0 0.0
        %1755 = vmatpush1.xpose.msra.mxu0 %v1746
        %1756 = vmatprep.subr.mxu0 0.0
        %1757 = vmatpush1.xpose.msra.mxu0 %v1748
        %1758 = vmatprep.subr.mxu0 0.0
        %1759 = vmatpush1.xpose.msra.mxu0 %v1750
        %1760 = vmatprep.subr.mxu0 0.0
        %1761 = vmatpush1.xpose.msra.mxu0 0.0
        %1762 = vmatprep.subr.mxu0 0.0
        %1763 = vmatpush1.xpose.msra.mxu0 0.0
        %1764 = vmatprep.subr.mxu0 0.0
        %1765 = vmatpush1.xpose.msra.mxu0 0.0
        %1766 = vmatprep.subr.mxu0 0.0
        %1767 = vmatpush1.xpose.msra.mxu0 0.0
        %1768 = vmatprep.subr.mxu0 0.0
        %1769 = vmatpush1.xpose.msra.mxu0 0.0
        %1770 = vmatprep.subr.mxu0 0.0
        %1771 = vmatpush1.xpose.msra.mxu0 0.0
        %1772 = vmatprep.subr.mxu0 0.0
        %1773 = vmatpush1.xpose.msra.mxu0 0.0
        %1774 = vmatprep.subr.mxu0 0.0
        %1775 = vmatpush1.xpose.msra.mxu0 0.0
        %1776 = vmatprep.subr.mxu0 0.0
        %1777 = vmatpush1.xpose.msra.mxu0 0.0
        %1778 = vmatprep.subr.mxu0 0.0
        %1779 = vmatpush1.xpose.msra.mxu0 0.0
        %1780 = vmatprep.subr.mxu0 0.0
        %1781 = vmatpush1.xpose.msra.mxu0 0.0
        %1782 = vmatprep.subr.mxu0 0.0
        %1783 = vmatpush1.xpose.msra.mxu0 0.0
        %1784 = vmatprep.subr.mxu0 0.0
        %1785 = vmatpush1.xpose.msra.mxu0 0.0
        %1786 = vmatprep.subr.mxu0 0.0
        %1787 = vmatpush1.xpose.msra.mxu0 0.0
        %1788 = vmatprep.subr.mxu0 0.0
        %1789 = vmatpush1.xpose.msra.mxu0 0.0
        %1790 = vmatprep.subr.mxu0 0.0
        %1791 = vmatpush1.xpose.msra.mxu0 0.0
        %1792 = vmatprep.subr.mxu0 0.0
        %1793 = vmatpush1.xpose.msra.mxu0 0.0
        %1794 = vmatprep.subr.mxu0 0.0
        %1795 = vmatpush1.xpose.msra.mxu0 0.0
        %1796 = vmatprep.subr.mxu0 0.0
        %1797 = vmatpush1.xpose.msra.mxu0 0.0
        %1798 = vmatprep.subr.mxu0 0.0
        %1799 = vmatpush1.xpose.msra.mxu0 0.0
        %1800 = vmatprep.subr.mxu0 0.0
        %1801 = vmatpush1.xpose.msra.mxu0 0.0
        %1802 = vmatprep.subr.mxu0 0.0
        %1803 = vmatpush1.xpose.msra.mxu0 0.0
        %1804 = vmatprep.subr.mxu0 0.0
        %1805 = vmatpush1.xpose.msra.mxu0 0.0
        %1806 = vmatprep.subr.mxu0 0.0
        %1807 = vmatpush1.xpose.msra.mxu0 0.0
        %1808 = vmatprep.subr.mxu0 0.0
        %1809 = vmatpush1.xpose.msra.mxu0 0.0
        %1810 = vmatprep.subr.mxu0 0.0
        %1811 = vmatpush1.xpose.msra.mxu0 0.0
        %1812 = vmatprep.subr.mxu0 0.0
        %1813 = vmatpush1.xpose.msra.mxu0 0.0
        %1814 = vmatprep.subr.mxu0 0.0
        %1815 = vmatpush1.xpose.msra.mxu0 0.0
        %1816 = vmatprep.mubr.f32.mxu0 0.0
        %1817 = vmatmul.mubr.f32.gmra.mrb[0].mxu0 %v1736
        %v1818 = vpop.f32.mrb[0].mxu0
        %v1819 = vadd.f32 %v999, %v1818
        %v1820 = vpop.f32.mrb[0].mxu0
        %1821 = vmatprep.mubr.f32.mxu0 0.0
        %1822 = vmatmul.mubr.f32.gmra.mrb[0].mxu0 %v1738
        %v1823 = vpop.f32.mrb[0].mxu0
        %v1824 = vadd.f32 %v999, %v1823
        %v1825 = vpop.f32.mrb[0].mxu0
        %1826 = vmatprep.mubr.f32.mxu0 0.0
        %1827 = vmatmul.mubr.f32.gmra.mrb[0].mxu0 %v1740
        %v1828 = vpop.f32.mrb[0].mxu0
        %v1829 = vadd.f32 %v999, %v1828
        %v1830 = vpop.f32.mrb[0].mxu0
        %1831 = vmatprep.mubr.f32.mxu0 0.0
        %1832 = vmatmul.mubr.f32.gmra.mrb[0].mxu0 %v1742
        %v1833 = vpop.f32.mrb[0].mxu0
        %v1834 = vadd.f32 %v999, %v1833
        %v1835 = vpop.f32.mrb[0].mxu0
        %1836 = vdwg.mxu0
        %v1837 = vsel %vm1001, %v1819, -inf
        %1838 = vmax.xlane.f32.xlu0 %v1837
        %v1839 = vpop.xlane.xlu0 %1838
        %v1840 = vsel %vm1001, %v1824, -inf
        %1841 = vmax.xlane.f32.xlu0 %v1840
        %v1842 = vpop.xlane.xlu0 %1841
        %v1843 = vsel %vm1001, %v1829, -inf
        %1844 = vmax.xlane.f32.xlu0 %v1843
        %v1845 = vpop.xlane.xlu0 %1844
        %v1846 = vsel %vm1001, %v1834, -inf
        %1847 = vmax.xlane.f32.xlu0 %v1846
        %v1848 = vpop.xlane.xlu0 %1847
        %v1849 = vsub.f32 %v1819, %v1839
        %v1850 = vsub.f32 %v1824, %v1842
        %v1851 = vsub.f32 %v1829, %v1845
        %v1852 = vsub.f32 %v1834, %v1848
        %v1853 = vmul.f32 %v1849, 1.442695
        %v1854 = vpow.pop %v1853
        %v1855 = vmul.f32 %v1850, 1.442695
        %v1856 = vpow.pop %v1855
        %v1857 = vmul.f32 %v1851, 1.442695
        %v1858 = vpow.pop %v1857
        %v1859 = vmul.f32 %v1852, 1.442695
        %v1860 = vpow.pop %v1859
        %v1861 = vsel %vm1001, %v1854, 0.0
        %1862 = vadd.xlane.f32.xlu0 %v1861
        %v1863 = vpop.xlane.xlu0 %1862
        %v1864 = vsel %vm1001, %v1856, 0.0
        %1865 = vadd.xlane.f32.xlu0 %v1864
        %v1866 = vpop.xlane.xlu0 %1865
        %v1867 = vsel %vm1001, %v1858, 0.0
        %1868 = vadd.xlane.f32.xlu0 %v1867
        %v1869 = vpop.xlane.xlu0 %1868
        %v1870 = vsel %vm1001, %v1860, 0.0
        %1871 = vadd.xlane.f32.xlu0 %v1870
        %v1872 = vpop.xlane.xlu0 %1871
        %v1873 = vrcp.pop %v1863
        %v1874 = vrcp.pop %v1866
        %v1875 = vrcp.pop %v1869
        %v1876 = vrcp.pop %v1872
        %v1877 = vmul.f32 %v1854, %v1873
        %v1878 = vmul.f32 %v1856, %v1874
        %v1879 = vmul.f32 %v1858, %v1875
        %v1880 = vmul.f32 %v1860, %v1876
        %1881 = vrot.lane.b32.xlu0 %v960, 64
        %v1882 = vpop.permute.xlu0 %1881
        %1883 = vrot.lane.b32.xlu0 %v965, 64
        %v1884 = vpop.permute.xlu0 %1883
        %1885 = vrot.lane.b32.xlu0 %v970, 64
        %v1886 = vpop.permute.xlu0 %1885
        %1887 = vrot.lane.b32.xlu0 %v975, 64
        %v1888 = vpop.permute.xlu0 %1887
        %v1894 = vsel %vm1001, %v1877, 0
        %v1897 = vsel %vm1001, %v1878, 0
        %v1900 = vsel %vm1001, %v1879, 0
        %v1903 = vsel %vm1001, %v1880, 0
        %1905 = vmatprep.subr.mxu0 0.0
        %1906 = vmatpush1.msra.mxu0 %v1882
        %1907 = vmatprep.subr.mxu0 0.0
        %1908 = vmatpush1.msra.mxu0 %v1884
        %1909 = vmatprep.subr.mxu0 0.0
        %1910 = vmatpush1.msra.mxu0 %v1886
        %1911 = vmatprep.subr.mxu0 0.0
        %1912 = vmatpush1.msra.mxu0 %v1888
        %1913 = vmatprep.subr.mxu0 0.0
        %1914 = vmatpush1.msra.mxu0 0.0
        %1915 = vmatprep.subr.mxu0 0.0
        %1916 = vmatpush1.msra.mxu0 0.0
        %1917 = vmatprep.subr.mxu0 0.0
        %1918 = vmatpush1.msra.mxu0 0.0
        %1919 = vmatprep.subr.mxu0 0.0
        %1920 = vmatpush1.msra.mxu0 0.0
        %1921 = vmatprep.subr.mxu0 0.0
        %1922 = vmatpush1.msra.mxu0 0.0
        %1923 = vmatprep.subr.mxu0 0.0
        %1924 = vmatpush1.msra.mxu0 0.0
        %1925 = vmatprep.subr.mxu0 0.0
        %1926 = vmatpush1.msra.mxu0 0.0
        %1927 = vmatprep.subr.mxu0 0.0
        %1928 = vmatpush1.msra.mxu0 0.0
        %1929 = vmatprep.subr.mxu0 0.0
        %1930 = vmatpush1.msra.mxu0 0.0
        %1931 = vmatprep.subr.mxu0 0.0
        %1932 = vmatpush1.msra.mxu0 0.0
        %1933 = vmatprep.subr.mxu0 0.0
        %1934 = vmatpush1.msra.mxu0 0.0
        %1935 = vmatprep.subr.mxu0 0.0
        %1936 = vmatpush1.msra.mxu0 0.0
        %1937 = vmatprep.subr.mxu0 0.0
        %1938 = vmatpush1.msra.mxu0 0.0
        %1939 = vmatprep.subr.mxu0 0.0
        %1940 = vmatpush1.msra.mxu0 0.0
        %1941 = vmatprep.subr.mxu0 0.0
        %1942 = vmatpush1.msra.mxu0 0.0
        %1943 = vmatprep.subr.mxu0 0.0
        %1944 = vmatpush1.msra.mxu0 0.0
        %1945 = vmatprep.subr.mxu0 0.0
        %1946 = vmatpush1.msra.mxu0 0.0
        %1947 = vmatprep.subr.mxu0 0.0
        %1948 = vmatpush1.msra.mxu0 0.0
        %1949 = vmatprep.subr.mxu0 0.0
        %1950 = vmatpush1.msra.mxu0 0.0
        %1951 = vmatprep.subr.mxu0 0.0
        %1952 = vmatpush1.msra.mxu0 0.0
        %1953 = vmatprep.subr.mxu0 0.0
        %1954 = vmatpush1.msra.mxu0 0.0
        %1955 = vmatprep.subr.mxu0 0.0
        %1956 = vmatpush1.msra.mxu0 0.0
        %1957 = vmatprep.subr.mxu0 0.0
        %1958 = vmatpush1.msra.mxu0 0.0
        %1959 = vmatprep.subr.mxu0 0.0
        %1960 = vmatpush1.msra.mxu0 0.0
        %1961 = vmatprep.subr.mxu0 0.0
        %1962 = vmatpush1.msra.mxu0 0.0
        %1963 = vmatprep.subr.mxu0 0.0
        %1964 = vmatpush1.msra.mxu0 0.0
        %1965 = vmatprep.subr.mxu0 0.0
        %1966 = vmatpush1.msra.mxu0 0.0
        %1967 = vmatprep.subr.mxu0 0.0
        %1968 = vmatpush1.msra.mxu0 0.0
        %1969 = vmatprep.mubr.f32.mxu0 0.0
        %1970 = vmatmul.mubr.f32.gmra.mrb[0].mxu0 %v1894
        %v1971 = vpop.f32.mrb[0].mxu0
        %v1972 = vadd.f32 0.0, %v1971
        %v1973 = vpop.f32.mrb[0].mxu0
        %1974 = vmatprep.mubr.f32.mxu0 0.0
        %1975 = vmatmul.mubr.f32.gmra.mrb[0].mxu0 %v1897
        %v1976 = vpop.f32.mrb[0].mxu0
        %v1977 = vadd.f32 0.0, %v1976
        %v1978 = vpop.f32.mrb[0].mxu0
        %1979 = vmatprep.mubr.f32.mxu0 0.0
        %1980 = vmatmul.mubr.f32.gmra.mrb[0].mxu0 %v1900
        %v1981 = vpop.f32.mrb[0].mxu0
        %v1982 = vadd.f32 0.0, %v1981
        %v1983 = vpop.f32.mrb[0].mxu0
        %1984 = vmatprep.mubr.f32.mxu0 0.0
        %1985 = vmatmul.mubr.f32.gmra.mrb[0].mxu0 %v1903
        %v1986 = vpop.f32.mrb[0].mxu0
        %v1987 = vadd.f32 0.0, %v1986
        %v1988 = vpop.f32.mrb[0].mxu0
        %1989 = vdwg.mxu0
        %v1991 = vsel %vm1001, %v1972, 0
        %v1994 = vsel %vm1001, %v1977, 0
        %v1997 = vsel %vm1001, %v1982, 0
        %v2000 = vsel %vm1001, %v1987, 0
        %2002 = vmatprep.subr.mxu0 0.0
        %2003 = vmatpush1.msra.mxu0 %v986
        %2004 = vmatprep.subr.mxu0 0.0
        %2005 = vmatpush1.msra.mxu0 %v987
        %2006 = vmatprep.subr.mxu0 0.0
        %2007 = vmatpush1.msra.mxu0 %v988
        %2008 = vmatprep.subr.mxu0 0.0
        %2009 = vmatpush1.msra.mxu0 %v989
        %2010 = vmatprep.subr.mxu0 0.0
        %2011 = vmatpush1.msra.mxu0 0.0
        %2012 = vmatprep.subr.mxu0 0.0
        %2013 = vmatpush1.msra.mxu0 0.0
        %2014 = vmatprep.subr.mxu0 0.0
        %2015 = vmatpush1.msra.mxu0 0.0
        %2016 = vmatprep.subr.mxu0 0.0
        %2017 = vmatpush1.msra.mxu0 0.0
        %2018 = vmatprep.subr.mxu0 0.0
        %2019 = vmatpush1.msra.mxu0 0.0
        %2020 = vmatprep.subr.mxu0 0.0
        %2021 = vmatpush1.msra.mxu0 0.0
        %2022 = vmatprep.subr.mxu0 0.0
        %2023 = vmatpush1.msra.mxu0 0.0
        %2024 = vmatprep.subr.mxu0 0.0
        %2025 = vmatpush1.msra.mxu0 0.0
        %2026 = vmatprep.subr.mxu0 0.0
        %2027 = vmatpush1.msra.mxu0 0.0
        %2028 = vmatprep.subr.mxu0 0.0
        %2029 = vmatpush1.msra.mxu0 0.0
        %2030 = vmatprep.subr.mxu0 0.0
        %2031 = vmatpush1.msra.mxu0 0.0
        %2032 = vmatprep.subr.mxu0 0.0
        %2033 = vmatpush1.msra.mxu0 0.0
        %2034 = vmatprep.subr.mxu0 0.0
        %2035 = vmatpush1.msra.mxu0 0.0
        %2036 = vmatprep.subr.mxu0 0.0
        %2037 = vmatpush1.msra.mxu0 0.0
        %2038 = vmatprep.subr.mxu0 0.0
        %2039 = vmatpush1.msra.mxu0 0.0
        %2040 = vmatprep.subr.mxu0 0.0
        %2041 = vmatpush1.msra.mxu0 0.0
        %2042 = vmatprep.subr.mxu0 0.0
        %2043 = vmatpush1.msra.mxu0 0.0
        %2044 = vmatprep.subr.mxu0 0.0
        %2045 = vmatpush1.msra.mxu0 0.0
        %2046 = vmatprep.subr.mxu0 0.0
        %2047 = vmatpush1.msra.mxu0 0.0
        %2048 = vmatprep.subr.mxu0 0.0
        %2049 = vmatpush1.msra.mxu0 0.0
        %2050 = vmatprep.subr.mxu0 0.0
        %2051 = vmatpush1.msra.mxu0 0.0
        %2052 = vmatprep.subr.mxu0 0.0
        %2053 = vmatpush1.msra.mxu0 0.0
        %2054 = vmatprep.subr.mxu0 0.0
        %2055 = vmatpush1.msra.mxu0 0.0
        %2056 = vmatprep.subr.mxu0 0.0
        %2057 = vmatpush1.msra.mxu0 0.0
        %2058 = vmatprep.subr.mxu0 0.0
        %2059 = vmatpush1.msra.mxu0 0.0
        %2060 = vmatprep.subr.mxu0 0.0
        %2061 = vmatpush1.msra.mxu0 0.0
        %2062 = vmatprep.subr.mxu0 0.0
        %2063 = vmatpush1.msra.mxu0 0.0
        %2064 = vmatprep.subr.mxu0 0.0
        %2065 = vmatpush1.msra.mxu0 0.0
        %2066 = vmatprep.mubr.f32.mxu0 0.0
        %2067 = vmatmul.mubr.f32.gmra.mrb[0].mxu0 %v1991
        %v2068 = vpop.f32.mrb[0].mxu0
        %v2069 = vadd.f32 0.0, %v2068
        %v2070 = vpop.f32.mrb[0].mxu0
        %2071 = vmatprep.mubr.f32.mxu0 0.0
        %2072 = vmatmul.mubr.f32.gmra.mrb[0].mxu0 %v1994
        %v2073 = vpop.f32.mrb[0].mxu0
        %v2074 = vadd.f32 0.0, %v2073
        %v2075 = vpop.f32.mrb[0].mxu0
        %2076 = vmatprep.mubr.f32.mxu0 0.0
        %2077 = vmatmul.mubr.f32.gmra.mrb[0].mxu0 %v1997
        %v2078 = vpop.f32.mrb[0].mxu0
        %v2079 = vadd.f32 0.0, %v2078
        %v2080 = vpop.f32.mrb[0].mxu0
        %2081 = vmatprep.mubr.f32.mxu0 0.0
        %2082 = vmatmul.mubr.f32.gmra.mrb[0].mxu0 %v2000
        %v2083 = vpop.f32.mrb[0].mxu0
        %v2084 = vadd.f32 0.0, %v2083
        %v2085 = vpop.f32.mrb[0].mxu0
        %2086 = vdwg.mxu0
        %v2087 = vadd.f32 %v1702, %v2069
        %v2088 = vadd.f32 %v1707, %v2074
        %v2089 = vadd.f32 %v1712, %v2079
        %v2090 = vadd.f32 %v1717, %v2084
        %2091 = vrot.lane.b32.xlu0 %v871, 32
        %v2092 = vpop.permute.xlu0 %2091
        %2093 = vrot.lane.b32.xlu0 %v877, 32
        %v2094 = vpop.permute.xlu0 %2093
        %2095 = vrot.lane.b32.xlu0 %v883, 32
        %v2096 = vpop.permute.xlu0 %2095
        %2097 = vrot.lane.b32.xlu0 %v889, 32
        %v2098 = vpop.permute.xlu0 %2097
        %2099 = vrot.lane.b32.xlu0 %v873, 32
        %v2100 = vpop.permute.xlu0 %2099
        %2101 = vrot.lane.b32.xlu0 %v879, 32
        %v2102 = vpop.permute.xlu0 %2101
        %2103 = vrot.lane.b32.xlu0 %v885, 32
        %v2104 = vpop.permute.xlu0 %2103
        %2105 = vrot.lane.b32.xlu0 %v891, 32
        %v2106 = vpop.permute.xlu0 %2105
        %v2107 = vsel %vm1001, %v2092, 0
        %v2109 = vsel %vm1001, %v2094, 0
        %v2111 = vsel %vm1001, %v2096, 0
        %v2113 = vsel %vm1001, %v2098, 0
        %v2115 = vsel %vm1001, %v2100, 0
        %v2117 = vsel %vm1001, %v2102, 0
        %v2119 = vsel %vm1001, %v2104, 0
        %v2121 = vsel %vm1001, %v2106, 0
        %2123 = vmatprep.subr.mxu0 0.0
        %2124 = vmatpush1.xpose.msra.mxu0 %v2115
        %2125 = vmatprep.subr.mxu0 0.0
        %2126 = vmatpush1.xpose.msra.mxu0 %v2117
        %2127 = vmatprep.subr.mxu0 0.0
        %2128 = vmatpush1.xpose.msra.mxu0 %v2119
        %2129 = vmatprep.subr.mxu0 0.0
        %2130 = vmatpush1.xpose.msra.mxu0 %v2121
        %2131 = vmatprep.subr.mxu0 0.0
        %2132 = vmatpush1.xpose.msra.mxu0 0.0
        %2133 = vmatprep.subr.mxu0 0.0
        %2134 = vmatpush1.xpose.msra.mxu0 0.0
        %2135 = vmatprep.subr.mxu0 0.0
        %2136 = vmatpush1.xpose.msra.mxu0 0.0
        %2137 = vmatprep.subr.mxu0 0.0
        %2138 = vmatpush1.xpose.msra.mxu0 0.0
        %2139 = vmatprep.subr.mxu0 0.0
        %2140 = vmatpush1.xpose.msra.mxu0 0.0
        %2141 = vmatprep.subr.mxu0 0.0
        %2142 = vmatpush1.xpose.msra.mxu0 0.0
        %2143 = vmatprep.subr.mxu0 0.0
        %2144 = vmatpush1.xpose.msra.mxu0 0.0
        %2145 = vmatprep.subr.mxu0 0.0
        %2146 = vmatpush1.xpose.msra.mxu0 0.0
        %2147 = vmatprep.subr.mxu0 0.0
        %2148 = vmatpush1.xpose.msra.mxu0 0.0
        %2149 = vmatprep.subr.mxu0 0.0
        %2150 = vmatpush1.xpose.msra.mxu0 0.0
        %2151 = vmatprep.subr.mxu0 0.0
        %2152 = vmatpush1.xpose.msra.mxu0 0.0
        %2153 = vmatprep.subr.mxu0 0.0
        %2154 = vmatpush1.xpose.msra.mxu0 0.0
        %2155 = vmatprep.subr.mxu0 0.0
        %2156 = vmatpush1.xpose.msra.mxu0 0.0
        %2157 = vmatprep.subr.mxu0 0.0
        %2158 = vmatpush1.xpose.msra.mxu0 0.0
        %2159 = vmatprep.subr.mxu0 0.0
        %2160 = vmatpush1.xpose.msra.mxu0 0.0
        %2161 = vmatprep.subr.mxu0 0.0
        %2162 = vmatpush1.xpose.msra.mxu0 0.0
        %2163 = vmatprep.subr.mxu0 0.0
        %2164 = vmatpush1.xpose.msra.mxu0 0.0
        %2165 = vmatprep.subr.mxu0 0.0
        %2166 = vmatpush1.xpose.msra.mxu0 0.0
        %2167 = vmatprep.subr.mxu0 0.0
        %2168 = vmatpush1.xpose.msra.mxu0 0.0
        %2169 = vmatprep.subr.mxu0 0.0
        %2170 = vmatpush1.xpose.msra.mxu0 0.0
        %2171 = vmatprep.subr.mxu0 0.0
        %2172 = vmatpush1.xpose.msra.mxu0 0.0
        %2173 = vmatprep.subr.mxu0 0.0
        %2174 = vmatpush1.xpose.msra.mxu0 0.0
        %2175 = vmatprep.subr.mxu0 0.0
        %2176 = vmatpush1.xpose.msra.mxu0 0.0
        %2177 = vmatprep.subr.mxu0 0.0
        %2178 = vmatpush1.xpose.msra.mxu0 0.0
        %2179 = vmatprep.subr.mxu0 0.0
        %2180 = vmatpush1.xpose.msra.mxu0 0.0
        %2181 = vmatprep.subr.mxu0 0.0
        %2182 = vmatpush1.xpose.msra.mxu0 0.0
        %2183 = vmatprep.subr.mxu0 0.0
        %2184 = vmatpush1.xpose.msra.mxu0 0.0
        %2185 = vmatprep.subr.mxu0 0.0
        %2186 = vmatpush1.xpose.msra.mxu0 0.0
        %2187 = vmatprep.mubr.f32.mxu0 0.0
        %2188 = vmatmul.mubr.f32.gmra.mrb[0].mxu0 %v2107
        %v2189 = vpop.f32.mrb[0].mxu0
        %v2190 = vadd.f32 %v999, %v2189
        %v2191 = vpop.f32.mrb[0].mxu0
        %2192 = vmatprep.mubr.f32.mxu0 0.0
        %2193 = vmatmul.mubr.f32.gmra.mrb[0].mxu0 %v2109
        %v2194 = vpop.f32.mrb[0].mxu0
        %v2195 = vadd.f32 %v999, %v2194
        %v2196 = vpop.f32.mrb[0].mxu0
        %2197 = vmatprep.mubr.f32.mxu0 0.0
        %2198 = vmatmul.mubr.f32.gmra.mrb[0].mxu0 %v2111
        %v2199 = vpop.f32.mrb[0].mxu0
        %v2200 = vadd.f32 %v999, %v2199
        %v2201 = vpop.f32.mrb[0].mxu0
        %2202 = vmatprep.mubr.f32.mxu0 0.0
        %2203 = vmatmul.mubr.f32.gmra.mrb[0].mxu0 %v2113
        %v2204 = vpop.f32.mrb[0].mxu0
        %v2205 = vadd.f32 %v999, %v2204
        %v2206 = vpop.f32.mrb[0].mxu0
        %2207 = vdwg.mxu0
        %v2208 = vsel %vm1001, %v2190, -inf
        %2209 = vmax.xlane.f32.xlu0 %v2208
        %v2210 = vpop.xlane.xlu0 %2209
        %v2211 = vsel %vm1001, %v2195, -inf
        %2212 = vmax.xlane.f32.xlu0 %v2211
        %v2213 = vpop.xlane.xlu0 %2212
        %v2214 = vsel %vm1001, %v2200, -inf
        %2215 = vmax.xlane.f32.xlu0 %v2214
        %v2216 = vpop.xlane.xlu0 %2215
        %v2217 = vsel %vm1001, %v2205, -inf
        %2218 = vmax.xlane.f32.xlu0 %v2217
        %v2219 = vpop.xlane.xlu0 %2218
        %v2220 = vsub.f32 %v2190, %v2210
        %v2221 = vsub.f32 %v2195, %v2213
        %v2222 = vsub.f32 %v2200, %v2216
        %v2223 = vsub.f32 %v2205, %v2219
        %v2224 = vmul.f32 %v2220, 1.442695
        %v2225 = vpow.pop %v2224
        %v2226 = vmul.f32 %v2221, 1.442695
        %v2227 = vpow.pop %v2226
        %v2228 = vmul.f32 %v2222, 1.442695
        %v2229 = vpow.pop %v2228
        %v2230 = vmul.f32 %v2223, 1.442695
        %v2231 = vpow.pop %v2230
        %v2232 = vsel %vm1001, %v2225, 0.0
        %2233 = vadd.xlane.f32.xlu0 %v2232
        %v2234 = vpop.xlane.xlu0 %2233
        %v2235 = vsel %vm1001, %v2227, 0.0
        %2236 = vadd.xlane.f32.xlu0 %v2235
        %v2237 = vpop.xlane.xlu0 %2236
        %v2238 = vsel %vm1001, %v2229, 0.0
        %2239 = vadd.xlane.f32.xlu0 %v2238
        %v2240 = vpop.xlane.xlu0 %2239
        %v2241 = vsel %vm1001, %v2231, 0.0
        %2242 = vadd.xlane.f32.xlu0 %v2241
        %v2243 = vpop.xlane.xlu0 %2242
        %v2244 = vrcp.pop %v2234
        %v2245 = vrcp.pop %v2237
        %v2246 = vrcp.pop %v2240
        %v2247 = vrcp.pop %v2243
        %v2248 = vmul.f32 %v2225, %v2244
        %v2249 = vmul.f32 %v2227, %v2245
        %v2250 = vmul.f32 %v2229, %v2246
        %v2251 = vmul.f32 %v2231, %v2247
        %2252 = vrot.lane.b32.xlu0 %v960, 32
        %v2253 = vpop.permute.xlu0 %2252
        %2254 = vrot.lane.b32.xlu0 %v965, 32
        %v2255 = vpop.permute.xlu0 %2254
        %2256 = vrot.lane.b32.xlu0 %v970, 32
        %v2257 = vpop.permute.xlu0 %2256
        %2258 = vrot.lane.b32.xlu0 %v975, 32
        %v2259 = vpop.permute.xlu0 %2258
        %v2265 = vsel %vm1001, %v2248, 0
        %v2268 = vsel %vm1001, %v2249, 0
        %v2271 = vsel %vm1001, %v2250, 0
        %v2274 = vsel %vm1001, %v2251, 0
        %2276 = vmatprep.subr.mxu0 0.0
        %2277 = vmatpush1.msra.mxu0 %v2253
        %2278 = vmatprep.subr.mxu0 0.0
        %2279 = vmatpush1.msra.mxu0 %v2255
        %2280 = vmatprep.subr.mxu0 0.0
        %2281 = vmatpush1.msra.mxu0 %v2257
        %2282 = vmatprep.subr.mxu0 0.0
        %2283 = vmatpush1.msra.mxu0 %v2259
        %2284 = vmatprep.subr.mxu0 0.0
        %2285 = vmatpush1.msra.mxu0 0.0
        %2286 = vmatprep.subr.mxu0 0.0
        %2287 = vmatpush1.msra.mxu0 0.0
        %2288 = vmatprep.subr.mxu0 0.0
        %2289 = vmatpush1.msra.mxu0 0.0
        %2290 = vmatprep.subr.mxu0 0.0
        %2291 = vmatpush1.msra.mxu0 0.0
        %2292 = vmatprep.subr.mxu0 0.0
        %2293 = vmatpush1.msra.mxu0 0.0
        %2294 = vmatprep.subr.mxu0 0.0
        %2295 = vmatpush1.msra.mxu0 0.0
        %2296 = vmatprep.subr.mxu0 0.0
        %2297 = vmatpush1.msra.mxu0 0.0
        %2298 = vmatprep.subr.mxu0 0.0
        %2299 = vmatpush1.msra.mxu0 0.0
        %2300 = vmatprep.subr.mxu0 0.0
        %2301 = vmatpush1.msra.mxu0 0.0
        %2302 = vmatprep.subr.mxu0 0.0
        %2303 = vmatpush1.msra.mxu0 0.0
        %2304 = vmatprep.subr.mxu0 0.0
        %2305 = vmatpush1.msra.mxu0 0.0
        %2306 = vmatprep.subr.mxu0 0.0
        %2307 = vmatpush1.msra.mxu0 0.0
        %2308 = vmatprep.subr.mxu0 0.0
        %2309 = vmatpush1.msra.mxu0 0.0
        %2310 = vmatprep.subr.mxu0 0.0
        %2311 = vmatpush1.msra.mxu0 0.0
        %2312 = vmatprep.subr.mxu0 0.0
        %2313 = vmatpush1.msra.mxu0 0.0
        %2314 = vmatprep.subr.mxu0 0.0
        %2315 = vmatpush1.msra.mxu0 0.0
        %2316 = vmatprep.subr.mxu0 0.0
        %2317 = vmatpush1.msra.mxu0 0.0
        %2318 = vmatprep.subr.mxu0 0.0
        %2319 = vmatpush1.msra.mxu0 0.0
        %2320 = vmatprep.subr.mxu0 0.0
        %2321 = vmatpush1.msra.mxu0 0.0
        %2322 = vmatprep.subr.mxu0 0.0
        %2323 = vmatpush1.msra.mxu0 0.0
        %2324 = vmatprep.subr.mxu0 0.0
        %2325 = vmatpush1.msra.mxu0 0.0
        %2326 = vmatprep.subr.mxu0 0.0
        %2327 = vmatpush1.msra.mxu0 0.0
        %2328 = vmatprep.subr.mxu0 0.0
        %2329 = vmatpush1.msra.mxu0 0.0
        %2330 = vmatprep.subr.mxu0 0.0
        %2331 = vmatpush1.msra.mxu0 0.0
        %2332 = vmatprep.subr.mxu0 0.0
        %2333 = vmatpush1.msra.mxu0 0.0
        %2334 = vmatprep.subr.mxu0 0.0
        %2335 = vmatpush1.msra.mxu0 0.0
        %2336 = vmatprep.subr.mxu0 0.0
        %2337 = vmatpush1.msra.mxu0 0.0
        %2338 = vmatprep.subr.mxu0 0.0
        %2339 = vmatpush1.msra.mxu0 0.0
        %2340 = vmatprep.mubr.f32.mxu0 0.0
        %2341 = vmatmul.mubr.f32.gmra.mrb[0].mxu0 %v2265
        %v2342 = vpop.f32.mrb[0].mxu0
        %v2343 = vadd.f32 0.0, %v2342
        %v2344 = vpop.f32.mrb[0].mxu0
        %2345 = vmatprep.mubr.f32.mxu0 0.0
        %2346 = vmatmul.mubr.f32.gmra.mrb[0].mxu0 %v2268
        %v2347 = vpop.f32.mrb[0].mxu0
        %v2348 = vadd.f32 0.0, %v2347
        %v2349 = vpop.f32.mrb[0].mxu0
        %2350 = vmatprep.mubr.f32.mxu0 0.0
        %2351 = vmatmul.mubr.f32.gmra.mrb[0].mxu0 %v2271
        %v2352 = vpop.f32.mrb[0].mxu0
        %v2353 = vadd.f32 0.0, %v2352
        %v2354 = vpop.f32.mrb[0].mxu0
        %2355 = vmatprep.mubr.f32.mxu0 0.0
        %2356 = vmatmul.mubr.f32.gmra.mrb[0].mxu0 %v2274
        %v2357 = vpop.f32.mrb[0].mxu0
        %v2358 = vadd.f32 0.0, %v2357
        %v2359 = vpop.f32.mrb[0].mxu0
        %2360 = vdwg.mxu0
        %v2362 = vsel %vm1001, %v2343, 0
        %v2365 = vsel %vm1001, %v2348, 0
        %v2368 = vsel %vm1001, %v2353, 0
        %v2371 = vsel %vm1001, %v2358, 0
        %2373 = vmatprep.subr.mxu0 0.0
        %2374 = vmatpush1.msra.mxu0 %v990
        %2375 = vmatprep.subr.mxu0 0.0
        %2376 = vmatpush1.msra.mxu0 %v991
        %2377 = vmatprep.subr.mxu0 0.0
        %2378 = vmatpush1.msra.mxu0 %v992
        %2379 = vmatprep.subr.mxu0 0.0
        %2380 = vmatpush1.msra.mxu0 %v993
        %2381 = vmatprep.subr.mxu0 0.0
        %2382 = vmatpush1.msra.mxu0 0.0
        %2383 = vmatprep.subr.mxu0 0.0
        %2384 = vmatpush1.msra.mxu0 0.0
        %2385 = vmatprep.subr.mxu0 0.0
        %2386 = vmatpush1.msra.mxu0 0.0
        %2387 = vmatprep.subr.mxu0 0.0
        %2388 = vmatpush1.msra.mxu0 0.0
        %2389 = vmatprep.subr.mxu0 0.0
        %2390 = vmatpush1.msra.mxu0 0.0
        %2391 = vmatprep.subr.mxu0 0.0
        %2392 = vmatpush1.msra.mxu0 0.0
        %2393 = vmatprep.subr.mxu0 0.0
        %2394 = vmatpush1.msra.mxu0 0.0
        %2395 = vmatprep.subr.mxu0 0.0
        %2396 = vmatpush1.msra.mxu0 0.0
        %2397 = vmatprep.subr.mxu0 0.0
        %2398 = vmatpush1.msra.mxu0 0.0
        %2399 = vmatprep.subr.mxu0 0.0
        %2400 = vmatpush1.msra.mxu0 0.0
        %2401 = vmatprep.subr.mxu0 0.0
        %2402 = vmatpush1.msra.mxu0 0.0
        %2403 = vmatprep.subr.mxu0 0.0
        %2404 = vmatpush1.msra.mxu0 0.0
        %2405 = vmatprep.subr.mxu0 0.0
        %2406 = vmatpush1.msra.mxu0 0.0
        %2407 = vmatprep.subr.mxu0 0.0
        %2408 = vmatpush1.msra.mxu0 0.0
        %2409 = vmatprep.subr.mxu0 0.0
        %2410 = vmatpush1.msra.mxu0 0.0
        %2411 = vmatprep.subr.mxu0 0.0
        %2412 = vmatpush1.msra.mxu0 0.0
        %2413 = vmatprep.subr.mxu0 0.0
        %2414 = vmatpush1.msra.mxu0 0.0
        %2415 = vmatprep.subr.mxu0 0.0
        %2416 = vmatpush1.msra.mxu0 0.0
        %2417 = vmatprep.subr.mxu0 0.0
        %2418 = vmatpush1.msra.mxu0 0.0
        %2419 = vmatprep.subr.mxu0 0.0
        %2420 = vmatpush1.msra.mxu0 0.0
        %2421 = vmatprep.subr.mxu0 0.0
        %2422 = vmatpush1.msra.mxu0 0.0
        %2423 = vmatprep.subr.mxu0 0.0
        %2424 = vmatpush1.msra.mxu0 0.0
        %2425 = vmatprep.subr.mxu0 0.0
        %2426 = vmatpush1.msra.mxu0 0.0
        %2427 = vmatprep.subr.mxu0 0.0
        %2428 = vmatpush1.msra.mxu0 0.0
        %2429 = vmatprep.subr.mxu0 0.0
        %2430 = vmatpush1.msra.mxu0 0.0
        %2431 = vmatprep.subr.mxu0 0.0
        %2432 = vmatpush1.msra.mxu0 0.0
        %2433 = vmatprep.subr.mxu0 0.0
        %2434 = vmatpush1.msra.mxu0 0.0
        %2435 = vmatprep.subr.mxu0 0.0
        %2436 = vmatpush1.msra.mxu0 0.0
        %2437 = vmatprep.mubr.f32.mxu0 0.0
        %2438 = vmatmul.mubr.f32.gmra.mrb[0].mxu0 %v2362
        %v2439 = vpop.f32.mrb[0].mxu0
        %v2440 = vadd.f32 0.0, %v2439
        %v2441 = vpop.f32.mrb[0].mxu0
        %2442 = vmatprep.mubr.f32.mxu0 0.0
        %2443 = vmatmul.mubr.f32.gmra.mrb[0].mxu0 %v2365
        %v2444 = vpop.f32.mrb[0].mxu0
        %v2445 = vadd.f32 0.0, %v2444
        %v2446 = vpop.f32.mrb[0].mxu0
        %2447 = vmatprep.mubr.f32.mxu0 0.0
        %2448 = vmatmul.mubr.f32.gmra.mrb[0].mxu0 %v2368
        %v2449 = vpop.f32.mrb[0].mxu0
        %v2450 = vadd.f32 0.0, %v2449
        %v2451 = vpop.f32.mrb[0].mxu0
        %2452 = vmatprep.mubr.f32.mxu0 0.0
        %2453 = vmatmul.mubr.f32.gmra.mrb[0].mxu0 %v2371
        %v2454 = vpop.f32.mrb[0].mxu0
        %v2455 = vadd.f32 0.0, %v2454
        %v2456 = vpop.f32.mrb[0].mxu0
        %2457 = vdwg.mxu0
        %v2458 = vadd.f32 %v2087, %v2440
        %v2459 = vadd.f32 %v2088, %v2445
        %v2460 = vadd.f32 %v2089, %v2450
        %v2461 = vadd.f32 %v2090, %v2455
        %v2462 = vld [vmem:[%s720] sm:$0x1]
        %v2464 = vlaneseq
        %v2465 = vshrl.u32 %v2464, 7
        %v2466 = vsub.s32 0, %v2465
        %v2467 = vrot.slane %v2462, %v2466
        %v2469 = vadd.f32 %v2458, %v2467
        %v2470 = vadd.f32 %v2459, %v2467
        %v2471 = vadd.f32 %v2460, %v2467
        %v2472 = vadd.f32 %v2461, %v2467
        %v2473 = vadd.f32 %v752, %v2469
        %v2474 = vadd.f32 %v753, %v2470
        %v2475 = vadd.f32 %v754, %v2471
        %v2476 = vadd.f32 %v755, %v2472
        %2477 = vadd.xlane.f32.xlu0 %v2473
        %v2478 = vpop.xlane.xlu0 %2477
        %2479 = vadd.xlane.f32.xlu0 %v2474
        %v2480 = vpop.xlane.xlu0 %2479
        %2481 = vadd.xlane.f32.xlu0 %v2475
        %v2482 = vpop.xlane.xlu0 %2481
        %2483 = vadd.xlane.f32.xlu0 %v2476
        %v2484 = vpop.xlane.xlu0 %2483
        %v2485 = vrcp.pop 128.0
        %v2486 = vmul.f32 %v2478, %v2485
        %v2487 = vmul.f32 %v2480, %v2485
        %v2488 = vmul.f32 %v2482, %v2485
        %v2489 = vmul.f32 %v2484, %v2485
        %v2490 = vsub.f32 %v2473, %v2486
        %v2491 = vsub.f32 %v2474, %v2487
        %v2492 = vsub.f32 %v2475, %v2488
        %v2493 = vsub.f32 %v2476, %v2489
        %v2494 = vmul.f32 %v2490, %v2490
        %v2495 = vmul.f32 %v2491, %v2491
        %v2496 = vmul.f32 %v2492, %v2492
        %v2497 = vmul.f32 %v2493, %v2493
        %2498 = vadd.xlane.f32.xlu0 %v2494
        %v2499 = vpop.xlane.xlu0 %2498
        %2500 = vadd.xlane.f32.xlu0 %v2495
        %v2501 = vpop.xlane.xlu0 %2500
        %2502 = vadd.xlane.f32.xlu0 %v2496
        %v2503 = vpop.xlane.xlu0 %2502
        %2504 = vadd.xlane.f32.xlu0 %v2497
        %v2505 = vpop.xlane.xlu0 %2504
        %v2506 = vmul.f32 %v2499, %v2485
        %v2507 = vmul.f32 %v2501, %v2485
        %v2508 = vmul.f32 %v2503, %v2485
        %v2509 = vmul.f32 %v2505, %v2485
        %v2510 = vadd.f32 %v2506, 0.001
        %v2511 = vadd.f32 %v2507, 0.001
        %v2512 = vadd.f32 %v2508, 0.001
        %v2513 = vadd.f32 %v2509, 0.001
        %v2514 = vrsqrt.pop %v2510
        %v2515 = vrsqrt.pop %v2511
        %v2516 = vrsqrt.pop %v2512
        %v2517 = vrsqrt.pop %v2513
        %v2518 = vmul.f32 %v2490, %v2514
        %v2519 = vmul.f32 %v2491, %v2515
        %v2520 = vmul.f32 %v2492, %v2516
        %v2521 = vmul.f32 %v2493, %v2517
        %v2522 = vld [vmem:[%s723] sm:$0x1]
        %v2524 = vlaneseq
        %v2525 = vshrl.u32 %v2524, 7
        %v2526 = vsub.s32 0, %v2525
        %v2527 = vrot.slane %v2522, %v2526
        %v2529 = vmul.f32 %v2518, %v2527
        %v2530 = vmul.f32 %v2519, %v2527
        %v2531 = vmul.f32 %v2520, %v2527
        %v2532 = vmul.f32 %v2521, %v2527
        %v2533 = vld [vmem:[%s726] sm:$0x1]
        %v2535 = vlaneseq
        %v2536 = vshrl.u32 %v2535, 7
        %v2537 = vsub.s32 0, %v2536
        %v2538 = vrot.slane %v2533, %v2537
        %v2540 = vadd.f32 %v2529, %v2538
        %v2541 = vadd.f32 %v2530, %v2538
        %v2542 = vadd.f32 %v2531, %v2538
        %v2543 = vadd.f32 %v2532, %v2538
        %v2544 = vld [vmem:[%s618] sm:$0xff]
        %v2545 = vld [vmem:[%s618 + $0x8] sm:$0xff]
        %v2546 = vld [vmem:[%s618 + $0x10] sm:$0xff]
        %v2547 = vld [vmem:[%s618 + $0x18] sm:$0xff]
        %v2548 = vld [vmem:[%s618 + $0x20] sm:$0xff]
        %v2549 = vld [vmem:[%s618 + $0x28] sm:$0xff]
        %v2550 = vld [vmem:[%s618 + $0x30] sm:$0xff]
        %v2551 = vld [vmem:[%s618 + $0x38] sm:$0xff]
        %v2552 = vld [vmem:[%s618 + $0x40] sm:$0xff]
        %v2553 = vld [vmem:[%s618 + $0x48] sm:$0xff]
        %v2554 = vld [vmem:[%s618 + $0x50] sm:$0xff]
        %v2555 = vld [vmem:[%s618 + $0x58] sm:$0xff]
        %v2556 = vld [vmem:[%s618 + $0x60] sm:$0xff]
        %v2557 = vld [vmem:[%s618 + $0x68] sm:$0xff]
        %v2558 = vld [vmem:[%s618 + $0x70] sm:$0xff]
        %v2559 = vld [vmem:[%s618 + $0x78] sm:$0xff]
        %v2560 = vld [vmem:[%s618 + $0x80] sm:$0xff]
        %v2561 = vld [vmem:[%s618 + $0x88] sm:$0xff]
        %v2562 = vld [vmem:[%s618 + $0x90] sm:$0xff]
        %v2563 = vld [vmem:[%s618 + $0x98] sm:$0xff]
        %v2564 = vld [vmem:[%s618 + $0xa0] sm:$0xff]
        %v2565 = vld [vmem:[%s618 + $0xa8] sm:$0xff]
        %v2566 = vld [vmem:[%s618 + $0xb0] sm:$0xff]
        %v2567 = vld [vmem:[%s618 + $0xb8] sm:$0xff]
        %v2568 = vld [vmem:[%s618 + $0xc0] sm:$0xff]
        %v2569 = vld [vmem:[%s618 + $0xc8] sm:$0xff]
        %v2570 = vld [vmem:[%s618 + $0xd0] sm:$0xff]
        %v2571 = vld [vmem:[%s618 + $0xd8] sm:$0xff]
        %v2572 = vld [vmem:[%s618 + $0xe0] sm:$0xff]
        %v2573 = vld [vmem:[%s618 + $0xe8] sm:$0xff]
        %v2574 = vld [vmem:[%s618 + $0xf0] sm:$0xff]
        %v2575 = vld [vmem:[%s618 + $0xf8] sm:$0xff]
        %v2576 = vld [vmem:[%s730] sm:$0x3]
        %v2578 = vlaneseq
        %v2579 = vshrl.u32 %v2578, 7
        %v2580 = vsub.s32 0, %v2579
        %v2581 = vrot.slane %v2576, %v2580
        %v2582 = vlaneseq
        %v2583 = vshrl.u32 %v2582, 7
        %v2584 = vsub.s32 1, %v2583
        %v2585 = vrot.slane %v2576, %v2584
        %2588 = vmatprep.subr.mxu0 %v2545
        %2589 = vmatpush1.msra.mxu0 %v2544
        %2590 = vmatprep.subr.mxu0 %v2547
        %2591 = vmatpush1.msra.mxu0 %v2546
        %2592 = vmatprep.subr.mxu0 %v2549
        %2593 = vmatpush1.msra.mxu0 %v2548
        %2594 = vmatprep.subr.mxu0 %v2551
        %2595 = vmatpush1.msra.mxu0 %v2550
        %2596 = vmatprep.subr.mxu0 %v2553
        %2597 = vmatpush1.msra.mxu0 %v2552
        %2598 = vmatprep.subr.mxu0 %v2555
        %2599 = vmatpush1.msra.mxu0 %v2554
        %2600 = vmatprep.subr.mxu0 %v2557
        %2601 = vmatpush1.msra.mxu0 %v2556
        %2602 = vmatprep.subr.mxu0 %v2559
        %2603 = vmatpush1.msra.mxu0 %v2558
        %2604 = vmatprep.subr.mxu0 %v2561
        %2605 = vmatpush1.msra.mxu0 %v2560
        %2606 = vmatprep.subr.mxu0 %v2563
        %2607 = vmatpush1.msra.mxu0 %v2562
        %2608 = vmatprep.subr.mxu0 %v2565
        %2609 = vmatpush1.msra.mxu0 %v2564
        %2610 = vmatprep.subr.mxu0 %v2567
        %2611 = vmatpush1.msra.mxu0 %v2566
        %2612 = vmatprep.subr.mxu0 %v2569
        %2613 = vmatpush1.msra.mxu0 %v2568
        %2614 = vmatprep.subr.mxu0 %v2571
        %2615 = vmatpush1.msra.mxu0 %v2570
        %2616 = vmatprep.subr.mxu0 %v2573
        %2617 = vmatpush1.msra.mxu0 %v2572
        %2618 = vmatprep.subr.mxu0 %v2575
        %2619 = vmatpush1.msra.mxu0 %v2574
        %2620 = vmatprep.subr.mxu0 0.0
        %2621 = vmatpush1.msra.mxu0 0.0
        %2622 = vmatprep.subr.mxu0 0.0
        %2623 = vmatpush1.msra.mxu0 0.0
        %2624 = vmatprep.subr.mxu0 0.0
        %2625 = vmatpush1.msra.mxu0 0.0
        %2626 = vmatprep.subr.mxu0 0.0
        %2627 = vmatpush1.msra.mxu0 0.0
        %2628 = vmatprep.subr.mxu0 0.0
        %2629 = vmatpush1.msra.mxu0 0.0
        %2630 = vmatprep.subr.mxu0 0.0
        %2631 = vmatpush1.msra.mxu0 0.0
        %2632 = vmatprep.subr.mxu0 0.0
        %2633 = vmatpush1.msra.mxu0 0.0
        %2634 = vmatprep.subr.mxu0 0.0
        %2635 = vmatpush1.msra.mxu0 0.0
        %2636 = vmatprep.subr.mxu0 0.0
        %2637 = vmatpush1.msra.mxu0 0.0
        %2638 = vmatprep.subr.mxu0 0.0
        %2639 = vmatpush1.msra.mxu0 0.0
        %2640 = vmatprep.subr.mxu0 0.0
        %2641 = vmatpush1.msra.mxu0 0.0
        %2642 = vmatprep.subr.mxu0 0.0
        %2643 = vmatpush1.msra.mxu0 0.0
        %2644 = vmatprep.subr.mxu0 0.0
        %2645 = vmatpush1.msra.mxu0 0.0
        %2646 = vmatprep.subr.mxu0 0.0
        %2647 = vmatpush1.msra.mxu0 0.0
        %2648 = vmatprep.subr.mxu0 0.0
        %2649 = vmatpush1.msra.mxu0 0.0
        %2650 = vmatprep.subr.mxu0 0.0
        %2651 = vmatpush1.msra.mxu0 0.0
        %2652 = vmatprep.mubr.f32.mxu0 0.0
        %2653 = vmatmul.mubr.f32.gmra.mrb[0].mxu0 %v2540
        %v2654 = vpop.f32.mrb[0].mxu0
        %v2655 = vadd.f32 %v2581, %v2654
        %v2656 = vpop.f32.mrb[0].mxu0
        %v2657 = vadd.f32 %v2585, %v2656
        %2658 = vmatprep.mubr.f32.mxu0 0.0
        %2659 = vmatmul.mubr.f32.gmra.mrb[0].mxu0 %v2541
        %v2660 = vpop.f32.mrb[0].mxu0
        %v2661 = vadd.f32 %v2581, %v2660
        %v2662 = vpop.f32.mrb[0].mxu0
        %v2663 = vadd.f32 %v2585, %v2662
        %2664 = vmatprep.mubr.f32.mxu0 0.0
        %2665 = vmatmul.mubr.f32.gmra.mrb[0].mxu0 %v2542
        %v2666 = vpop.f32.mrb[0].mxu0
        %v2667 = vadd.f32 %v2581, %v2666
        %v2668 = vpop.f32.mrb[0].mxu0
        %v2669 = vadd.f32 %v2585, %v2668
        %2670 = vmatprep.mubr.f32.mxu0 0.0
        %2671 = vmatmul.mubr.f32.gmra.mrb[0].mxu0 %v2543
        %v2672 = vpop.f32.mrb[0].mxu0
        %v2673 = vadd.f32 %v2581, %v2672
        %v2674 = vpop.f32.mrb[0].mxu0
        %v2675 = vadd.f32 %v2585, %v2674
        %2676 = vdwg.mxu0
        %v2677 = vmax.f32 %v2655, 0.0
        %v2678 = vmax.f32 %v2657, 0.0
        %v2679 = vmax.f32 %v2661, 0.0
        %v2680 = vmax.f32 %v2663, 0.0
        %v2681 = vmax.f32 %v2667, 0.0
        %v2682 = vmax.f32 %v2669, 0.0
        %v2683 = vmax.f32 %v2673, 0.0
        %v2684 = vmax.f32 %v2675, 0.0
        %v2685 = vld [vmem:[%s627] sm:$0xff]
        %v2686 = vld [vmem:[%s627 + $0x8] sm:$0xff]
        %v2687 = vld [vmem:[%s627 + $0x10] sm:$0xff]
        %v2688 = vld [vmem:[%s627 + $0x18] sm:$0xff]
        %v2689 = vld [vmem:[%s627 + $0x20] sm:$0xff]
        %v2690 = vld [vmem:[%s627 + $0x28] sm:$0xff]
        %v2691 = vld [vmem:[%s627 + $0x30] sm:$0xff]
        %v2692 = vld [vmem:[%s627 + $0x38] sm:$0xff]
        %v2693 = vld [vmem:[%s627 + $0x40] sm:$0xff]
        %v2694 = vld [vmem:[%s627 + $0x48] sm:$0xff]
        %v2695 = vld [vmem:[%s627 + $0x50] sm:$0xff]
        %v2696 = vld [vmem:[%s627 + $0x58] sm:$0xff]
        %v2697 = vld [vmem:[%s627 + $0x60] sm:$0xff]
        %v2698 = vld [vmem:[%s627 + $0x68] sm:$0xff]
        %v2699 = vld [vmem:[%s627 + $0x70] sm:$0xff]
        %v2700 = vld [vmem:[%s627 + $0x78] sm:$0xff]
        %v2701 = vld [vmem:[%s627 + $0x80] sm:$0xff]
        %v2702 = vld [vmem:[%s627 + $0x88] sm:$0xff]
        %v2703 = vld [vmem:[%s627 + $0x90] sm:$0xff]
        %v2704 = vld [vmem:[%s627 + $0x98] sm:$0xff]
        %v2705 = vld [vmem:[%s627 + $0xa0] sm:$0xff]
        %v2706 = vld [vmem:[%s627 + $0xa8] sm:$0xff]
        %v2707 = vld [vmem:[%s627 + $0xb0] sm:$0xff]
        %v2708 = vld [vmem:[%s627 + $0xb8] sm:$0xff]
        %v2709 = vld [vmem:[%s627 + $0xc0] sm:$0xff]
        %v2710 = vld [vmem:[%s627 + $0xc8] sm:$0xff]
        %v2711 = vld [vmem:[%s627 + $0xd0] sm:$0xff]
        %v2712 = vld [vmem:[%s627 + $0xd8] sm:$0xff]
        %v2713 = vld [vmem:[%s627 + $0xe0] sm:$0xff]
        %v2714 = vld [vmem:[%s627 + $0xe8] sm:$0xff]
        %v2715 = vld [vmem:[%s627 + $0xf0] sm:$0xff]
        %v2716 = vld [vmem:[%s627 + $0xf8] sm:$0xff]
        %v2717 = vld [vmem:[%s733] sm:$0x1]
        %v2719 = vlaneseq
        %v2720 = vshrl.u32 %v2719, 7
        %v2721 = vsub.s32 0, %v2720
        %v2722 = vrot.slane %v2717, %v2721
        %2724 = vmatprep.subr.mxu0 0.0
        %2725 = vmatpush1.msra.mxu0 %v2685
        %2726 = vmatprep.subr.mxu0 0.0
        %2727 = vmatpush1.msra.mxu0 %v2686
        %2728 = vmatprep.subr.mxu0 0.0
        %2729 = vmatpush1.msra.mxu0 %v2687
        %2730 = vmatprep.subr.mxu0 0.0
        %2731 = vmatpush1.msra.mxu0 %v2688
        %2732 = vmatprep.subr.mxu0 0.0
        %2733 = vmatpush1.msra.mxu0 %v2689
        %2734 = vmatprep.subr.mxu0 0.0
        %2735 = vmatpush1.msra.mxu0 %v2690
        %2736 = vmatprep.subr.mxu0 0.0
        %2737 = vmatpush1.msra.mxu0 %v2691
        %2738 = vmatprep.subr.mxu0 0.0
        %2739 = vmatpush1.msra.mxu0 %v2692
        %2740 = vmatprep.subr.mxu0 0.0
        %2741 = vmatpush1.msra.mxu0 %v2693
        %2742 = vmatprep.subr.mxu0 0.0
        %2743 = vmatpush1.msra.mxu0 %v2694
        %2744 = vmatprep.subr.mxu0 0.0
        %2745 = vmatpush1.msra.mxu0 %v2695
        %2746 = vmatprep.subr.mxu0 0.0
        %2747 = vmatpush1.msra.mxu0 %v2696
        %2748 = vmatprep.subr.mxu0 0.0
        %2749 = vmatpush1.msra.mxu0 %v2697
        %2750 = vmatprep.subr.mxu0 0.0
        %2751 = vmatpush1.msra.mxu0 %v2698
        %2752 = vmatprep.subr.mxu0 0.0
        %2753 = vmatpush1.msra.mxu0 %v2699
        %2754 = vmatprep.subr.mxu0 0.0
        %2755 = vmatpush1.msra.mxu0 %v2700
        %2756 = vmatprep.subr.mxu0 0.0
        %2757 = vmatpush1.msra.mxu0 %v2701
        %2758 = vmatprep.subr.mxu0 0.0
        %2759 = vmatpush1.msra.mxu0 %v2702
        %2760 = vmatprep.subr.mxu0 0.0
        %2761 = vmatpush1.msra.mxu0 %v2703
        %2762 = vmatprep.subr.mxu0 0.0
        %2763 = vmatpush1.msra.mxu0 %v2704
        %2764 = vmatprep.subr.mxu0 0.0
        %2765 = vmatpush1.msra.mxu0 %v2705
        %2766 = vmatprep.subr.mxu0 0.0
        %2767 = vmatpush1.msra.mxu0 %v2706
        %2768 = vmatprep.subr.mxu0 0.0
        %2769 = vmatpush1.msra.mxu0 %v2707
        %2770 = vmatprep.subr.mxu0 0.0
        %2771 = vmatpush1.msra.mxu0 %v2708
        %2772 = vmatprep.subr.mxu0 0.0
        %2773 = vmatpush1.msra.mxu0 %v2709
        %2774 = vmatprep.subr.mxu0 0.0
        %2775 = vmatpush1.msra.mxu0 %v2710
        %2776 = vmatprep.subr.mxu0 0.0
        %2777 = vmatpush1.msra.mxu0 %v2711
        %2778 = vmatprep.subr.mxu0 0.0
        %2779 = vmatpush1.msra.mxu0 %v2712
        %2780 = vmatprep.subr.mxu0 0.0
        %2781 = vmatpush1.msra.mxu0 %v2713
        %2782 = vmatprep.subr.mxu0 0.0
        %2783 = vmatpush1.msra.mxu0 %v2714
        %2784 = vmatprep.subr.mxu0 0.0
        %2785 = vmatpush1.msra.mxu0 %v2715
        %2786 = vmatprep.subr.mxu0 0.0
        %2787 = vmatpush1.msra.mxu0 %v2716
        %2788 = vmatprep.mubr.f32.mxu0 %v2678
        %2789 = vmatmul.mubr.f32.gmra.mrb[0].mxu0 %v2677
        %v2790 = vpop.f32.mrb[0].mxu0
        %v2791 = vadd.f32 %v2722, %v2790
        %v2792 = vpop.f32.mrb[0].mxu0
        %2793 = vmatprep.mubr.f32.mxu0 %v2680
        %2794 = vmatmul.mubr.f32.gmra.mrb[0].mxu0 %v2679
        %v2795 = vpop.f32.mrb[0].mxu0
        %v2796 = vadd.f32 %v2722, %v2795
        %v2797 = vpop.f32.mrb[0].mxu0
        %2798 = vmatprep.mubr.f32.mxu0 %v2682
        %2799 = vmatmul.mubr.f32.gmra.mrb[0].mxu0 %v2681
        %v2800 = vpop.f32.mrb[0].mxu0
        %v2801 = vadd.f32 %v2722, %v2800
        %v2802 = vpop.f32.mrb[0].mxu0
        %2803 = vmatprep.mubr.f32.mxu0 %v2684
        %2804 = vmatmul.mubr.f32.gmra.mrb[0].mxu0 %v2683
        %v2805 = vpop.f32.mrb[0].mxu0
        %v2806 = vadd.f32 %v2722, %v2805
        %v2807 = vpop.f32.mrb[0].mxu0
        %2808 = vdwg.mxu0
        %v2809 = vadd.f32 %v2540, %v2791
        %v2810 = vadd.f32 %v2541, %v2796
        %v2811 = vadd.f32 %v2542, %v2801
        %v2812 = vadd.f32 %v2543, %v2806
        %2813 = vadd.xlane.f32.xlu0 %v2809
        %v2814 = vpop.xlane.xlu0 %2813
        %2815 = vadd.xlane.f32.xlu0 %v2810
        %v2816 = vpop.xlane.xlu0 %2815
        %2817 = vadd.xlane.f32.xlu0 %v2811
        %v2818 = vpop.xlane.xlu0 %2817
        %2819 = vadd.xlane.f32.xlu0 %v2812
        %v2820 = vpop.xlane.xlu0 %2819
        %v2821 = vmul.f32 %v2814, %v2485
        %v2822 = vmul.f32 %v2816, %v2485
        %v2823 = vmul.f32 %v2818, %v2485
        %v2824 = vmul.f32 %v2820, %v2485
        %v2825 = vsub.f32 %v2809, %v2821
        %v2826 = vsub.f32 %v2810, %v2822
        %v2827 = vsub.f32 %v2811, %v2823
        %v2828 = vsub.f32 %v2812, %v2824
        %v2829 = vmul.f32 %v2825, %v2825
        %v2830 = vmul.f32 %v2826, %v2826
        %v2831 = vmul.f32 %v2827, %v2827
        %v2832 = vmul.f32 %v2828, %v2828
        %2833 = vadd.xlane.f32.xlu0 %v2829
        %v2834 = vpop.xlane.xlu0 %2833
        %2835 = vadd.xlane.f32.xlu0 %v2830
        %v2836 = vpop.xlane.xlu0 %2835
        %2837 = vadd.xlane.f32.xlu0 %v2831
        %v2838 = vpop.xlane.xlu0 %2837
        %2839 = vadd.xlane.f32.xlu0 %v2832
        %v2840 = vpop.xlane.xlu0 %2839
        %v2841 = vmul.f32 %v2834, %v2485
        %v2842 = vmul.f32 %v2836, %v2485
        %v2843 = vmul.f32 %v2838, %v2485
        %v2844 = vmul.f32 %v2840, %v2485
        %v2845 = vadd.f32 %v2841, 0.001
        %v2846 = vadd.f32 %v2842, 0.001
        %v2847 = vadd.f32 %v2843, 0.001
        %v2848 = vadd.f32 %v2844, 0.001
        %v2849 = vrsqrt.pop %v2845
        %v2850 = vrsqrt.pop %v2846
        %v2851 = vrsqrt.pop %v2847
        %v2852 = vrsqrt.pop %v2848
        %v2853 = vmul.f32 %v2825, %v2849
        %v2854 = vmul.f32 %v2826, %v2850
        %v2855 = vmul.f32 %v2827, %v2851
        %v2856 = vmul.f32 %v2828, %v2852
        %v2857 = vld [vmem:[%s736] sm:$0x1]
        %v2859 = vlaneseq
        %v2860 = vshrl.u32 %v2859, 7
        %v2861 = vsub.s32 0, %v2860
        %v2862 = vrot.slane %v2857, %v2861
        %v2864 = vmul.f32 %v2853, %v2862
        %v2865 = vmul.f32 %v2854, %v2862
        %v2866 = vmul.f32 %v2855, %v2862
        %v2867 = vmul.f32 %v2856, %v2862
        %v2868 = vld [vmem:[%s739] sm:$0x1]
        %v2870 = vlaneseq
        %v2871 = vshrl.u32 %v2870, 7
        %v2872 = vsub.s32 0, %v2871
        %v2873 = vrot.slane %v2868, %v2872
        %v2875 = vadd.f32 %v2864, %v2873
        %v2876 = vadd.f32 %v2865, %v2873
        %v2877 = vadd.f32 %v2866, %v2873
        %v2878 = vadd.f32 %v2867, %v2873
        %2879 = vst [vmem:[%s714] sm:$0xff] %v2875
        %2880 = vst [vmem:[%s714 + $0x8] sm:$0xff] %v2876
        %2881 = vst [vmem:[%s714 + $0x10] sm:$0xff] %v2877
        %2882 = vst [vmem:[%s714 + $0x18] sm:$0xff] %v2878
        %s2883 = sand.u32 %s394, 1
        %s2884 = scalar_lea.sflag [#allocation4], %s2883
        %s2885 = sand.u32 %s394, 1
        %s2886 = smul.addr %s2885, 32
        %s2887 = scalar_lea.vmem [#allocation11], %s2886
        // Predicated region
        $region97: #{tpu_custom_call.1} parent=71 // pred_check
          %p2888 = pneg %p404
        $region98: #{tpu_custom_call.1} parent=71 // pred_check_branch
          %2890 = sbr.rel (%p2888) target = $region100
        $region99: #{tpu_custom_call.1} parent=71 // pred_region
          %s2892 = ssub.s32 512, 512
          %2893 = vsyncadd %s2884, %s2892
          %s2894 = smul.addr %s40, 4
          %s2895 = smul.addr %s2894, 128
          %s2896 = scalar_lea.hbm %s13, %s2895
          %s2897 = sshll.u32 %s2887, 4
          %s2898 = int_to_ptr.vmem [resolvable:$true] %s2897
          %2903 = dma.vmem_to_hbm [thread:$0]  %s2898, 512, %s2896, %s2884, 128, 128, 8
        $region100: #{tpu_custom_call.1} parent=71 // pred_fallthru
          _
      $region72: #{tpu_custom_call.1} parent=5 // pred_fallthru
        _
      %p2904 = scmp.le.s32.totalorder 2, %s31
      // Predicated region
      $region101: #{tpu_custom_call.1} parent=5 // pred_check
        %p2905 = pneg %p2904
      $region102: #{tpu_custom_call.1} parent=5 // pred_check_branch
        %2907 = sbr.rel (%p2905) target = $region104
      $region103: #{tpu_custom_call.1} parent=5 // pred_region
        %s2908 = ssub.s32 %s31, 2
        // Predicated region
        $region105: #{tpu_custom_call.1} parent=103 // pred_check
          %p2909 = pneg %p410
        $region106: #{tpu_custom_call.1} parent=103 // pred_check_branch
          %2911 = sbr.rel (%p2909) target = $region108
        $region107: #{tpu_custom_call.1} parent=103 // pred_region
          %s2912 = sand.u32 %s395, 1
          %s2913 = scalar_lea.sflag [#allocation4], %s2912
          %s2914 = sand.u32 %s395, 1
          %s2915 = smul.addr %s2914, 32
          %s2916 = scalar_lea.vmem [#allocation11], %s2915
          %2917 = dma.done %s2913, 512
        $region108: #{tpu_custom_call.1} parent=103 // pred_fallthru
          _
      $region104: #{tpu_custom_call.1} parent=5 // pred_fallthru
        _
    $region6: #{tpu_custom_call.1} parent=1 // loop_footer
      %s35 = sadd.s32 1, %s31
    $region7: #{tpu_custom_call.1} parent=1 // loop_footer_branch
      %30 = sbr.rel target = $region3
    $region8: #{tpu_custom_call.1} parent=1 // loop_exit
      _
    %2918 = vsyncpa [#allocation3], 1
    %s2919 = scalar_lea.sflag [#allocation3], 1
    %2920 = vsyncpa %s2919, 1
    %2921 = vsyncpa [#allocation6], 1
    %s2922 = scalar_lea.sflag [#allocation6], 1
    %2923 = vsyncpa %s2922, 1
    %2924 = vsyncpa [#allocation9], 1
    %s2925 = scalar_lea.sflag [#allocation9], 1
    %2926 = vsyncpa %s2925, 1
    %2927 = vsyncpa [#allocation4], 1
    %s2928 = scalar_lea.sflag [#allocation4], 1
    %2929 = vsyncpa %s2928, 1

</llo_original>
